<compile_context>
chip_gen: v5e
topology: v5e:2x2
jax: 0.10.0
libtpu: 0.0.40
codegen_flags: <defaults>
</compile_context>

<pallas_src>
import jax
import jax.numpy as jnp
from jax.experimental import pallas as pl
from jax.experimental.pallas import tpu as pltpu

N_HIDDEN = 1000
Z_DIM = 200

# padded, (8,128)-aligned sizes used inside the kernel
ZP = 256      # 200 -> 256
NP = 1024     # 1000 -> 1024
OP = 128      # 1 -> 128 (lane-dense output slab; real column 0 sliced out)


def _round_up(x, m):
    return (x + m - 1) // m * m


# ----------------------------------------------------------------------------
# Pallas kernel: fused lin1 -> relu -> lin2 -> relu -> lin3 -> sigmoid
# ----------------------------------------------------------------------------
def _d_net_gauss_kernel(x_ref, w1_ref, b1_ref, w2_ref, b2_ref, w3_ref, b3_ref,
                        o_ref):
    # dropout(p=0.2) is identity in eval mode.
    h = jnp.dot(x_ref[...], w1_ref[...], preferred_element_type=jnp.float32)
    h = jnp.maximum(h + b1_ref[...], 0.0)                      # relu, f32 epilogue

    h = jnp.dot(h.astype(jnp.bfloat16), w2_ref[...],
                preferred_element_type=jnp.float32)
    h = jnp.maximum(h + b2_ref[...], 0.0)                      # relu, f32 epilogue

    h = jnp.dot(h.astype(jnp.bfloat16), w3_ref[...],
                preferred_element_type=jnp.float32)
    o_ref[...] = jax.nn.sigmoid(h + b3_ref[...]).astype(o_ref.dtype)


# ----------------------------------------------------------------------------
# Wrapper: pad to aligned shapes, run the fused kernel, slice the real output
# ----------------------------------------------------------------------------
def d_net_gauss_forward(x, params):
    """x: (B, 200) f32.  Returns sigmoid(lin3(...)) of shape (B, 1), f32."""
    B, Z = x.shape
    assert Z == Z_DIM

    # batch tiling: pad batch up to a multiple of the tile (>= 8 sublanes)
    Bp = _round_up(max(B, 8), 8)
    tm = min(Bp, 256)
    Bp = _round_up(Bp, tm)

    bf16 = jnp.bfloat16
    xp = jnp.zeros((Bp, ZP), bf16).at[:B, :Z].set(x.astype(bf16))

    # torch Linear weight is (out, in): transpose to (in, out), cast to bf16,
    # zero-pad to aligned shapes. Biases stay f32 for the epilogue.
    w1 = jnp.zeros((ZP, NP), bf16).at[:Z_DIM, :N_HIDDEN].set(
        params["lin1_w"].T.astype(bf16))
    b1 = jnp.zeros((1, NP), jnp.float32).at[0, :N_HIDDEN].set(params["lin1_b"])
    w2 = jnp.zeros((NP, NP), bf16).at[:N_HIDDEN, :N_HIDDEN].set(
        params["lin2_w"].T.astype(bf16))
    b2 = jnp.zeros((1, NP), jnp.float32).at[0, :N_HIDDEN].set(params["lin2_b"])
    w3 = jnp.zeros((NP, OP), bf16).at[:N_HIDDEN, :1].set(
        params["lin3_w"].T.astype(bf16))
    b3 = jnp.zeros((1, OP), jnp.float32).at[0, :1].set(params["lin3_b"])

    out = pl.pallas_call(
        _d_net_gauss_kernel,
        out_shape=jax.ShapeDtypeStruct((Bp, OP), jnp.float32),
        grid_spec=pltpu.PrefetchScalarGridSpec(
            num_scalar_prefetch=0,
            grid=(Bp // tm,),
            in_specs=[
                pl.BlockSpec((tm, ZP), lambda i: (i, 0)),   # x batch tile
                pl.BlockSpec((ZP, NP), lambda i: (0, 0)),   # w1 (resident)
                pl.BlockSpec((1, NP), lambda i: (0, 0)),    # b1
                pl.BlockSpec((NP, NP), lambda i: (0, 0)),   # w2 (resident)
                pl.BlockSpec((1, NP), lambda i: (0, 0)),    # b2
                pl.BlockSpec((NP, OP), lambda i: (0, 0)),   # w3 (resident)
                pl.BlockSpec((1, OP), lambda i: (0, 0)),    # b3
            ],
            out_specs=pl.BlockSpec((tm, OP), lambda i: (i, 0)),
        ),
        compiler_params=pltpu.CompilerParams(
            dimension_semantics=("parallel",),
            vmem_limit_bytes=32 * 1024 * 1024,   # footprint ~6 MB; fits v7x 64 MiB
        ),
    )(xp, w1, b1, w2, b2, w3, b3)

    return out[:B, :1]


# ----------------------------------------------------------------------------
# Pure-JAX f32 reference (for a loose-tolerance sanity check)
# ----------------------------------------------------------------------------
def d_net_gauss_ref(x, params):
    h = jnp.maximum(x @ params["lin1_w"].T + params["lin1_b"], 0.0)
    h = jnp.maximum(h @ params["lin2_w"].T + params["lin2_b"], 0.0)
    return jax.nn.sigmoid(h @ params["lin3_w"].T + params["lin3_b"])


# ----------------------------------------------------------------------------
# Deterministic parameter init (shapes from D_net_gauss.__init__)
# ----------------------------------------------------------------------------
def init_params(key):
    ks = iter(jax.random.split(key, 8))
    p = {}
    p["lin1_w"] = jax.random.normal(next(ks), (N_HIDDEN, Z_DIM),
                                    jnp.float32) / jnp.sqrt(float(Z_DIM))
    p["lin1_b"] = 0.01 * jax.random.normal(next(ks), (N_HIDDEN,), jnp.float32)
    p["lin2_w"] = jax.random.normal(next(ks), (N_HIDDEN, N_HIDDEN),
                                    jnp.float32) / jnp.sqrt(float(N_HIDDEN))
    p["lin2_b"] = 0.01 * jax.random.normal(next(ks), (N_HIDDEN,), jnp.float32)
    p["lin3_w"] = jax.random.normal(next(ks), (1, N_HIDDEN),
                                    jnp.float32) / jnp.sqrt(float(N_HIDDEN))
    p["lin3_b"] = 0.01 * jax.random.normal(next(ks), (1,), jnp.float32)
    return p


if __name__ == "__main__":
    key = jax.random.PRNGKey(0)
    k_param, k_x = jax.random.split(key)
    params = init_params(k_param)

    # batch=2 samples from the latent space (z_dim=200), as the module implies
    x = jax.random.normal(k_x, (2, Z_DIM), jnp.float32)

    fwd = jax.jit(d_net_gauss_forward)
    y = fwd(x, params)
    jax.block_until_ready(y)

    assert y.shape == (2, 1)
    assert bool(jnp.all(jnp.isfinite(y)))
    assert bool(jnp.all((y > 0.0) & (y < 1.0)))

    # loose tolerance: kernel uses bf16 matmul operands with f32 accumulation
    y_ref = d_net_gauss_ref(x, params)
    assert bool(jnp.max(jnp.abs(y - y_ref)) < 5e-2)

    print("KERNEL_OK")
</pallas_src>

<mosaic_0001>
module attributes {stable_mosaic.version = 11 : i64} {
  func.func @_d_net_gauss_kernel(%arg0: i32, %arg1: memref<8x256xbf16, #tpu.memory_space<vmem>>, %arg2: memref<256x1024xbf16, #tpu.memory_space<vmem>>, %arg3: memref<1x1024xf32, #tpu.memory_space<vmem>>, %arg4: memref<1024x1024xbf16, #tpu.memory_space<vmem>>, %arg5: memref<1x1024xf32, #tpu.memory_space<vmem>>, %arg6: memref<1024x128xbf16, #tpu.memory_space<vmem>>, %arg7: memref<1x128xf32, #tpu.memory_space<vmem>>, %arg8: memref<8x128xf32, #tpu.memory_space<vmem>>) attributes {dimension_semantics = [#tpu.dimension_semantics<parallel>], iteration_bounds = array<i64: 1>, scalar_prefetch = 0 : i64, scratch_operands = 0 : i64, tpu.core_type = #tpu.core_type<tc>, window_params = [{transform_indices = @transform_0, window_bounds = array<i64: 8, 256>}, {pipeline_mode = #tpu.pipeline_mode<synchronous>, transform_indices = @transform_1, window_bounds = array<i64: 256, 1024>}, {pipeline_mode = #tpu.pipeline_mode<synchronous>, transform_indices = @transform_2, window_bounds = array<i64: 1, 1024>}, {pipeline_mode = #tpu.pipeline_mode<synchronous>, transform_indices = @transform_3, window_bounds = array<i64: 1024, 1024>}, {pipeline_mode = #tpu.pipeline_mode<synchronous>, transform_indices = @transform_4, window_bounds = array<i64: 1, 1024>}, {pipeline_mode = #tpu.pipeline_mode<synchronous>, transform_indices = @transform_5, window_bounds = array<i64: 1024, 128>}, {pipeline_mode = #tpu.pipeline_mode<synchronous>, transform_indices = @transform_6, window_bounds = array<i64: 1, 128>}, {transform_indices = @transform_7, window_bounds = array<i64: 8, 128>}]} {
    %c0 = arith.constant 0 : index
    %c0_0 = arith.constant 0 : index
    %0 = vector.load %arg1[%c0, %c0_0] : memref<8x256xbf16, #tpu.memory_space<vmem>>, vector<8x256xbf16>
    %c0_1 = arith.constant 0 : index
    %c0_2 = arith.constant 0 : index
    %1 = vector.load %arg2[%c0_1, %c0_2] : memref<256x1024xbf16, #tpu.memory_space<vmem>>, vector<256x1024xbf16>
    %cst = arith.constant dense<0.000000e+00> : vector<8x1024xf32>
    %2 = tpu.matmul %0, %1, %cst {dimension_numbers = #tpu.dot_dimension_numbers<[1], [0], [0], [1], [0, 0, 1, 1], [], []>} : vector<8x256xbf16>, vector<256x1024xbf16>, vector<8x1024xf32> -> vector<8x1024xf32>
    %c0_3 = arith.constant 0 : index
    %c0_4 = arith.constant 0 : index
    %3 = vector.load %arg3[%c0_3, %c0_4] : memref<1x1024xf32, #tpu.memory_space<vmem>>, vector<1x1024xf32>
    %4 = vector.broadcast %3 : vector<1x1024xf32> to vector<8x1024xf32>
    %5 = arith.addf %2, %4 : vector<8x1024xf32>
    %cst_5 = arith.constant 0.000000e+00 : f32
    %6 = vector.broadcast %cst_5 : f32 to vector<8x1024xf32>
    %7 = arith.maximumf %5, %6 : vector<8x1024xf32>
    %8 = arith.truncf %7 : vector<8x1024xf32> to vector<8x1024xbf16>
    %c0_6 = arith.constant 0 : index
    %c0_7 = arith.constant 0 : index
    %9 = vector.load %arg4[%c0_6, %c0_7] : memref<1024x1024xbf16, #tpu.memory_space<vmem>>, vector<1024x1024xbf16>
    %cst_8 = arith.constant dense<0.000000e+00> : vector<8x1024xf32>
    %10 = tpu.matmul %8, %9, %cst_8 {dimension_numbers = #tpu.dot_dimension_numbers<[1], [0], [0], [1], [0, 0, 1, 1], [], []>} : vector<8x1024xbf16>, vector<1024x1024xbf16>, vector<8x1024xf32> -> vector<8x1024xf32>
    %c0_9 = arith.constant 0 : index
    %c0_10 = arith.constant 0 : index
    %11 = vector.load %arg5[%c0_9, %c0_10] : memref<1x1024xf32, #tpu.memory_space<vmem>>, vector<1x1024xf32>
    %12 = vector.broadcast %11 : vector<1x1024xf32> to vector<8x1024xf32>
    %13 = arith.addf %10, %12 : vector<8x1024xf32>
    %cst_11 = arith.constant 0.000000e+00 : f32
    %14 = vector.broadcast %cst_11 : f32 to vector<8x1024xf32>
    %15 = arith.maximumf %13, %14 : vector<8x1024xf32>
    %16 = arith.truncf %15 : vector<8x1024xf32> to vector<8x1024xbf16>
    %c0_12 = arith.constant 0 : index
    %c0_13 = arith.constant 0 : index
    %17 = vector.load %arg6[%c0_12, %c0_13] : memref<1024x128xbf16, #tpu.memory_space<vmem>>, vector<1024x128xbf16>
    %cst_14 = arith.constant dense<0.000000e+00> : vector<8x128xf32>
    %18 = tpu.matmul %16, %17, %cst_14 {dimension_numbers = #tpu.dot_dimension_numbers<[1], [0], [0], [1], [0, 0, 1, 1], [], []>} : vector<8x1024xbf16>, vector<1024x128xbf16>, vector<8x128xf32> -> vector<8x128xf32>
    %c0_15 = arith.constant 0 : index
    %c0_16 = arith.constant 0 : index
    %19 = vector.load %arg7[%c0_15, %c0_16] : memref<1x128xf32, #tpu.memory_space<vmem>>, vector<1x128xf32>
    %20 = vector.broadcast %19 : vector<1x128xf32> to vector<8x128xf32>
    %21 = arith.addf %18, %20 : vector<8x128xf32>
    %22 = arith.negf %21 : vector<8x128xf32>
    %23 = math.exp %22 : vector<8x128xf32>
    %cst_17 = arith.constant 1.000000e+00 : f32
    %24 = vector.broadcast %cst_17 : f32 to vector<8x128xf32>
    %25 = arith.addf %24, %23 : vector<8x128xf32>
    %26 = arith.divf %24, %25 : vector<8x128xf32>
    %c0_18 = arith.constant 0 : index
    %c0_19 = arith.constant 0 : index
    %27 = vector.load %arg8[%c0_18, %c0_19] : memref<8x128xf32, #tpu.memory_space<vmem>>, vector<8x128xf32>
    tpu.vector_store %arg8[%c0_18, %c0_19], %26 {strides = array<i32>} : memref<8x128xf32, #tpu.memory_space<vmem>>, vector<8x128xf32>,
    return
  }
  func.func @transform_0(%arg0: i32) -> (i32, i32) {
    %c0_i32 = arith.constant 0 : i32
    %c0_i32_0 = arith.constant 0 : i32
    return %arg0, %c0_i32 : i32, i32
  }
  func.func @transform_1(%arg0: i32) -> (i32, i32) {
    %c0_i32 = arith.constant 0 : i32
    %c0_i32_0 = arith.constant 0 : i32
    %c0_i32_1 = arith.constant 0 : i32
    return %c0_i32, %c0_i32_0 : i32, i32
  }
  func.func @transform_2(%arg0: i32) -> (i32, i32) {
    %c0_i32 = arith.constant 0 : i32
    %c0_i32_0 = arith.constant 0 : i32
    %c0_i32_1 = arith.constant 0 : i32
    return %c0_i32, %c0_i32_0 : i32, i32
  }
  func.func @transform_3(%arg0: i32) -> (i32, i32) {
    %c0_i32 = arith.constant 0 : i32
    %c0_i32_0 = arith.constant 0 : i32
    %c0_i32_1 = arith.constant 0 : i32
    return %c0_i32, %c0_i32_0 : i32, i32
  }
  func.func @transform_4(%arg0: i32) -> (i32, i32) {
    %c0_i32 = arith.constant 0 : i32
    %c0_i32_0 = arith.constant 0 : i32
    %c0_i32_1 = arith.constant 0 : i32
    return %c0_i32, %c0_i32_0 : i32, i32
  }
  func.func @transform_5(%arg0: i32) -> (i32, i32) {
    %c0_i32 = arith.constant 0 : i32
    %c0_i32_0 = arith.constant 0 : i32
    %c0_i32_1 = arith.constant 0 : i32
    return %c0_i32, %c0_i32_0 : i32, i32
  }
  func.func @transform_6(%arg0: i32) -> (i32, i32) {
    %c0_i32 = arith.constant 0 : i32
    %c0_i32_0 = arith.constant 0 : i32
    %c0_i32_1 = arith.constant 0 : i32
    return %c0_i32, %c0_i32_0 : i32, i32
  }
  func.func @transform_7(%arg0: i32) -> (i32, i32) {
    %c0_i32 = arith.constant 0 : i32
    %c0_i32_0 = arith.constant 0 : i32
    return %arg0, %c0_i32 : i32, i32
  }
}

</mosaic_0001>

<llo_original>
// kernel: d_net_gauss_forward.1
$region0: #{d_net_gauss_forward.1}
  #allocation0 [shape = 'u32[]', space=smem, size = 0x4, offset = 0x4, fixed_abs, tag = 'smem constant byte address 0x4 - core index']
  #allocation1 [shape = 'u32[72,128]{1,0:T(1,128)}', space=vmem, size = 0x9000, scoped, tag = 'internal scratch']
  %s0 = inlined_call_operand.vmem [shape: bf16[8,256], index: 0, kind: input, shape index: {}]
  %s1 = inlined_call_operand.vmem [shape: bf16[256,1024], index: 1, kind: input, shape index: {}]
  %s2 = inlined_call_operand.vmem [shape: f32[1,1024], index: 2, kind: input, shape index: {}]
  %s3 = inlined_call_operand.vmem [shape: bf16[1024,1024], index: 3, kind: input, shape index: {}]
  %s4 = inlined_call_operand.vmem [shape: f32[1,1024], index: 4, kind: input, shape index: {}]
  %s5 = inlined_call_operand.vmem [shape: bf16[1024,128], index: 5, kind: input, shape index: {}]
  %s6 = inlined_call_operand.vmem [shape: f32[1,128], index: 6, kind: input, shape index: {}]
  %s7 = inlined_call_operand.vmem [shape: f32[8,128], index: 7, kind: output, shape index: {}]
  %s8 = sld [smem:[#allocation0]]
  $region38: #{d_net_gauss_forward.1} parent=0
    _
  %s10 = ssub.s32 1, %s8
  %s11 = scalar_select 0, %s10, %s8
  // Predicated region
  $region2: #{d_net_gauss_forward.1} parent=0 // pred_check
    _
  $region3: #{d_net_gauss_forward.1} parent=0 // pred_check_branch
    %13 = sbr.rel (0) target = $region5
  $region4: #{d_net_gauss_forward.1} parent=0 // pred_region
    _
  $region5: #{d_net_gauss_forward.1} parent=0 // pred_fallthru
    _
  // Predicated region
  $region6: #{d_net_gauss_forward.1} parent=0 // pred_check
    _
  $region7: #{d_net_gauss_forward.1} parent=0 // pred_check_branch
    %15 = sbr.rel (0) target = $region9
  $region8: #{d_net_gauss_forward.1} parent=0 // pred_region
    _
  $region9: #{d_net_gauss_forward.1} parent=0 // pred_fallthru
    _
  // Predicated region
  $region10: #{d_net_gauss_forward.1} parent=0 // pred_check
    _
  $region11: #{d_net_gauss_forward.1} parent=0 // pred_check_branch
    %17 = sbr.rel (0) target = $region13
  $region12: #{d_net_gauss_forward.1} parent=0 // pred_region
    _
  $region13: #{d_net_gauss_forward.1} parent=0 // pred_fallthru
    _
  // Predicated region
  $region14: #{d_net_gauss_forward.1} parent=0 // pred_check
    _
  $region15: #{d_net_gauss_forward.1} parent=0 // pred_check_branch
    %19 = sbr.rel (0) target = $region17
  $region16: #{d_net_gauss_forward.1} parent=0 // pred_region
    _
  $region17: #{d_net_gauss_forward.1} parent=0 // pred_fallthru
    _
  // Predicated region
  $region18: #{d_net_gauss_forward.1} parent=0 // pred_check
    _
  $region19: #{d_net_gauss_forward.1} parent=0 // pred_check_branch
    %21 = sbr.rel (0) target = $region21
  $region20: #{d_net_gauss_forward.1} parent=0 // pred_region
    _
  $region21: #{d_net_gauss_forward.1} parent=0 // pred_fallthru
    _
  // Predicated region
  $region22: #{d_net_gauss_forward.1} parent=0 // pred_check
    _
  $region23: #{d_net_gauss_forward.1} parent=0 // pred_check_branch
    %23 = sbr.rel (0) target = $region25
  $region24: #{d_net_gauss_forward.1} parent=0 // pred_region
    _
  $region25: #{d_net_gauss_forward.1} parent=0 // pred_fallthru
    _
  // Predicated region
  $region26: #{d_net_gauss_forward.1} parent=0 // pred_check
    _
  $region27: #{d_net_gauss_forward.1} parent=0 // pred_check_branch
    %25 = sbr.rel (0) target = $region29
  $region28: #{d_net_gauss_forward.1} parent=0 // pred_region
    _
  $region29: #{d_net_gauss_forward.1} parent=0 // pred_fallthru
    _
  %v26 = vld [vmem:[%s0] sm:$0xff]
  %v27 = vld [vmem:[%s1] sm:$0xff]
  %v28 = vld [vmem:[%s1 + $0x8] sm:$0xff]
  %v29 = vld [vmem:[%s1 + $0x10] sm:$0xff]
  %v30 = vld [vmem:[%s1 + $0x18] sm:$0xff]
  %v31 = vld [vmem:[%s1 + $0x20] sm:$0xff]
  %v32 = vld [vmem:[%s1 + $0x28] sm:$0xff]
  %v33 = vld [vmem:[%s1 + $0x30] sm:$0xff]
  %v34 = vld [vmem:[%s1 + $0x38] sm:$0xff]
  %v35 = vld [vmem:[%s1 + $0x40] sm:$0xff]
  %v36 = vld [vmem:[%s1 + $0x48] sm:$0xff]
  %v37 = vld [vmem:[%s1 + $0x50] sm:$0xff]
  %v38 = vld [vmem:[%s1 + $0x58] sm:$0xff]
  %v39 = vld [vmem:[%s1 + $0x60] sm:$0xff]
  %v40 = vld [vmem:[%s1 + $0x68] sm:$0xff]
  %v41 = vld [vmem:[%s1 + $0x70] sm:$0xff]
  %v42 = vld [vmem:[%s1 + $0x78] sm:$0xff]
  %v43 = vld [vmem:[%s1 + $0x80] sm:$0xff]
  %v44 = vld [vmem:[%s1 + $0x88] sm:$0xff]
  %v45 = vld [vmem:[%s1 + $0x90] sm:$0xff]
  %v46 = vld [vmem:[%s1 + $0x98] sm:$0xff]
  %v47 = vld [vmem:[%s1 + $0xa0] sm:$0xff]
  %v48 = vld [vmem:[%s1 + $0xa8] sm:$0xff]
  %v49 = vld [vmem:[%s1 + $0xb0] sm:$0xff]
  %v50 = vld [vmem:[%s1 + $0xb8] sm:$0xff]
  %v51 = vld [vmem:[%s1 + $0xc0] sm:$0xff]
  %v52 = vld [vmem:[%s1 + $0xc8] sm:$0xff]
  %v53 = vld [vmem:[%s1 + $0xd0] sm:$0xff]
  %v54 = vld [vmem:[%s1 + $0xd8] sm:$0xff]
  %v55 = vld [vmem:[%s1 + $0xe0] sm:$0xff]
  %v56 = vld [vmem:[%s1 + $0xe8] sm:$0xff]
  %v57 = vld [vmem:[%s1 + $0xf0] sm:$0xff]
  %v58 = vld [vmem:[%s1 + $0xf8] sm:$0xff]
  %v59 = vld [vmem:[%s1 + $0x100] sm:$0xff]
  %v60 = vld [vmem:[%s1 + $0x108] sm:$0xff]
  %v61 = vld [vmem:[%s1 + $0x110] sm:$0xff]
  %v62 = vld [vmem:[%s1 + $0x118] sm:$0xff]
  %v63 = vld [vmem:[%s1 + $0x120] sm:$0xff]
  %v64 = vld [vmem:[%s1 + $0x128] sm:$0xff]
  %v65 = vld [vmem:[%s1 + $0x130] sm:$0xff]
  %v66 = vld [vmem:[%s1 + $0x138] sm:$0xff]
  %v67 = vld [vmem:[%s1 + $0x140] sm:$0xff]
  %v68 = vld [vmem:[%s1 + $0x148] sm:$0xff]
  %v69 = vld [vmem:[%s1 + $0x150] sm:$0xff]
  %v70 = vld [vmem:[%s1 + $0x158] sm:$0xff]
  %v71 = vld [vmem:[%s1 + $0x160] sm:$0xff]
  %v72 = vld [vmem:[%s1 + $0x168] sm:$0xff]
  %v73 = vld [vmem:[%s1 + $0x170] sm:$0xff]
  %v74 = vld [vmem:[%s1 + $0x178] sm:$0xff]
  %v75 = vld [vmem:[%s1 + $0x180] sm:$0xff]
  %v76 = vld [vmem:[%s1 + $0x188] sm:$0xff]
  %v77 = vld [vmem:[%s1 + $0x190] sm:$0xff]
  %v78 = vld [vmem:[%s1 + $0x198] sm:$0xff]
  %v79 = vld [vmem:[%s1 + $0x1a0] sm:$0xff]
  %v80 = vld [vmem:[%s1 + $0x1a8] sm:$0xff]
  %v81 = vld [vmem:[%s1 + $0x1b0] sm:$0xff]
  %v82 = vld [vmem:[%s1 + $0x1b8] sm:$0xff]
  %v83 = vld [vmem:[%s1 + $0x1c0] sm:$0xff]
  %v84 = vld [vmem:[%s1 + $0x1c8] sm:$0xff]
  %v85 = vld [vmem:[%s1 + $0x1d0] sm:$0xff]
  %v86 = vld [vmem:[%s1 + $0x1d8] sm:$0xff]
  %v87 = vld [vmem:[%s1 + $0x1e0] sm:$0xff]
  %v88 = vld [vmem:[%s1 + $0x1e8] sm:$0xff]
  %v89 = vld [vmem:[%s1 + $0x1f0] sm:$0xff]
  %v90 = vld [vmem:[%s1 + $0x1f8] sm:$0xff]
  %v91 = vld [vmem:[%s1 + $0x200] sm:$0xff]
  %v92 = vld [vmem:[%s1 + $0x208] sm:$0xff]
  %v93 = vld [vmem:[%s1 + $0x210] sm:$0xff]
  %v94 = vld [vmem:[%s1 + $0x218] sm:$0xff]
  %v95 = vld [vmem:[%s1 + $0x220] sm:$0xff]
  %v96 = vld [vmem:[%s1 + $0x228] sm:$0xff]
  %v97 = vld [vmem:[%s1 + $0x230] sm:$0xff]
  %v98 = vld [vmem:[%s1 + $0x238] sm:$0xff]
  %v99 = vld [vmem:[%s1 + $0x240] sm:$0xff]
  %v100 = vld [vmem:[%s1 + $0x248] sm:$0xff]
  %v101 = vld [vmem:[%s1 + $0x250] sm:$0xff]
  %v102 = vld [vmem:[%s1 + $0x258] sm:$0xff]
  %v103 = vld [vmem:[%s1 + $0x260] sm:$0xff]
  %v104 = vld [vmem:[%s1 + $0x268] sm:$0xff]
  %v105 = vld [vmem:[%s1 + $0x270] sm:$0xff]
  %v106 = vld [vmem:[%s1 + $0x278] sm:$0xff]
  %v107 = vld [vmem:[%s1 + $0x280] sm:$0xff]
  %v108 = vld [vmem:[%s1 + $0x288] sm:$0xff]
  %v109 = vld [vmem:[%s1 + $0x290] sm:$0xff]
  %v110 = vld [vmem:[%s1 + $0x298] sm:$0xff]
  %v111 = vld [vmem:[%s1 + $0x2a0] sm:$0xff]
  %v112 = vld [vmem:[%s1 + $0x2a8] sm:$0xff]
  %v113 = vld [vmem:[%s1 + $0x2b0] sm:$0xff]
  %v114 = vld [vmem:[%s1 + $0x2b8] sm:$0xff]
  %v115 = vld [vmem:[%s1 + $0x2c0] sm:$0xff]
  %v116 = vld [vmem:[%s1 + $0x2c8] sm:$0xff]
  %v117 = vld [vmem:[%s1 + $0x2d0] sm:$0xff]
  %v118 = vld [vmem:[%s1 + $0x2d8] sm:$0xff]
  %v119 = vld [vmem:[%s1 + $0x2e0] sm:$0xff]
  %v120 = vld [vmem:[%s1 + $0x2e8] sm:$0xff]
  %v121 = vld [vmem:[%s1 + $0x2f0] sm:$0xff]
  %v122 = vld [vmem:[%s1 + $0x2f8] sm:$0xff]
  %v123 = vld [vmem:[%s1 + $0x300] sm:$0xff]
  %v124 = vld [vmem:[%s1 + $0x308] sm:$0xff]
  %v125 = vld [vmem:[%s1 + $0x310] sm:$0xff]
  %v126 = vld [vmem:[%s1 + $0x318] sm:$0xff]
  %v127 = vld [vmem:[%s1 + $0x320] sm:$0xff]
  %v128 = vld [vmem:[%s1 + $0x328] sm:$0xff]
  %v129 = vld [vmem:[%s1 + $0x330] sm:$0xff]
  %v130 = vld [vmem:[%s1 + $0x338] sm:$0xff]
  %v131 = vld [vmem:[%s1 + $0x340] sm:$0xff]
  %v132 = vld [vmem:[%s1 + $0x348] sm:$0xff]
  %v133 = vld [vmem:[%s1 + $0x350] sm:$0xff]
  %v134 = vld [vmem:[%s1 + $0x358] sm:$0xff]
  %v135 = vld [vmem:[%s1 + $0x360] sm:$0xff]
  %v136 = vld [vmem:[%s1 + $0x368] sm:$0xff]
  %v137 = vld [vmem:[%s1 + $0x370] sm:$0xff]
  %v138 = vld [vmem:[%s1 + $0x378] sm:$0xff]
  %v139 = vld [vmem:[%s1 + $0x380] sm:$0xff]
  %v140 = vld [vmem:[%s1 + $0x388] sm:$0xff]
  %v141 = vld [vmem:[%s1 + $0x390] sm:$0xff]
  %v142 = vld [vmem:[%s1 + $0x398] sm:$0xff]
  %v143 = vld [vmem:[%s1 + $0x3a0] sm:$0xff]
  %v144 = vld [vmem:[%s1 + $0x3a8] sm:$0xff]
  %v145 = vld [vmem:[%s1 + $0x3b0] sm:$0xff]
  %v146 = vld [vmem:[%s1 + $0x3b8] sm:$0xff]
  %v147 = vld [vmem:[%s1 + $0x3c0] sm:$0xff]
  %v148 = vld [vmem:[%s1 + $0x3c8] sm:$0xff]
  %v149 = vld [vmem:[%s1 + $0x3d0] sm:$0xff]
  %v150 = vld [vmem:[%s1 + $0x3d8] sm:$0xff]
  %v151 = vld [vmem:[%s1 + $0x3e0] sm:$0xff]
  %v152 = vld [vmem:[%s1 + $0x3e8] sm:$0xff]
  %v153 = vld [vmem:[%s1 + $0x3f0] sm:$0xff]
  %v154 = vld [vmem:[%s1 + $0x3f8] sm:$0xff]
  %v155 = vld [vmem:[%s2] sm:$0xff]
  %v157 = vperm.slane %v155, 0
  %v158 = vperm.slane %v155, 1
  %v159 = vperm.slane %v155, 2
  %v160 = vperm.slane %v155, 3
  %v161 = vperm.slane %v155, 4
  %v162 = vperm.slane %v155, 5
  %v163 = vperm.slane %v155, 6
  %v164 = vperm.slane %v155, 7
  %v174 = vunpack.c.l.b16 %v26
  %v175 = vunpack.c.h.b16 %v26
  %v176 = vpack.c.b16 %v174, %v174
  %v177 = vpack.c.b16 %v175, %v175
  %v308 = vunpack.c.l.b16 %v27
  %v309 = vunpack.c.h.b16 %v27
  %v310 = vunpack.c.l.b16 %v28
  %v311 = vunpack.c.h.b16 %v28
  %v312 = vunpack.c.l.b16 %v29
  %v313 = vunpack.c.h.b16 %v29
  %v314 = vunpack.c.l.b16 %v30
  %v315 = vunpack.c.h.b16 %v30
  %v316 = vunpack.c.l.b16 %v31
  %v317 = vunpack.c.h.b16 %v31
  %v318 = vunpack.c.l.b16 %v32
  %v319 = vunpack.c.h.b16 %v32
  %v320 = vunpack.c.l.b16 %v33
  %v321 = vunpack.c.h.b16 %v33
  %v322 = vunpack.c.l.b16 %v34
  %v323 = vunpack.c.h.b16 %v34
  %v324 = vunpack.c.l.b16 %v35
  %v325 = vunpack.c.h.b16 %v35
  %v326 = vunpack.c.l.b16 %v36
  %v327 = vunpack.c.h.b16 %v36
  %v328 = vunpack.c.l.b16 %v37
  %v329 = vunpack.c.h.b16 %v37
  %v330 = vunpack.c.l.b16 %v38
  %v331 = vunpack.c.h.b16 %v38
  %v332 = vunpack.c.l.b16 %v39
  %v333 = vunpack.c.h.b16 %v39
  %v334 = vunpack.c.l.b16 %v40
  %v335 = vunpack.c.h.b16 %v40
  %v336 = vunpack.c.l.b16 %v41
  %v337 = vunpack.c.h.b16 %v41
  %v338 = vunpack.c.l.b16 %v42
  %v339 = vunpack.c.h.b16 %v42
  %v340 = vunpack.c.l.b16 %v43
  %v341 = vunpack.c.h.b16 %v43
  %v342 = vunpack.c.l.b16 %v44
  %v343 = vunpack.c.h.b16 %v44
  %v344 = vunpack.c.l.b16 %v45
  %v345 = vunpack.c.h.b16 %v45
  %v346 = vunpack.c.l.b16 %v46
  %v347 = vunpack.c.h.b16 %v46
  %v348 = vunpack.c.l.b16 %v47
  %v349 = vunpack.c.h.b16 %v47
  %v350 = vunpack.c.l.b16 %v48
  %v351 = vunpack.c.h.b16 %v48
  %v352 = vunpack.c.l.b16 %v49
  %v353 = vunpack.c.h.b16 %v49
  %v354 = vunpack.c.l.b16 %v50
  %v355 = vunpack.c.h.b16 %v50
  %v356 = vunpack.c.l.b16 %v51
  %v357 = vunpack.c.h.b16 %v51
  %v358 = vunpack.c.l.b16 %v52
  %v359 = vunpack.c.h.b16 %v52
  %v360 = vunpack.c.l.b16 %v53
  %v361 = vunpack.c.h.b16 %v53
  %v362 = vunpack.c.l.b16 %v54
  %v363 = vunpack.c.h.b16 %v54
  %v364 = vunpack.c.l.b16 %v55
  %v365 = vunpack.c.h.b16 %v55
  %v366 = vunpack.c.l.b16 %v56
  %v367 = vunpack.c.h.b16 %v56
  %v368 = vunpack.c.l.b16 %v57
  %v369 = vunpack.c.h.b16 %v57
  %v370 = vunpack.c.l.b16 %v58
  %v371 = vunpack.c.h.b16 %v58
  %v372 = vunpack.c.l.b16 %v59
  %v373 = vunpack.c.h.b16 %v59
  %v374 = vunpack.c.l.b16 %v60
  %v375 = vunpack.c.h.b16 %v60
  %v376 = vunpack.c.l.b16 %v61
  %v377 = vunpack.c.h.b16 %v61
  %v378 = vunpack.c.l.b16 %v62
  %v379 = vunpack.c.h.b16 %v62
  %v380 = vunpack.c.l.b16 %v63
  %v381 = vunpack.c.h.b16 %v63
  %v382 = vunpack.c.l.b16 %v64
  %v383 = vunpack.c.h.b16 %v64
  %v384 = vunpack.c.l.b16 %v65
  %v385 = vunpack.c.h.b16 %v65
  %v386 = vunpack.c.l.b16 %v66
  %v387 = vunpack.c.h.b16 %v66
  %v388 = vunpack.c.l.b16 %v67
  %v389 = vunpack.c.h.b16 %v67
  %v390 = vunpack.c.l.b16 %v68
  %v391 = vunpack.c.h.b16 %v68
  %v392 = vunpack.c.l.b16 %v69
  %v393 = vunpack.c.h.b16 %v69
  %v394 = vunpack.c.l.b16 %v70
  %v395 = vunpack.c.h.b16 %v70
  %v396 = vunpack.c.l.b16 %v71
  %v397 = vunpack.c.h.b16 %v71
  %v398 = vunpack.c.l.b16 %v72
  %v399 = vunpack.c.h.b16 %v72
  %v400 = vunpack.c.l.b16 %v73
  %v401 = vunpack.c.h.b16 %v73
  %v402 = vunpack.c.l.b16 %v74
  %v403 = vunpack.c.h.b16 %v74
  %v404 = vunpack.c.l.b16 %v75
  %v405 = vunpack.c.h.b16 %v75
  %v406 = vunpack.c.l.b16 %v76
  %v407 = vunpack.c.h.b16 %v76
  %v408 = vunpack.c.l.b16 %v77
  %v409 = vunpack.c.h.b16 %v77
  %v410 = vunpack.c.l.b16 %v78
  %v411 = vunpack.c.h.b16 %v78
  %v412 = vunpack.c.l.b16 %v79
  %v413 = vunpack.c.h.b16 %v79
  %v414 = vunpack.c.l.b16 %v80
  %v415 = vunpack.c.h.b16 %v80
  %v416 = vunpack.c.l.b16 %v81
  %v417 = vunpack.c.h.b16 %v81
  %v418 = vunpack.c.l.b16 %v82
  %v419 = vunpack.c.h.b16 %v82
  %v420 = vunpack.c.l.b16 %v83
  %v421 = vunpack.c.h.b16 %v83
  %v422 = vunpack.c.l.b16 %v84
  %v423 = vunpack.c.h.b16 %v84
  %v424 = vunpack.c.l.b16 %v85
  %v425 = vunpack.c.h.b16 %v85
  %v426 = vunpack.c.l.b16 %v86
  %v427 = vunpack.c.h.b16 %v86
  %v428 = vunpack.c.l.b16 %v87
  %v429 = vunpack.c.h.b16 %v87
  %v430 = vunpack.c.l.b16 %v88
  %v431 = vunpack.c.h.b16 %v88
  %v432 = vunpack.c.l.b16 %v89
  %v433 = vunpack.c.h.b16 %v89
  %v434 = vunpack.c.l.b16 %v90
  %v435 = vunpack.c.h.b16 %v90
  %v436 = vunpack.c.l.b16 %v91
  %v437 = vunpack.c.h.b16 %v91
  %v438 = vunpack.c.l.b16 %v92
  %v439 = vunpack.c.h.b16 %v92
  %v440 = vunpack.c.l.b16 %v93
  %v441 = vunpack.c.h.b16 %v93
  %v442 = vunpack.c.l.b16 %v94
  %v443 = vunpack.c.h.b16 %v94
  %v444 = vunpack.c.l.b16 %v95
  %v445 = vunpack.c.h.b16 %v95
  %v446 = vunpack.c.l.b16 %v96
  %v447 = vunpack.c.h.b16 %v96
  %v448 = vunpack.c.l.b16 %v97
  %v449 = vunpack.c.h.b16 %v97
  %v450 = vunpack.c.l.b16 %v98
  %v451 = vunpack.c.h.b16 %v98
  %v452 = vunpack.c.l.b16 %v99
  %v453 = vunpack.c.h.b16 %v99
  %v454 = vunpack.c.l.b16 %v100
  %v455 = vunpack.c.h.b16 %v100
  %v456 = vunpack.c.l.b16 %v101
  %v457 = vunpack.c.h.b16 %v101
  %v458 = vunpack.c.l.b16 %v102
  %v459 = vunpack.c.h.b16 %v102
  %v460 = vunpack.c.l.b16 %v103
  %v461 = vunpack.c.h.b16 %v103
  %v462 = vunpack.c.l.b16 %v104
  %v463 = vunpack.c.h.b16 %v104
  %v464 = vunpack.c.l.b16 %v105
  %v465 = vunpack.c.h.b16 %v105
  %v466 = vunpack.c.l.b16 %v106
  %v467 = vunpack.c.h.b16 %v106
  %v468 = vunpack.c.l.b16 %v107
  %v469 = vunpack.c.h.b16 %v107
  %v470 = vunpack.c.l.b16 %v108
  %v471 = vunpack.c.h.b16 %v108
  %v472 = vunpack.c.l.b16 %v109
  %v473 = vunpack.c.h.b16 %v109
  %v474 = vunpack.c.l.b16 %v110
  %v475 = vunpack.c.h.b16 %v110
  %v476 = vunpack.c.l.b16 %v111
  %v477 = vunpack.c.h.b16 %v111
  %v478 = vunpack.c.l.b16 %v112
  %v479 = vunpack.c.h.b16 %v112
  %v480 = vunpack.c.l.b16 %v113
  %v481 = vunpack.c.h.b16 %v113
  %v482 = vunpack.c.l.b16 %v114
  %v483 = vunpack.c.h.b16 %v114
  %v484 = vunpack.c.l.b16 %v115
  %v485 = vunpack.c.h.b16 %v115
  %v486 = vunpack.c.l.b16 %v116
  %v487 = vunpack.c.h.b16 %v116
  %v488 = vunpack.c.l.b16 %v117
  %v489 = vunpack.c.h.b16 %v117
  %v490 = vunpack.c.l.b16 %v118
  %v491 = vunpack.c.h.b16 %v118
  %v492 = vunpack.c.l.b16 %v119
  %v493 = vunpack.c.h.b16 %v119
  %v494 = vunpack.c.l.b16 %v120
  %v495 = vunpack.c.h.b16 %v120
  %v496 = vunpack.c.l.b16 %v121
  %v497 = vunpack.c.h.b16 %v121
  %v498 = vunpack.c.l.b16 %v122
  %v499 = vunpack.c.h.b16 %v122
  %v500 = vunpack.c.l.b16 %v123
  %v501 = vunpack.c.h.b16 %v123
  %v502 = vunpack.c.l.b16 %v124
  %v503 = vunpack.c.h.b16 %v124
  %v504 = vunpack.c.l.b16 %v125
  %v505 = vunpack.c.h.b16 %v125
  %v506 = vunpack.c.l.b16 %v126
  %v507 = vunpack.c.h.b16 %v126
  %v508 = vunpack.c.l.b16 %v127
  %v509 = vunpack.c.h.b16 %v127
  %v510 = vunpack.c.l.b16 %v128
  %v511 = vunpack.c.h.b16 %v128
  %v512 = vunpack.c.l.b16 %v129
  %v513 = vunpack.c.h.b16 %v129
  %v514 = vunpack.c.l.b16 %v130
  %v515 = vunpack.c.h.b16 %v130
  %v516 = vunpack.c.l.b16 %v131
  %v517 = vunpack.c.h.b16 %v131
  %v518 = vunpack.c.l.b16 %v132
  %v519 = vunpack.c.h.b16 %v132
  %v520 = vunpack.c.l.b16 %v133
  %v521 = vunpack.c.h.b16 %v133
  %v522 = vunpack.c.l.b16 %v134
  %v523 = vunpack.c.h.b16 %v134
  %v524 = vunpack.c.l.b16 %v135
  %v525 = vunpack.c.h.b16 %v135
  %v526 = vunpack.c.l.b16 %v136
  %v527 = vunpack.c.h.b16 %v136
  %v528 = vunpack.c.l.b16 %v137
  %v529 = vunpack.c.h.b16 %v137
  %v530 = vunpack.c.l.b16 %v138
  %v531 = vunpack.c.h.b16 %v138
  %v532 = vunpack.c.l.b16 %v139
  %v533 = vunpack.c.h.b16 %v139
  %v534 = vunpack.c.l.b16 %v140
  %v535 = vunpack.c.h.b16 %v140
  %v536 = vunpack.c.l.b16 %v141
  %v537 = vunpack.c.h.b16 %v141
  %v538 = vunpack.c.l.b16 %v142
  %v539 = vunpack.c.h.b16 %v142
  %v540 = vunpack.c.l.b16 %v143
  %v541 = vunpack.c.h.b16 %v143
  %v542 = vunpack.c.l.b16 %v144
  %v543 = vunpack.c.h.b16 %v144
  %v544 = vunpack.c.l.b16 %v145
  %v545 = vunpack.c.h.b16 %v145
  %v546 = vunpack.c.l.b16 %v146
  %v547 = vunpack.c.h.b16 %v146
  %v548 = vunpack.c.l.b16 %v147
  %v549 = vunpack.c.h.b16 %v147
  %v550 = vunpack.c.l.b16 %v148
  %v551 = vunpack.c.h.b16 %v148
  %v552 = vunpack.c.l.b16 %v149
  %v553 = vunpack.c.h.b16 %v149
  %v554 = vunpack.c.l.b16 %v150
  %v555 = vunpack.c.h.b16 %v150
  %v556 = vunpack.c.l.b16 %v151
  %v557 = vunpack.c.h.b16 %v151
  %v558 = vunpack.c.l.b16 %v152
  %v559 = vunpack.c.h.b16 %v152
  %v560 = vunpack.c.l.b16 %v153
  %v561 = vunpack.c.h.b16 %v153
  %v562 = vunpack.c.l.b16 %v154
  %v563 = vunpack.c.h.b16 %v154
  %v564 = vpack.c.b16 %v316, %v308
  %v565 = vpack.c.b16 %v317, %v309
  %v566 = vpack.c.b16 %v318, %v310
  %v567 = vpack.c.b16 %v319, %v311
  %v568 = vpack.c.b16 %v320, %v312
  %v569 = vpack.c.b16 %v321, %v313
  %v570 = vpack.c.b16 %v322, %v314
  %v571 = vpack.c.b16 %v323, %v315
  %v572 = vpack.c.b16 %v332, %v324
  %v573 = vpack.c.b16 %v333, %v325
  %v574 = vpack.c.b16 %v334, %v326
  %v575 = vpack.c.b16 %v335, %v327
  %v576 = vpack.c.b16 %v336, %v328
  %v577 = vpack.c.b16 %v337, %v329
  %v578 = vpack.c.b16 %v338, %v330
  %v579 = vpack.c.b16 %v339, %v331
  %v580 = vpack.c.b16 %v348, %v340
  %v581 = vpack.c.b16 %v349, %v341
  %v582 = vpack.c.b16 %v350, %v342
  %v583 = vpack.c.b16 %v351, %v343
  %v584 = vpack.c.b16 %v352, %v344
  %v585 = vpack.c.b16 %v353, %v345
  %v586 = vpack.c.b16 %v354, %v346
  %v587 = vpack.c.b16 %v355, %v347
  %v588 = vpack.c.b16 %v364, %v356
  %v589 = vpack.c.b16 %v365, %v357
  %v590 = vpack.c.b16 %v366, %v358
  %v591 = vpack.c.b16 %v367, %v359
  %v592 = vpack.c.b16 %v368, %v360
  %v593 = vpack.c.b16 %v369, %v361
  %v594 = vpack.c.b16 %v370, %v362
  %v595 = vpack.c.b16 %v371, %v363
  %v596 = vpack.c.b16 %v380, %v372
  %v597 = vpack.c.b16 %v381, %v373
  %v598 = vpack.c.b16 %v382, %v374
  %v599 = vpack.c.b16 %v383, %v375
  %v600 = vpack.c.b16 %v384, %v376
  %v601 = vpack.c.b16 %v385, %v377
  %v602 = vpack.c.b16 %v386, %v378
  %v603 = vpack.c.b16 %v387, %v379
  %v604 = vpack.c.b16 %v396, %v388
  %v605 = vpack.c.b16 %v397, %v389
  %v606 = vpack.c.b16 %v398, %v390
  %v607 = vpack.c.b16 %v399, %v391
  %v608 = vpack.c.b16 %v400, %v392
  %v609 = vpack.c.b16 %v401, %v393
  %v610 = vpack.c.b16 %v402, %v394
  %v611 = vpack.c.b16 %v403, %v395
  %v612 = vpack.c.b16 %v412, %v404
  %v613 = vpack.c.b16 %v413, %v405
  %v614 = vpack.c.b16 %v414, %v406
  %v615 = vpack.c.b16 %v415, %v407
  %v616 = vpack.c.b16 %v416, %v408
  %v617 = vpack.c.b16 %v417, %v409
  %v618 = vpack.c.b16 %v418, %v410
  %v619 = vpack.c.b16 %v419, %v411
  %v620 = vpack.c.b16 %v428, %v420
  %v621 = vpack.c.b16 %v429, %v421
  %v622 = vpack.c.b16 %v430, %v422
  %v623 = vpack.c.b16 %v431, %v423
  %v624 = vpack.c.b16 %v432, %v424
  %v625 = vpack.c.b16 %v433, %v425
  %v626 = vpack.c.b16 %v434, %v426
  %v627 = vpack.c.b16 %v435, %v427
  %v628 = vpack.c.b16 %v444, %v436
  %v629 = vpack.c.b16 %v445, %v437
  %v630 = vpack.c.b16 %v446, %v438
  %v631 = vpack.c.b16 %v447, %v439
  %v632 = vpack.c.b16 %v448, %v440
  %v633 = vpack.c.b16 %v449, %v441
  %v634 = vpack.c.b16 %v450, %v442
  %v635 = vpack.c.b16 %v451, %v443
  %v636 = vpack.c.b16 %v460, %v452
  %v637 = vpack.c.b16 %v461, %v453
  %v638 = vpack.c.b16 %v462, %v454
  %v639 = vpack.c.b16 %v463, %v455
  %v640 = vpack.c.b16 %v464, %v456
  %v641 = vpack.c.b16 %v465, %v457
  %v642 = vpack.c.b16 %v466, %v458
  %v643 = vpack.c.b16 %v467, %v459
  %v644 = vpack.c.b16 %v476, %v468
  %v645 = vpack.c.b16 %v477, %v469
  %v646 = vpack.c.b16 %v478, %v470
  %v647 = vpack.c.b16 %v479, %v471
  %v648 = vpack.c.b16 %v480, %v472
  %v649 = vpack.c.b16 %v481, %v473
  %v650 = vpack.c.b16 %v482, %v474
  %v651 = vpack.c.b16 %v483, %v475
  %v652 = vpack.c.b16 %v492, %v484
  %v653 = vpack.c.b16 %v493, %v485
  %v654 = vpack.c.b16 %v494, %v486
  %v655 = vpack.c.b16 %v495, %v487
  %v656 = vpack.c.b16 %v496, %v488
  %v657 = vpack.c.b16 %v497, %v489
  %v658 = vpack.c.b16 %v498, %v490
  %v659 = vpack.c.b16 %v499, %v491
  %v660 = vpack.c.b16 %v508, %v500
  %v661 = vpack.c.b16 %v509, %v501
  %v662 = vpack.c.b16 %v510, %v502
  %v663 = vpack.c.b16 %v511, %v503
  %v664 = vpack.c.b16 %v512, %v504
  %v665 = vpack.c.b16 %v513, %v505
  %v666 = vpack.c.b16 %v514, %v506
  %v667 = vpack.c.b16 %v515, %v507
  %v668 = vpack.c.b16 %v524, %v516
  %v669 = vpack.c.b16 %v525, %v517
  %v670 = vpack.c.b16 %v526, %v518
  %v671 = vpack.c.b16 %v527, %v519
  %v672 = vpack.c.b16 %v528, %v520
  %v673 = vpack.c.b16 %v529, %v521
  %v674 = vpack.c.b16 %v530, %v522
  %v675 = vpack.c.b16 %v531, %v523
  %v676 = vpack.c.b16 %v540, %v532
  %v677 = vpack.c.b16 %v541, %v533
  %v678 = vpack.c.b16 %v542, %v534
  %v679 = vpack.c.b16 %v543, %v535
  %v680 = vpack.c.b16 %v544, %v536
  %v681 = vpack.c.b16 %v545, %v537
  %v682 = vpack.c.b16 %v546, %v538
  %v683 = vpack.c.b16 %v547, %v539
  %v684 = vpack.c.b16 %v556, %v548
  %v685 = vpack.c.b16 %v557, %v549
  %v686 = vpack.c.b16 %v558, %v550
  %v687 = vpack.c.b16 %v559, %v551
  %v688 = vpack.c.b16 %v560, %v552
  %v689 = vpack.c.b16 %v561, %v553
  %v690 = vpack.c.b16 %v562, %v554
  %v691 = vpack.c.b16 %v563, %v555
  %820 = vmatpush.bf16.msra.mxu0 %v620
  %821 = vmatpush.bf16.msra.mxu0 %v612
  %822 = vmatpush.bf16.msra.mxu0 %v604
  %823 = vmatpush.bf16.msra.mxu0 %v596
  %824 = vmatpush.bf16.msra.mxu0 %v588
  %825 = vmatpush.bf16.msra.mxu0 %v580
  %826 = vmatpush.bf16.msra.mxu0 %v572
  %827 = vmatpush.bf16.msra.mxu0 %v564
  %828 = vmatmul.bf16.gmra.mxu0 %v176
  %v829 = vpop.f32.mrf.mxu0
  %v830 = vadd.f32 %v157, %v829
  %v831 = vpop.f32.mrf.mxu0
  %832 = vdwg.mxu0
  %833 = vmatpush.bf16.msra.mxu0 %v684
  %834 = vmatpush.bf16.msra.mxu0 %v676
  %835 = vmatpush.bf16.msra.mxu0 %v668
  %836 = vmatpush.bf16.msra.mxu0 %v660
  %837 = vmatpush.bf16.msra.mxu0 %v652
  %838 = vmatpush.bf16.msra.mxu0 %v644
  %839 = vmatpush.bf16.msra.mxu0 %v636
  %840 = vmatpush.bf16.msra.mxu0 %v628
  %841 = vmatmul.bf16.gmra.mxu0 %v177
  %v842 = vpop.f32.mrf.mxu0
  %v843 = vadd.f32 %v830, %v842
  %v844 = vpop.f32.mrf.mxu0
  %845 = vdwg.mxu0
  %846 = vmatpush.bf16.msra.mxu0 %v621
  %847 = vmatpush.bf16.msra.mxu0 %v613
  %848 = vmatpush.bf16.msra.mxu0 %v605
  %849 = vmatpush.bf16.msra.mxu0 %v597
  %850 = vmatpush.bf16.msra.mxu0 %v589
  %851 = vmatpush.bf16.msra.mxu0 %v581
  %852 = vmatpush.bf16.msra.mxu0 %v573
  %853 = vmatpush.bf16.msra.mxu0 %v565
  %854 = vmatmul.bf16.gmra.mxu0 %v176
  %v855 = vpop.f32.mrf.mxu0
  %v856 = vadd.f32 %v158, %v855
  %v857 = vpop.f32.mrf.mxu0
  %858 = vdwg.mxu0
  %859 = vmatpush.bf16.msra.mxu0 %v685
  %860 = vmatpush.bf16.msra.mxu0 %v677
  %861 = vmatpush.bf16.msra.mxu0 %v669
  %862 = vmatpush.bf16.msra.mxu0 %v661
  %863 = vmatpush.bf16.msra.mxu0 %v653
  %864 = vmatpush.bf16.msra.mxu0 %v645
  %865 = vmatpush.bf16.msra.mxu0 %v637
  %866 = vmatpush.bf16.msra.mxu0 %v629
  %867 = vmatmul.bf16.gmra.mxu0 %v177
  %v868 = vpop.f32.mrf.mxu0
  %v869 = vadd.f32 %v856, %v868
  %v870 = vpop.f32.mrf.mxu0
  %871 = vdwg.mxu0
  %872 = vmatpush.bf16.msra.mxu0 %v622
  %873 = vmatpush.bf16.msra.mxu0 %v614
  %874 = vmatpush.bf16.msra.mxu0 %v606
  %875 = vmatpush.bf16.msra.mxu0 %v598
  %876 = vmatpush.bf16.msra.mxu0 %v590
  %877 = vmatpush.bf16.msra.mxu0 %v582
  %878 = vmatpush.bf16.msra.mxu0 %v574
  %879 = vmatpush.bf16.msra.mxu0 %v566
  %880 = vmatmul.bf16.gmra.mxu0 %v176
  %v881 = vpop.f32.mrf.mxu0
  %v882 = vadd.f32 %v159, %v881
  %v883 = vpop.f32.mrf.mxu0
  %884 = vdwg.mxu0
  %885 = vmatpush.bf16.msra.mxu0 %v686
  %886 = vmatpush.bf16.msra.mxu0 %v678
  %887 = vmatpush.bf16.msra.mxu0 %v670
  %888 = vmatpush.bf16.msra.mxu0 %v662
  %889 = vmatpush.bf16.msra.mxu0 %v654
  %890 = vmatpush.bf16.msra.mxu0 %v646
  %891 = vmatpush.bf16.msra.mxu0 %v638
  %892 = vmatpush.bf16.msra.mxu0 %v630
  %893 = vmatmul.bf16.gmra.mxu0 %v177
  %v894 = vpop.f32.mrf.mxu0
  %v895 = vadd.f32 %v882, %v894
  %v896 = vpop.f32.mrf.mxu0
  %897 = vdwg.mxu0
  %898 = vmatpush.bf16.msra.mxu0 %v623
  %899 = vmatpush.bf16.msra.mxu0 %v615
  %900 = vmatpush.bf16.msra.mxu0 %v607
  %901 = vmatpush.bf16.msra.mxu0 %v599
  %902 = vmatpush.bf16.msra.mxu0 %v591
  %903 = vmatpush.bf16.msra.mxu0 %v583
  %904 = vmatpush.bf16.msra.mxu0 %v575
  %905 = vmatpush.bf16.msra.mxu0 %v567
  %906 = vmatmul.bf16.gmra.mxu0 %v176
  %v907 = vpop.f32.mrf.mxu0
  %v908 = vadd.f32 %v160, %v907
  %v909 = vpop.f32.mrf.mxu0
  %910 = vdwg.mxu0
  %911 = vmatpush.bf16.msra.mxu0 %v687
  %912 = vmatpush.bf16.msra.mxu0 %v679
  %913 = vmatpush.bf16.msra.mxu0 %v671
  %914 = vmatpush.bf16.msra.mxu0 %v663
  %915 = vmatpush.bf16.msra.mxu0 %v655
  %916 = vmatpush.bf16.msra.mxu0 %v647
  %917 = vmatpush.bf16.msra.mxu0 %v639
  %918 = vmatpush.bf16.msra.mxu0 %v631
  %919 = vmatmul.bf16.gmra.mxu0 %v177
  %v920 = vpop.f32.mrf.mxu0
  %v921 = vadd.f32 %v908, %v920
  %v922 = vpop.f32.mrf.mxu0
  %923 = vdwg.mxu0
  %924 = vmatpush.bf16.msra.mxu0 %v624
  %925 = vmatpush.bf16.msra.mxu0 %v616
  %926 = vmatpush.bf16.msra.mxu0 %v608
  %927 = vmatpush.bf16.msra.mxu0 %v600
  %928 = vmatpush.bf16.msra.mxu0 %v592
  %929 = vmatpush.bf16.msra.mxu0 %v584
  %930 = vmatpush.bf16.msra.mxu0 %v576
  %931 = vmatpush.bf16.msra.mxu0 %v568
  %932 = vmatmul.bf16.gmra.mxu0 %v176
  %v933 = vpop.f32.mrf.mxu0
  %v934 = vadd.f32 %v161, %v933
  %v935 = vpop.f32.mrf.mxu0
  %936 = vdwg.mxu0
  %937 = vmatpush.bf16.msra.mxu0 %v688
  %938 = vmatpush.bf16.msra.mxu0 %v680
  %939 = vmatpush.bf16.msra.mxu0 %v672
  %940 = vmatpush.bf16.msra.mxu0 %v664
  %941 = vmatpush.bf16.msra.mxu0 %v656
  %942 = vmatpush.bf16.msra.mxu0 %v648
  %943 = vmatpush.bf16.msra.mxu0 %v640
  %944 = vmatpush.bf16.msra.mxu0 %v632
  %945 = vmatmul.bf16.gmra.mxu0 %v177
  %v946 = vpop.f32.mrf.mxu0
  %v947 = vadd.f32 %v934, %v946
  %v948 = vpop.f32.mrf.mxu0
  %949 = vdwg.mxu0
  %950 = vmatpush.bf16.msra.mxu0 %v625
  %951 = vmatpush.bf16.msra.mxu0 %v617
  %952 = vmatpush.bf16.msra.mxu0 %v609
  %953 = vmatpush.bf16.msra.mxu0 %v601
  %954 = vmatpush.bf16.msra.mxu0 %v593
  %955 = vmatpush.bf16.msra.mxu0 %v585
  %956 = vmatpush.bf16.msra.mxu0 %v577
  %957 = vmatpush.bf16.msra.mxu0 %v569
  %958 = vmatmul.bf16.gmra.mxu0 %v176
  %v959 = vpop.f32.mrf.mxu0
  %v960 = vadd.f32 %v162, %v959
  %v961 = vpop.f32.mrf.mxu0
  %962 = vdwg.mxu0
  %963 = vmatpush.bf16.msra.mxu0 %v689
  %964 = vmatpush.bf16.msra.mxu0 %v681
  %965 = vmatpush.bf16.msra.mxu0 %v673
  %966 = vmatpush.bf16.msra.mxu0 %v665
  %967 = vmatpush.bf16.msra.mxu0 %v657
  %968 = vmatpush.bf16.msra.mxu0 %v649
  %969 = vmatpush.bf16.msra.mxu0 %v641
  %970 = vmatpush.bf16.msra.mxu0 %v633
  %971 = vmatmul.bf16.gmra.mxu0 %v177
  %v972 = vpop.f32.mrf.mxu0
  %v973 = vadd.f32 %v960, %v972
  %v974 = vpop.f32.mrf.mxu0
  %975 = vdwg.mxu0
  %976 = vmatpush.bf16.msra.mxu0 %v626
  %977 = vmatpush.bf16.msra.mxu0 %v618
  %978 = vmatpush.bf16.msra.mxu0 %v610
  %979 = vmatpush.bf16.msra.mxu0 %v602
  %980 = vmatpush.bf16.msra.mxu0 %v594
  %981 = vmatpush.bf16.msra.mxu0 %v586
  %982 = vmatpush.bf16.msra.mxu0 %v578
  %983 = vmatpush.bf16.msra.mxu0 %v570
  %984 = vmatmul.bf16.gmra.mxu0 %v176
  %v985 = vpop.f32.mrf.mxu0
  %v986 = vadd.f32 %v163, %v985
  %v987 = vpop.f32.mrf.mxu0
  %988 = vdwg.mxu0
  %989 = vmatpush.bf16.msra.mxu0 %v690
  %990 = vmatpush.bf16.msra.mxu0 %v682
  %991 = vmatpush.bf16.msra.mxu0 %v674
  %992 = vmatpush.bf16.msra.mxu0 %v666
  %993 = vmatpush.bf16.msra.mxu0 %v658
  %994 = vmatpush.bf16.msra.mxu0 %v650
  %995 = vmatpush.bf16.msra.mxu0 %v642
  %996 = vmatpush.bf16.msra.mxu0 %v634
  %997 = vmatmul.bf16.gmra.mxu0 %v177
  %v998 = vpop.f32.mrf.mxu0
  %v999 = vadd.f32 %v986, %v998
  %v1000 = vpop.f32.mrf.mxu0
  %1001 = vdwg.mxu0
  %1002 = vmatpush.bf16.msra.mxu0 %v627
  %1003 = vmatpush.bf16.msra.mxu0 %v619
  %1004 = vmatpush.bf16.msra.mxu0 %v611
  %1005 = vmatpush.bf16.msra.mxu0 %v603
  %1006 = vmatpush.bf16.msra.mxu0 %v595
  %1007 = vmatpush.bf16.msra.mxu0 %v587
  %1008 = vmatpush.bf16.msra.mxu0 %v579
  %1009 = vmatpush.bf16.msra.mxu0 %v571
  %1010 = vmatmul.bf16.gmra.mxu0 %v176
  %v1011 = vpop.f32.mrf.mxu0
  %v1012 = vadd.f32 %v164, %v1011
  %v1013 = vpop.f32.mrf.mxu0
  %1014 = vdwg.mxu0
  %1015 = vmatpush.bf16.msra.mxu0 %v691
  %1016 = vmatpush.bf16.msra.mxu0 %v683
  %1017 = vmatpush.bf16.msra.mxu0 %v675
  %1018 = vmatpush.bf16.msra.mxu0 %v667
  %1019 = vmatpush.bf16.msra.mxu0 %v659
  %1020 = vmatpush.bf16.msra.mxu0 %v651
  %1021 = vmatpush.bf16.msra.mxu0 %v643
  %1022 = vmatpush.bf16.msra.mxu0 %v635
  %1023 = vmatmul.bf16.gmra.mxu0 %v177
  %v1024 = vpop.f32.mrf.mxu0
  %v1025 = vadd.f32 %v1012, %v1024
  %v1026 = vpop.f32.mrf.mxu0
  %1027 = vdwg.mxu0
  %v1028 = vmax.f32 %v843, 0.0
  %v1029 = vmax.f32 %v869, 0.0
  %v1030 = vmax.f32 %v895, 0.0
  %v1031 = vmax.f32 %v921, 0.0
  %v1032 = vmax.f32 %v947, 0.0
  %v1033 = vmax.f32 %v973, 0.0
  %v1034 = vmax.f32 %v999, 0.0
  %v1035 = vmax.f32 %v1025, 0.0
  %v1036 = vpack.c.bf16 %v1028, %v1028
  %v1037 = vpack.c.bf16 %v1029, %v1029
  %v1038 = vpack.c.bf16 %v1030, %v1030
  %v1039 = vpack.c.bf16 %v1031, %v1031
  %v1040 = vpack.c.bf16 %v1032, %v1032
  %v1041 = vpack.c.bf16 %v1033, %v1033
  %v1042 = vpack.c.bf16 %v1034, %v1034
  %v1043 = vpack.c.bf16 %v1035, %v1035
  %v1044 = vld [vmem:[%s3] sm:$0xff]
  %v1045 = vld [vmem:[%s3 + $0x8] sm:$0xff]
  %v1046 = vld [vmem:[%s3 + $0x10] sm:$0xff]
  %v1047 = vld [vmem:[%s3 + $0x18] sm:$0xff]
  %v1048 = vld [vmem:[%s3 + $0x20] sm:$0xff]
  %v1049 = vld [vmem:[%s3 + $0x28] sm:$0xff]
  %v1050 = vld [vmem:[%s3 + $0x30] sm:$0xff]
  %v1051 = vld [vmem:[%s3 + $0x38] sm:$0xff]
  %v1052 = vld [vmem:[%s3 + $0x40] sm:$0xff]
  %v1053 = vld [vmem:[%s3 + $0x48] sm:$0xff]
  %v1054 = vld [vmem:[%s3 + $0x50] sm:$0xff]
  %v1055 = vld [vmem:[%s3 + $0x58] sm:$0xff]
  %v1056 = vld [vmem:[%s3 + $0x60] sm:$0xff]
  %v1057 = vld [vmem:[%s3 + $0x68] sm:$0xff]
  %v1058 = vld [vmem:[%s3 + $0x70] sm:$0xff]
  %v1059 = vld [vmem:[%s3 + $0x78] sm:$0xff]
  %v1060 = vld [vmem:[%s3 + $0x80] sm:$0xff]
  %v1061 = vld [vmem:[%s3 + $0x88] sm:$0xff]
  %v1062 = vld [vmem:[%s3 + $0x90] sm:$0xff]
  %v1063 = vld [vmem:[%s3 + $0x98] sm:$0xff]
  %v1064 = vld [vmem:[%s3 + $0xa0] sm:$0xff]
  %v1065 = vld [vmem:[%s3 + $0xa8] sm:$0xff]
  %v1066 = vld [vmem:[%s3 + $0xb0] sm:$0xff]
  %v1067 = vld [vmem:[%s3 + $0xb8] sm:$0xff]
  %v1068 = vld [vmem:[%s3 + $0xc0] sm:$0xff]
  %v1069 = vld [vmem:[%s3 + $0xc8] sm:$0xff]
  %v1070 = vld [vmem:[%s3 + $0xd0] sm:$0xff]
  %v1071 = vld [vmem:[%s3 + $0xd8] sm:$0xff]
  %v1072 = vld [vmem:[%s3 + $0xe0] sm:$0xff]
  %v1073 = vld [vmem:[%s3 + $0xe8] sm:$0xff]
  %v1074 = vld [vmem:[%s3 + $0xf0] sm:$0xff]
  %v1075 = vld [vmem:[%s3 + $0xf8] sm:$0xff]
  %v1076 = vld [vmem:[%s3 + $0x100] sm:$0xff]
  %v1077 = vld [vmem:[%s3 + $0x108] sm:$0xff]
  %v1078 = vld [vmem:[%s3 + $0x110] sm:$0xff]
  %v1079 = vld [vmem:[%s3 + $0x118] sm:$0xff]
  %v1080 = vld [vmem:[%s3 + $0x120] sm:$0xff]
  %v1081 = vld [vmem:[%s3 + $0x128] sm:$0xff]
  %v1082 = vld [vmem:[%s3 + $0x130] sm:$0xff]
  %v1083 = vld [vmem:[%s3 + $0x138] sm:$0xff]
  %v1084 = vld [vmem:[%s3 + $0x140] sm:$0xff]
  %v1085 = vld [vmem:[%s3 + $0x148] sm:$0xff]
  %v1086 = vld [vmem:[%s3 + $0x150] sm:$0xff]
  %v1087 = vld [vmem:[%s3 + $0x158] sm:$0xff]
  %v1088 = vld [vmem:[%s3 + $0x160] sm:$0xff]
  %v1089 = vld [vmem:[%s3 + $0x168] sm:$0xff]
  %v1090 = vld [vmem:[%s3 + $0x170] sm:$0xff]
  %v1091 = vld [vmem:[%s3 + $0x178] sm:$0xff]
  %v1092 = vld [vmem:[%s3 + $0x180] sm:$0xff]
  %v1093 = vld [vmem:[%s3 + $0x188] sm:$0xff]
  %v1094 = vld [vmem:[%s3 + $0x190] sm:$0xff]
  %v1095 = vld [vmem:[%s3 + $0x198] sm:$0xff]
  %v1096 = vld [vmem:[%s3 + $0x1a0] sm:$0xff]
  %v1097 = vld [vmem:[%s3 + $0x1a8] sm:$0xff]
  %v1098 = vld [vmem:[%s3 + $0x1b0] sm:$0xff]
  %v1099 = vld [vmem:[%s3 + $0x1b8] sm:$0xff]
  %v1100 = vld [vmem:[%s3 + $0x1c0] sm:$0xff]
  %v1101 = vld [vmem:[%s3 + $0x1c8] sm:$0xff]
  %v1102 = vld [vmem:[%s3 + $0x1d0] sm:$0xff]
  %v1103 = vld [vmem:[%s3 + $0x1d8] sm:$0xff]
  %v1104 = vld [vmem:[%s3 + $0x1e0] sm:$0xff]
  %v1105 = vld [vmem:[%s3 + $0x1e8] sm:$0xff]
  %v1106 = vld [vmem:[%s3 + $0x1f0] sm:$0xff]
  %v1107 = vld [vmem:[%s3 + $0x1f8] sm:$0xff]
  %v1108 = vld [vmem:[%s3 + $0x200] sm:$0xff]
  %v1109 = vld [vmem:[%s3 + $0x208] sm:$0xff]
  %v1110 = vld [vmem:[%s3 + $0x210] sm:$0xff]
  %v1111 = vld [vmem:[%s3 + $0x218] sm:$0xff]
  %v1112 = vld [vmem:[%s3 + $0x220] sm:$0xff]
  %v1113 = vld [vmem:[%s3 + $0x228] sm:$0xff]
  %v1114 = vld [vmem:[%s3 + $0x230] sm:$0xff]
  %v1115 = vld [vmem:[%s3 + $0x238] sm:$0xff]
  %v1116 = vld [vmem:[%s3 + $0x240] sm:$0xff]
  %v1117 = vld [vmem:[%s3 + $0x248] sm:$0xff]
  %v1118 = vld [vmem:[%s3 + $0x250] sm:$0xff]
  %v1119 = vld [vmem:[%s3 + $0x258] sm:$0xff]
  %v1120 = vld [vmem:[%s3 + $0x260] sm:$0xff]
  %v1121 = vld [vmem:[%s3 + $0x268] sm:$0xff]
  %v1122 = vld [vmem:[%s3 + $0x270] sm:$0xff]
  %v1123 = vld [vmem:[%s3 + $0x278] sm:$0xff]
  %v1124 = vld [vmem:[%s3 + $0x280] sm:$0xff]
  %v1125 = vld [vmem:[%s3 + $0x288] sm:$0xff]
  %v1126 = vld [vmem:[%s3 + $0x290] sm:$0xff]
  %v1127 = vld [vmem:[%s3 + $0x298] sm:$0xff]
  %v1128 = vld [vmem:[%s3 + $0x2a0] sm:$0xff]
  %v1129 = vld [vmem:[%s3 + $0x2a8] sm:$0xff]
  %v1130 = vld [vmem:[%s3 + $0x2b0] sm:$0xff]
  %v1131 = vld [vmem:[%s3 + $0x2b8] sm:$0xff]
  %v1132 = vld [vmem:[%s3 + $0x2c0] sm:$0xff]
  %v1133 = vld [vmem:[%s3 + $0x2c8] sm:$0xff]
  %v1134 = vld [vmem:[%s3 + $0x2d0] sm:$0xff]
  %v1135 = vld [vmem:[%s3 + $0x2d8] sm:$0xff]
  %v1136 = vld [vmem:[%s3 + $0x2e0] sm:$0xff]
  %v1137 = vld [vmem:[%s3 + $0x2e8] sm:$0xff]
  %v1138 = vld [vmem:[%s3 + $0x2f0] sm:$0xff]
  %v1139 = vld [vmem:[%s3 + $0x2f8] sm:$0xff]
  %v1140 = vld [vmem:[%s3 + $0x300] sm:$0xff]
  %v1141 = vld [vmem:[%s3 + $0x308] sm:$0xff]
  %v1142 = vld [vmem:[%s3 + $0x310] sm:$0xff]
  %v1143 = vld [vmem:[%s3 + $0x318] sm:$0xff]
  %v1144 = vld [vmem:[%s3 + $0x320] sm:$0xff]
  %v1145 = vld [vmem:[%s3 + $0x328] sm:$0xff]
  %v1146 = vld [vmem:[%s3 + $0x330] sm:$0xff]
  %v1147 = vld [vmem:[%s3 + $0x338] sm:$0xff]
  %v1148 = vld [vmem:[%s3 + $0x340] sm:$0xff]
  %v1149 = vld [vmem:[%s3 + $0x348] sm:$0xff]
  %v1150 = vld [vmem:[%s3 + $0x350] sm:$0xff]
  %v1151 = vld [vmem:[%s3 + $0x358] sm:$0xff]
  %v1152 = vld [vmem:[%s3 + $0x360] sm:$0xff]
  %v1153 = vld [vmem:[%s3 + $0x368] sm:$0xff]
  %v1154 = vld [vmem:[%s3 + $0x370] sm:$0xff]
  %v1155 = vld [vmem:[%s3 + $0x378] sm:$0xff]
  %v1156 = vld [vmem:[%s3 + $0x380] sm:$0xff]
  %v1157 = vld [vmem:[%s3 + $0x388] sm:$0xff]
  %v1158 = vld [vmem:[%s3 + $0x390] sm:$0xff]
  %v1159 = vld [vmem:[%s3 + $0x398] sm:$0xff]
  %v1160 = vld [vmem:[%s3 + $0x3a0] sm:$0xff]
  %v1161 = vld [vmem:[%s3 + $0x3a8] sm:$0xff]
  %v1162 = vld [vmem:[%s3 + $0x3b0] sm:$0xff]
  %v1163 = vld [vmem:[%s3 + $0x3b8] sm:$0xff]
  %v1164 = vld [vmem:[%s3 + $0x3c0] sm:$0xff]
  %v1165 = vld [vmem:[%s3 + $0x3c8] sm:$0xff]
  %v1166 = vld [vmem:[%s3 + $0x3d0] sm:$0xff]
  %v1167 = vld [vmem:[%s3 + $0x3d8] sm:$0xff]
  %v1168 = vld [vmem:[%s3 + $0x3e0] sm:$0xff]
  %v1169 = vld [vmem:[%s3 + $0x3e8] sm:$0xff]
  %v1170 = vld [vmem:[%s3 + $0x3f0] sm:$0xff]
  %v1171 = vld [vmem:[%s3 + $0x3f8] sm:$0xff]
  %v1172 = vld [vmem:[%s3 + $0x400] sm:$0xff]
  %v1173 = vld [vmem:[%s3 + $0x408] sm:$0xff]
  %v1174 = vld [vmem:[%s3 + $0x410] sm:$0xff]
  %v1175 = vld [vmem:[%s3 + $0x418] sm:$0xff]
  %v1176 = vld [vmem:[%s3 + $0x420] sm:$0xff]
  %v1177 = vld [vmem:[%s3 + $0x428] sm:$0xff]
  %v1178 = vld [vmem:[%s3 + $0x430] sm:$0xff]
  %v1179 = vld [vmem:[%s3 + $0x438] sm:$0xff]
  %v1180 = vld [vmem:[%s3 + $0x440] sm:$0xff]
  %v1181 = vld [vmem:[%s3 + $0x448] sm:$0xff]
  %v1182 = vld [vmem:[%s3 + $0x450] sm:$0xff]
  %v1183 = vld [vmem:[%s3 + $0x458] sm:$0xff]
  %v1184 = vld [vmem:[%s3 + $0x460] sm:$0xff]
  %v1185 = vld [vmem:[%s3 + $0x468] sm:$0xff]
  %v1186 = vld [vmem:[%s3 + $0x470] sm:$0xff]
  %v1187 = vld [vmem:[%s3 + $0x478] sm:$0xff]
  %v1188 = vld [vmem:[%s3 + $0x480] sm:$0xff]
  %v1189 = vld [vmem:[%s3 + $0x488] sm:$0xff]
  %v1190 = vld [vmem:[%s3 + $0x490] sm:$0xff]
  %v1191 = vld [vmem:[%s3 + $0x498] sm:$0xff]
  %v1192 = vld [vmem:[%s3 + $0x4a0] sm:$0xff]
  %v1193 = vld [vmem:[%s3 + $0x4a8] sm:$0xff]
  %v1194 = vld [vmem:[%s3 + $0x4b0] sm:$0xff]
  %v1195 = vld [vmem:[%s3 + $0x4b8] sm:$0xff]
  %v1196 = vld [vmem:[%s3 + $0x4c0] sm:$0xff]
  %v1197 = vld [vmem:[%s3 + $0x4c8] sm:$0xff]
  %v1198 = vld [vmem:[%s3 + $0x4d0] sm:$0xff]
  %v1199 = vld [vmem:[%s3 + $0x4d8] sm:$0xff]
  %v1200 = vld [vmem:[%s3 + $0x4e0] sm:$0xff]
  %v1201 = vld [vmem:[%s3 + $0x4e8] sm:$0xff]
  %v1202 = vld [vmem:[%s3 + $0x4f0] sm:$0xff]
  %v1203 = vld [vmem:[%s3 + $0x4f8] sm:$0xff]
  %v1204 = vld [vmem:[%s3 + $0x500] sm:$0xff]
  %v1205 = vld [vmem:[%s3 + $0x508] sm:$0xff]
  %v1206 = vld [vmem:[%s3 + $0x510] sm:$0xff]
  %v1207 = vld [vmem:[%s3 + $0x518] sm:$0xff]
  %v1208 = vld [vmem:[%s3 + $0x520] sm:$0xff]
  %v1209 = vld [vmem:[%s3 + $0x528] sm:$0xff]
  %v1210 = vld [vmem:[%s3 + $0x530] sm:$0xff]
  %v1211 = vld [vmem:[%s3 + $0x538] sm:$0xff]
  %v1212 = vld [vmem:[%s3 + $0x540] sm:$0xff]
  %v1213 = vld [vmem:[%s3 + $0x548] sm:$0xff]
  %v1214 = vld [vmem:[%s3 + $0x550] sm:$0xff]
  %v1215 = vld [vmem:[%s3 + $0x558] sm:$0xff]
  %v1216 = vld [vmem:[%s3 + $0x560] sm:$0xff]
  %v1217 = vld [vmem:[%s3 + $0x568] sm:$0xff]
  %v1218 = vld [vmem:[%s3 + $0x570] sm:$0xff]
  %v1219 = vld [vmem:[%s3 + $0x578] sm:$0xff]
  %v1220 = vld [vmem:[%s3 + $0x580] sm:$0xff]
  %v1221 = vld [vmem:[%s3 + $0x588] sm:$0xff]
  %v1222 = vld [vmem:[%s3 + $0x590] sm:$0xff]
  %v1223 = vld [vmem:[%s3 + $0x598] sm:$0xff]
  %v1224 = vld [vmem:[%s3 + $0x5a0] sm:$0xff]
  %v1225 = vld [vmem:[%s3 + $0x5a8] sm:$0xff]
  %v1226 = vld [vmem:[%s3 + $0x5b0] sm:$0xff]
  %v1227 = vld [vmem:[%s3 + $0x5b8] sm:$0xff]
  %v1228 = vld [vmem:[%s3 + $0x5c0] sm:$0xff]
  %v1229 = vld [vmem:[%s3 + $0x5c8] sm:$0xff]
  %v1230 = vld [vmem:[%s3 + $0x5d0] sm:$0xff]
  %v1231 = vld [vmem:[%s3 + $0x5d8] sm:$0xff]
  %v1232 = vld [vmem:[%s3 + $0x5e0] sm:$0xff]
  %v1233 = vld [vmem:[%s3 + $0x5e8] sm:$0xff]
  %v1234 = vld [vmem:[%s3 + $0x5f0] sm:$0xff]
  %v1235 = vld [vmem:[%s3 + $0x5f8] sm:$0xff]
  %v1236 = vld [vmem:[%s3 + $0x600] sm:$0xff]
  %v1237 = vld [vmem:[%s3 + $0x608] sm:$0xff]
  %v1238 = vld [vmem:[%s3 + $0x610] sm:$0xff]
  %v1239 = vld [vmem:[%s3 + $0x618] sm:$0xff]
  %v1240 = vld [vmem:[%s3 + $0x620] sm:$0xff]
  %v1241 = vld [vmem:[%s3 + $0x628] sm:$0xff]
  %v1242 = vld [vmem:[%s3 + $0x630] sm:$0xff]
  %v1243 = vld [vmem:[%s3 + $0x638] sm:$0xff]
  %v1244 = vld [vmem:[%s3 + $0x640] sm:$0xff]
  %v1245 = vld [vmem:[%s3 + $0x648] sm:$0xff]
  %v1246 = vld [vmem:[%s3 + $0x650] sm:$0xff]
  %v1247 = vld [vmem:[%s3 + $0x658] sm:$0xff]
  %v1248 = vld [vmem:[%s3 + $0x660] sm:$0xff]
  %v1249 = vld [vmem:[%s3 + $0x668] sm:$0xff]
  %v1250 = vld [vmem:[%s3 + $0x670] sm:$0xff]
  %v1251 = vld [vmem:[%s3 + $0x678] sm:$0xff]
  %v1252 = vld [vmem:[%s3 + $0x680] sm:$0xff]
  %v1253 = vld [vmem:[%s3 + $0x688] sm:$0xff]
  %v1254 = vld [vmem:[%s3 + $0x690] sm:$0xff]
  %v1255 = vld [vmem:[%s3 + $0x698] sm:$0xff]
  %v1256 = vld [vmem:[%s3 + $0x6a0] sm:$0xff]
  %v1257 = vld [vmem:[%s3 + $0x6a8] sm:$0xff]
  %v1258 = vld [vmem:[%s3 + $0x6b0] sm:$0xff]
  %v1259 = vld [vmem:[%s3 + $0x6b8] sm:$0xff]
  %v1260 = vld [vmem:[%s3 + $0x6c0] sm:$0xff]
  %v1261 = vld [vmem:[%s3 + $0x6c8] sm:$0xff]
  %v1262 = vld [vmem:[%s3 + $0x6d0] sm:$0xff]
  %v1263 = vld [vmem:[%s3 + $0x6d8] sm:$0xff]
  %v1264 = vld [vmem:[%s3 + $0x6e0] sm:$0xff]
  %v1265 = vld [vmem:[%s3 + $0x6e8] sm:$0xff]
  %v1266 = vld [vmem:[%s3 + $0x6f0] sm:$0xff]
  %v1267 = vld [vmem:[%s3 + $0x6f8] sm:$0xff]
  %v1268 = vld [vmem:[%s3 + $0x700] sm:$0xff]
  %v1269 = vld [vmem:[%s3 + $0x708] sm:$0xff]
  %v1270 = vld [vmem:[%s3 + $0x710] sm:$0xff]
  %v1271 = vld [vmem:[%s3 + $0x718] sm:$0xff]
  %v1272 = vld [vmem:[%s3 + $0x720] sm:$0xff]
  %v1273 = vld [vmem:[%s3 + $0x728] sm:$0xff]
  %v1274 = vld [vmem:[%s3 + $0x730] sm:$0xff]
  %v1275 = vld [vmem:[%s3 + $0x738] sm:$0xff]
  %v1276 = vld [vmem:[%s3 + $0x740] sm:$0xff]
  %v1277 = vld [vmem:[%s3 + $0x748] sm:$0xff]
  %v1278 = vld [vmem:[%s3 + $0x750] sm:$0xff]
  %v1279 = vld [vmem:[%s3 + $0x758] sm:$0xff]
  %v1280 = vld [vmem:[%s3 + $0x760] sm:$0xff]
  %v1281 = vld [vmem:[%s3 + $0x768] sm:$0xff]
  %v1282 = vld [vmem:[%s3 + $0x770] sm:$0xff]
  %v1283 = vld [vmem:[%s3 + $0x778] sm:$0xff]
  %v1284 = vld [vmem:[%s3 + $0x780] sm:$0xff]
  %v1285 = vld [vmem:[%s3 + $0x788] sm:$0xff]
  %v1286 = vld [vmem:[%s3 + $0x790] sm:$0xff]
  %v1287 = vld [vmem:[%s3 + $0x798] sm:$0xff]
  %v1288 = vld [vmem:[%s3 + $0x7a0] sm:$0xff]
  %v1289 = vld [vmem:[%s3 + $0x7a8] sm:$0xff]
  %v1290 = vld [vmem:[%s3 + $0x7b0] sm:$0xff]
  %v1291 = vld [vmem:[%s3 + $0x7b8] sm:$0xff]
  %v1292 = vld [vmem:[%s3 + $0x7c0] sm:$0xff]
  %v1293 = vld [vmem:[%s3 + $0x7c8] sm:$0xff]
  %v1294 = vld [vmem:[%s3 + $0x7d0] sm:$0xff]
  %v1295 = vld [vmem:[%s3 + $0x7d8] sm:$0xff]
  %v1296 = vld [vmem:[%s3 + $0x7e0] sm:$0xff]
  %v1297 = vld [vmem:[%s3 + $0x7e8] sm:$0xff]
  %v1298 = vld [vmem:[%s3 + $0x7f0] sm:$0xff]
  %v1299 = vld [vmem:[%s3 + $0x7f8] sm:$0xff]
  %v1300 = vld [vmem:[%s3 + $0x800] sm:$0xff]
  %v1301 = vld [vmem:[%s3 + $0x808] sm:$0xff]
  %v1302 = vld [vmem:[%s3 + $0x810] sm:$0xff]
  %v1303 = vld [vmem:[%s3 + $0x818] sm:$0xff]
  %v1304 = vld [vmem:[%s3 + $0x820] sm:$0xff]
  %v1305 = vld [vmem:[%s3 + $0x828] sm:$0xff]
  %v1306 = vld [vmem:[%s3 + $0x830] sm:$0xff]
  %v1307 = vld [vmem:[%s3 + $0x838] sm:$0xff]
  %v1308 = vld [vmem:[%s3 + $0x840] sm:$0xff]
  %v1309 = vld [vmem:[%s3 + $0x848] sm:$0xff]
  %v1310 = vld [vmem:[%s3 + $0x850] sm:$0xff]
  %v1311 = vld [vmem:[%s3 + $0x858] sm:$0xff]
  %v1312 = vld [vmem:[%s3 + $0x860] sm:$0xff]
  %v1313 = vld [vmem:[%s3 + $0x868] sm:$0xff]
  %v1314 = vld [vmem:[%s3 + $0x870] sm:$0xff]
  %v1315 = vld [vmem:[%s3 + $0x878] sm:$0xff]
  %v1316 = vld [vmem:[%s3 + $0x880] sm:$0xff]
  %v1317 = vld [vmem:[%s3 + $0x888] sm:$0xff]
  %v1318 = vld [vmem:[%s3 + $0x890] sm:$0xff]
  %v1319 = vld [vmem:[%s3 + $0x898] sm:$0xff]
  %v1320 = vld [vmem:[%s3 + $0x8a0] sm:$0xff]
  %v1321 = vld [vmem:[%s3 + $0x8a8] sm:$0xff]
  %v1322 = vld [vmem:[%s3 + $0x8b0] sm:$0xff]
  %v1323 = vld [vmem:[%s3 + $0x8b8] sm:$0xff]
  %v1324 = vld [vmem:[%s3 + $0x8c0] sm:$0xff]
  %v1325 = vld [vmem:[%s3 + $0x8c8] sm:$0xff]
  %v1326 = vld [vmem:[%s3 + $0x8d0] sm:$0xff]
  %v1327 = vld [vmem:[%s3 + $0x8d8] sm:$0xff]
  %v1328 = vld [vmem:[%s3 + $0x8e0] sm:$0xff]
  %v1329 = vld [vmem:[%s3 + $0x8e8] sm:$0xff]
  %v1330 = vld [vmem:[%s3 + $0x8f0] sm:$0xff]
  %v1331 = vld [vmem:[%s3 + $0x8f8] sm:$0xff]
  %v1332 = vld [vmem:[%s3 + $0x900] sm:$0xff]
  %v1333 = vld [vmem:[%s3 + $0x908] sm:$0xff]
  %v1334 = vld [vmem:[%s3 + $0x910] sm:$0xff]
  %v1335 = vld [vmem:[%s3 + $0x918] sm:$0xff]
  %v1336 = vld [vmem:[%s3 + $0x920] sm:$0xff]
  %v1337 = vld [vmem:[%s3 + $0x928] sm:$0xff]
  %v1338 = vld [vmem:[%s3 + $0x930] sm:$0xff]
  %v1339 = vld [vmem:[%s3 + $0x938] sm:$0xff]
  %v1340 = vld [vmem:[%s3 + $0x940] sm:$0xff]
  %v1341 = vld [vmem:[%s3 + $0x948] sm:$0xff]
  %v1342 = vld [vmem:[%s3 + $0x950] sm:$0xff]
  %v1343 = vld [vmem:[%s3 + $0x958] sm:$0xff]
  %v1344 = vld [vmem:[%s3 + $0x960] sm:$0xff]
  %v1345 = vld [vmem:[%s3 + $0x968] sm:$0xff]
  %v1346 = vld [vmem:[%s3 + $0x970] sm:$0xff]
  %v1347 = vld [vmem:[%s3 + $0x978] sm:$0xff]
  %v1348 = vld [vmem:[%s3 + $0x980] sm:$0xff]
  %v1349 = vld [vmem:[%s3 + $0x988] sm:$0xff]
  %v1350 = vld [vmem:[%s3 + $0x990] sm:$0xff]
  %v1351 = vld [vmem:[%s3 + $0x998] sm:$0xff]
  %v1352 = vld [vmem:[%s3 + $0x9a0] sm:$0xff]
  %v1353 = vld [vmem:[%s3 + $0x9a8] sm:$0xff]
  %v1354 = vld [vmem:[%s3 + $0x9b0] sm:$0xff]
  %v1355 = vld [vmem:[%s3 + $0x9b8] sm:$0xff]
  %v1356 = vld [vmem:[%s3 + $0x9c0] sm:$0xff]
  %v1357 = vld [vmem:[%s3 + $0x9c8] sm:$0xff]
  %v1358 = vld [vmem:[%s3 + $0x9d0] sm:$0xff]
  %v1359 = vld [vmem:[%s3 + $0x9d8] sm:$0xff]
  %v1360 = vld [vmem:[%s3 + $0x9e0] sm:$0xff]
  %v1361 = vld [vmem:[%s3 + $0x9e8] sm:$0xff]
  %v1362 = vld [vmem:[%s3 + $0x9f0] sm:$0xff]
  %v1363 = vld [vmem:[%s3 + $0x9f8] sm:$0xff]
  %v1364 = vld [vmem:[%s3 + $0xa00] sm:$0xff]
  %v1365 = vld [vmem:[%s3 + $0xa08] sm:$0xff]
  %v1366 = vld [vmem:[%s3 + $0xa10] sm:$0xff]
  %v1367 = vld [vmem:[%s3 + $0xa18] sm:$0xff]
  %v1368 = vld [vmem:[%s3 + $0xa20] sm:$0xff]
  %v1369 = vld [vmem:[%s3 + $0xa28] sm:$0xff]
  %v1370 = vld [vmem:[%s3 + $0xa30] sm:$0xff]
  %v1371 = vld [vmem:[%s3 + $0xa38] sm:$0xff]
  %v1372 = vld [vmem:[%s3 + $0xa40] sm:$0xff]
  %v1373 = vld [vmem:[%s3 + $0xa48] sm:$0xff]
  %v1374 = vld [vmem:[%s3 + $0xa50] sm:$0xff]
  %v1375 = vld [vmem:[%s3 + $0xa58] sm:$0xff]
  %v1376 = vld [vmem:[%s3 + $0xa60] sm:$0xff]
  %v1377 = vld [vmem:[%s3 + $0xa68] sm:$0xff]
  %v1378 = vld [vmem:[%s3 + $0xa70] sm:$0xff]
  %v1379 = vld [vmem:[%s3 + $0xa78] sm:$0xff]
  %v1380 = vld [vmem:[%s3 + $0xa80] sm:$0xff]
  %v1381 = vld [vmem:[%s3 + $0xa88] sm:$0xff]
  %v1382 = vld [vmem:[%s3 + $0xa90] sm:$0xff]
  %v1383 = vld [vmem:[%s3 + $0xa98] sm:$0xff]
  %v1384 = vld [vmem:[%s3 + $0xaa0] sm:$0xff]
  %v1385 = vld [vmem:[%s3 + $0xaa8] sm:$0xff]
  %v1386 = vld [vmem:[%s3 + $0xab0] sm:$0xff]
  %v1387 = vld [vmem:[%s3 + $0xab8] sm:$0xff]
  %v1388 = vld [vmem:[%s3 + $0xac0] sm:$0xff]
  %v1389 = vld [vmem:[%s3 + $0xac8] sm:$0xff]
  %v1390 = vld [vmem:[%s3 + $0xad0] sm:$0xff]
  %v1391 = vld [vmem:[%s3 + $0xad8] sm:$0xff]
  %v1392 = vld [vmem:[%s3 + $0xae0] sm:$0xff]
  %v1393 = vld [vmem:[%s3 + $0xae8] sm:$0xff]
  %v1394 = vld [vmem:[%s3 + $0xaf0] sm:$0xff]
  %v1395 = vld [vmem:[%s3 + $0xaf8] sm:$0xff]
  %v1396 = vld [vmem:[%s3 + $0xb00] sm:$0xff]
  %v1397 = vld [vmem:[%s3 + $0xb08] sm:$0xff]
  %v1398 = vld [vmem:[%s3 + $0xb10] sm:$0xff]
  %v1399 = vld [vmem:[%s3 + $0xb18] sm:$0xff]
  %v1400 = vld [vmem:[%s3 + $0xb20] sm:$0xff]
  %v1401 = vld [vmem:[%s3 + $0xb28] sm:$0xff]
  %v1402 = vld [vmem:[%s3 + $0xb30] sm:$0xff]
  %v1403 = vld [vmem:[%s3 + $0xb38] sm:$0xff]
  %v1404 = vld [vmem:[%s3 + $0xb40] sm:$0xff]
  %v1405 = vld [vmem:[%s3 + $0xb48] sm:$0xff]
  %v1406 = vld [vmem:[%s3 + $0xb50] sm:$0xff]
  %v1407 = vld [vmem:[%s3 + $0xb58] sm:$0xff]
  %v1408 = vld [vmem:[%s3 + $0xb60] sm:$0xff]
  %v1409 = vld [vmem:[%s3 + $0xb68] sm:$0xff]
  %v1410 = vld [vmem:[%s3 + $0xb70] sm:$0xff]
  %v1411 = vld [vmem:[%s3 + $0xb78] sm:$0xff]
  %v1412 = vld [vmem:[%s3 + $0xb80] sm:$0xff]
  %v1413 = vld [vmem:[%s3 + $0xb88] sm:$0xff]
  %v1414 = vld [vmem:[%s3 + $0xb90] sm:$0xff]
  %v1415 = vld [vmem:[%s3 + $0xb98] sm:$0xff]
  %v1416 = vld [vmem:[%s3 + $0xba0] sm:$0xff]
  %v1417 = vld [vmem:[%s3 + $0xba8] sm:$0xff]
  %v1418 = vld [vmem:[%s3 + $0xbb0] sm:$0xff]
  %v1419 = vld [vmem:[%s3 + $0xbb8] sm:$0xff]
  %v1420 = vld [vmem:[%s3 + $0xbc0] sm:$0xff]
  %v1421 = vld [vmem:[%s3 + $0xbc8] sm:$0xff]
  %v1422 = vld [vmem:[%s3 + $0xbd0] sm:$0xff]
  %v1423 = vld [vmem:[%s3 + $0xbd8] sm:$0xff]
  %v1424 = vld [vmem:[%s3 + $0xbe0] sm:$0xff]
  %v1425 = vld [vmem:[%s3 + $0xbe8] sm:$0xff]
  %v1426 = vld [vmem:[%s3 + $0xbf0] sm:$0xff]
  %v1427 = vld [vmem:[%s3 + $0xbf8] sm:$0xff]
  %v1428 = vld [vmem:[%s3 + $0xc00] sm:$0xff]
  %v1429 = vld [vmem:[%s3 + $0xc08] sm:$0xff]
  %v1430 = vld [vmem:[%s3 + $0xc10] sm:$0xff]
  %v1431 = vld [vmem:[%s3 + $0xc18] sm:$0xff]
  %v1432 = vld [vmem:[%s3 + $0xc20] sm:$0xff]
  %v1433 = vld [vmem:[%s3 + $0xc28] sm:$0xff]
  %v1434 = vld [vmem:[%s3 + $0xc30] sm:$0xff]
  %v1435 = vld [vmem:[%s3 + $0xc38] sm:$0xff]
  %v1436 = vld [vmem:[%s3 + $0xc40] sm:$0xff]
  %v1437 = vld [vmem:[%s3 + $0xc48] sm:$0xff]
  %v1438 = vld [vmem:[%s3 + $0xc50] sm:$0xff]
  %v1439 = vld [vmem:[%s3 + $0xc58] sm:$0xff]
  %v1440 = vld [vmem:[%s3 + $0xc60] sm:$0xff]
  %v1441 = vld [vmem:[%s3 + $0xc68] sm:$0xff]
  %v1442 = vld [vmem:[%s3 + $0xc70] sm:$0xff]
  %v1443 = vld [vmem:[%s3 + $0xc78] sm:$0xff]
  %v1444 = vld [vmem:[%s3 + $0xc80] sm:$0xff]
  %v1445 = vld [vmem:[%s3 + $0xc88] sm:$0xff]
  %v1446 = vld [vmem:[%s3 + $0xc90] sm:$0xff]
  %v1447 = vld [vmem:[%s3 + $0xc98] sm:$0xff]
  %v1448 = vld [vmem:[%s3 + $0xca0] sm:$0xff]
  %v1449 = vld [vmem:[%s3 + $0xca8] sm:$0xff]
  %v1450 = vld [vmem:[%s3 + $0xcb0] sm:$0xff]
  %v1451 = vld [vmem:[%s3 + $0xcb8] sm:$0xff]
  %v1452 = vld [vmem:[%s3 + $0xcc0] sm:$0xff]
  %v1453 = vld [vmem:[%s3 + $0xcc8] sm:$0xff]
  %v1454 = vld [vmem:[%s3 + $0xcd0] sm:$0xff]
  %v1455 = vld [vmem:[%s3 + $0xcd8] sm:$0xff]
  %v1456 = vld [vmem:[%s3 + $0xce0] sm:$0xff]
  %v1457 = vld [vmem:[%s3 + $0xce8] sm:$0xff]
  %v1458 = vld [vmem:[%s3 + $0xcf0] sm:$0xff]
  %v1459 = vld [vmem:[%s3 + $0xcf8] sm:$0xff]
  %v1460 = vld [vmem:[%s3 + $0xd00] sm:$0xff]
  %v1461 = vld [vmem:[%s3 + $0xd08] sm:$0xff]
  %v1462 = vld [vmem:[%s3 + $0xd10] sm:$0xff]
  %v1463 = vld [vmem:[%s3 + $0xd18] sm:$0xff]
  %v1464 = vld [vmem:[%s3 + $0xd20] sm:$0xff]
  %v1465 = vld [vmem:[%s3 + $0xd28] sm:$0xff]
  %v1466 = vld [vmem:[%s3 + $0xd30] sm:$0xff]
  %v1467 = vld [vmem:[%s3 + $0xd38] sm:$0xff]
  %v1468 = vld [vmem:[%s3 + $0xd40] sm:$0xff]
  %v1469 = vld [vmem:[%s3 + $0xd48] sm:$0xff]
  %v1470 = vld [vmem:[%s3 + $0xd50] sm:$0xff]
  %v1471 = vld [vmem:[%s3 + $0xd58] sm:$0xff]
  %v1472 = vld [vmem:[%s3 + $0xd60] sm:$0xff]
  %v1473 = vld [vmem:[%s3 + $0xd68] sm:$0xff]
  %v1474 = vld [vmem:[%s3 + $0xd70] sm:$0xff]
  %v1475 = vld [vmem:[%s3 + $0xd78] sm:$0xff]
  %v1476 = vld [vmem:[%s3 + $0xd80] sm:$0xff]
  %v1477 = vld [vmem:[%s3 + $0xd88] sm:$0xff]
  %v1478 = vld [vmem:[%s3 + $0xd90] sm:$0xff]
  %v1479 = vld [vmem:[%s3 + $0xd98] sm:$0xff]
  %v1480 = vld [vmem:[%s3 + $0xda0] sm:$0xff]
  %v1481 = vld [vmem:[%s3 + $0xda8] sm:$0xff]
  %v1482 = vld [vmem:[%s3 + $0xdb0] sm:$0xff]
  %v1483 = vld [vmem:[%s3 + $0xdb8] sm:$0xff]
  %v1484 = vld [vmem:[%s3 + $0xdc0] sm:$0xff]
  %v1485 = vld [vmem:[%s3 + $0xdc8] sm:$0xff]
  %v1486 = vld [vmem:[%s3 + $0xdd0] sm:$0xff]
  %v1487 = vld [vmem:[%s3 + $0xdd8] sm:$0xff]
  %v1488 = vld [vmem:[%s3 + $0xde0] sm:$0xff]
  %v1489 = vld [vmem:[%s3 + $0xde8] sm:$0xff]
  %v1490 = vld [vmem:[%s3 + $0xdf0] sm:$0xff]
  %v1491 = vld [vmem:[%s3 + $0xdf8] sm:$0xff]
  %v1492 = vld [vmem:[%s3 + $0xe00] sm:$0xff]
  %v1493 = vld [vmem:[%s3 + $0xe08] sm:$0xff]
  %v1494 = vld [vmem:[%s3 + $0xe10] sm:$0xff]
  %v1495 = vld [vmem:[%s3 + $0xe18] sm:$0xff]
  %v1496 = vld [vmem:[%s3 + $0xe20] sm:$0xff]
  %v1497 = vld [vmem:[%s3 + $0xe28] sm:$0xff]
  %v1498 = vld [vmem:[%s3 + $0xe30] sm:$0xff]
  %v1499 = vld [vmem:[%s3 + $0xe38] sm:$0xff]
  %v1500 = vld [vmem:[%s3 + $0xe40] sm:$0xff]
  %v1501 = vld [vmem:[%s3 + $0xe48] sm:$0xff]
  %v1502 = vld [vmem:[%s3 + $0xe50] sm:$0xff]
  %v1503 = vld [vmem:[%s3 + $0xe58] sm:$0xff]
  %v1504 = vld [vmem:[%s3 + $0xe60] sm:$0xff]
  %v1505 = vld [vmem:[%s3 + $0xe68] sm:$0xff]
  %v1506 = vld [vmem:[%s3 + $0xe70] sm:$0xff]
  %v1507 = vld [vmem:[%s3 + $0xe78] sm:$0xff]
  %v1508 = vld [vmem:[%s3 + $0xe80] sm:$0xff]
  %v1509 = vld [vmem:[%s3 + $0xe88] sm:$0xff]
  %v1510 = vld [vmem:[%s3 + $0xe90] sm:$0xff]
  %v1511 = vld [vmem:[%s3 + $0xe98] sm:$0xff]
  %v1512 = vld [vmem:[%s3 + $0xea0] sm:$0xff]
  %v1513 = vld [vmem:[%s3 + $0xea8] sm:$0xff]
  %v1514 = vld [vmem:[%s3 + $0xeb0] sm:$0xff]
  %v1515 = vld [vmem:[%s3 + $0xeb8] sm:$0xff]
  %v1516 = vld [vmem:[%s3 + $0xec0] sm:$0xff]
  %v1517 = vld [vmem:[%s3 + $0xec8] sm:$0xff]
  %v1518 = vld [vmem:[%s3 + $0xed0] sm:$0xff]
  %v1519 = vld [vmem:[%s3 + $0xed8] sm:$0xff]
  %v1520 = vld [vmem:[%s3 + $0xee0] sm:$0xff]
  %v1521 = vld [vmem:[%s3 + $0xee8] sm:$0xff]
  %v1522 = vld [vmem:[%s3 + $0xef0] sm:$0xff]
  %v1523 = vld [vmem:[%s3 + $0xef8] sm:$0xff]
  %v1524 = vld [vmem:[%s3 + $0xf00] sm:$0xff]
  %v1525 = vld [vmem:[%s3 + $0xf08] sm:$0xff]
  %v1526 = vld [vmem:[%s3 + $0xf10] sm:$0xff]
  %v1527 = vld [vmem:[%s3 + $0xf18] sm:$0xff]
  %v1528 = vld [vmem:[%s3 + $0xf20] sm:$0xff]
  %v1529 = vld [vmem:[%s3 + $0xf28] sm:$0xff]
  %v1530 = vld [vmem:[%s3 + $0xf30] sm:$0xff]
  %v1531 = vld [vmem:[%s3 + $0xf38] sm:$0xff]
  %v1532 = vld [vmem:[%s3 + $0xf40] sm:$0xff]
  %v1533 = vld [vmem:[%s3 + $0xf48] sm:$0xff]
  %v1534 = vld [vmem:[%s3 + $0xf50] sm:$0xff]
  %v1535 = vld [vmem:[%s3 + $0xf58] sm:$0xff]
  %v1536 = vld [vmem:[%s3 + $0xf60] sm:$0xff]
  %v1537 = vld [vmem:[%s3 + $0xf68] sm:$0xff]
  %v1538 = vld [vmem:[%s3 + $0xf70] sm:$0xff]
  %v1539 = vld [vmem:[%s3 + $0xf78] sm:$0xff]
  %v1540 = vld [vmem:[%s3 + $0xf80] sm:$0xff]
  %v1541 = vld [vmem:[%s3 + $0xf88] sm:$0xff]
  %v1542 = vld [vmem:[%s3 + $0xf90] sm:$0xff]
  %v1543 = vld [vmem:[%s3 + $0xf98] sm:$0xff]
  %v1544 = vld [vmem:[%s3 + $0xfa0] sm:$0xff]
  %v1545 = vld [vmem:[%s3 + $0xfa8] sm:$0xff]
  %v1546 = vld [vmem:[%s3 + $0xfb0] sm:$0xff]
  %v1547 = vld [vmem:[%s3 + $0xfb8] sm:$0xff]
  %v1548 = vld [vmem:[%s3 + $0xfc0] sm:$0xff]
  %v1549 = vld [vmem:[%s3 + $0xfc8] sm:$0xff]
  %v1550 = vld [vmem:[%s3 + $0xfd0] sm:$0xff]
  %v1551 = vld [vmem:[%s3 + $0xfd8] sm:$0xff]
  %v1552 = vld [vmem:[%s3 + $0xfe0] sm:$0xff]
  %v1553 = vld [vmem:[%s3 + $0xfe8] sm:$0xff]
  %v1554 = vld [vmem:[%s3 + $0xff0] sm:$0xff]
  %v1555 = vld [vmem:[%s3 + $0xff8] sm:$0xff]
  %v1556 = vld [vmem:[%s4] sm:$0xff]
  %v1558 = vperm.slane %v1556, 0
  %v1559 = vperm.slane %v1556, 1
  %v1560 = vperm.slane %v1556, 2
  %v1561 = vperm.slane %v1556, 3
  %v1562 = vperm.slane %v1556, 4
  %v1563 = vperm.slane %v1556, 5
  %v1564 = vperm.slane %v1556, 6
  %v1565 = vperm.slane %v1556, 7
  %v2086 = vunpack.c.l.b16 %v1044
  %v2087 = vunpack.c.h.b16 %v1044
  %v2088 = vunpack.c.l.b16 %v1045
  %v2089 = vunpack.c.h.b16 %v1045
  %v2090 = vunpack.c.l.b16 %v1046
  %v2091 = vunpack.c.h.b16 %v1046
  %v2092 = vunpack.c.l.b16 %v1047
  %v2093 = vunpack.c.h.b16 %v1047
  %v2094 = vunpack.c.l.b16 %v1048
  %v2095 = vunpack.c.h.b16 %v1048
  %v2096 = vunpack.c.l.b16 %v1049
  %v2097 = vunpack.c.h.b16 %v1049
  %v2098 = vunpack.c.l.b16 %v1050
  %v2099 = vunpack.c.h.b16 %v1050
  %v2100 = vunpack.c.l.b16 %v1051
  %v2101 = vunpack.c.h.b16 %v1051
  %v2102 = vunpack.c.l.b16 %v1052
  %v2103 = vunpack.c.h.b16 %v1052
  %v2104 = vunpack.c.l.b16 %v1053
  %v2105 = vunpack.c.h.b16 %v1053
  %v2106 = vunpack.c.l.b16 %v1054
  %v2107 = vunpack.c.h.b16 %v1054
  %v2108 = vunpack.c.l.b16 %v1055
  %v2109 = vunpack.c.h.b16 %v1055
  %v2110 = vunpack.c.l.b16 %v1056
  %v2111 = vunpack.c.h.b16 %v1056
  %v2112 = vunpack.c.l.b16 %v1057
  %v2113 = vunpack.c.h.b16 %v1057
  %v2114 = vunpack.c.l.b16 %v1058
  %v2115 = vunpack.c.h.b16 %v1058
  %v2116 = vunpack.c.l.b16 %v1059
  %v2117 = vunpack.c.h.b16 %v1059
  %v2118 = vunpack.c.l.b16 %v1060
  %v2119 = vunpack.c.h.b16 %v1060
  %v2120 = vunpack.c.l.b16 %v1061
  %v2121 = vunpack.c.h.b16 %v1061
  %v2122 = vunpack.c.l.b16 %v1062
  %v2123 = vunpack.c.h.b16 %v1062
  %v2124 = vunpack.c.l.b16 %v1063
  %v2125 = vunpack.c.h.b16 %v1063
  %v2126 = vunpack.c.l.b16 %v1064
  %v2127 = vunpack.c.h.b16 %v1064
  %v2128 = vunpack.c.l.b16 %v1065
  %v2129 = vunpack.c.h.b16 %v1065
  %v2130 = vunpack.c.l.b16 %v1066
  %v2131 = vunpack.c.h.b16 %v1066
  %v2132 = vunpack.c.l.b16 %v1067
  %v2133 = vunpack.c.h.b16 %v1067
  %v2134 = vunpack.c.l.b16 %v1068
  %v2135 = vunpack.c.h.b16 %v1068
  %v2136 = vunpack.c.l.b16 %v1069
  %v2137 = vunpack.c.h.b16 %v1069
  %v2138 = vunpack.c.l.b16 %v1070
  %v2139 = vunpack.c.h.b16 %v1070
  %v2140 = vunpack.c.l.b16 %v1071
  %v2141 = vunpack.c.h.b16 %v1071
  %v2142 = vunpack.c.l.b16 %v1072
  %v2143 = vunpack.c.h.b16 %v1072
  %v2144 = vunpack.c.l.b16 %v1073
  %v2145 = vunpack.c.h.b16 %v1073
  %v2146 = vunpack.c.l.b16 %v1074
  %v2147 = vunpack.c.h.b16 %v1074
  %v2148 = vunpack.c.l.b16 %v1075
  %v2149 = vunpack.c.h.b16 %v1075
  %v2150 = vunpack.c.l.b16 %v1076
  %v2151 = vunpack.c.h.b16 %v1076
  %v2152 = vunpack.c.l.b16 %v1077
  %v2153 = vunpack.c.h.b16 %v1077
  %v2154 = vunpack.c.l.b16 %v1078
  %v2155 = vunpack.c.h.b16 %v1078
  %v2156 = vunpack.c.l.b16 %v1079
  %v2157 = vunpack.c.h.b16 %v1079
  %v2158 = vunpack.c.l.b16 %v1080
  %v2159 = vunpack.c.h.b16 %v1080
  %v2160 = vunpack.c.l.b16 %v1081
  %v2161 = vunpack.c.h.b16 %v1081
  %v2162 = vunpack.c.l.b16 %v1082
  %v2163 = vunpack.c.h.b16 %v1082
  %v2164 = vunpack.c.l.b16 %v1083
  %v2165 = vunpack.c.h.b16 %v1083
  %v2166 = vunpack.c.l.b16 %v1084
  %v2167 = vunpack.c.h.b16 %v1084
  %v2168 = vunpack.c.l.b16 %v1085
  %v2169 = vunpack.c.h.b16 %v1085
  %v2170 = vunpack.c.l.b16 %v1086
  %v2171 = vunpack.c.h.b16 %v1086
  %v2172 = vunpack.c.l.b16 %v1087
  %v2173 = vunpack.c.h.b16 %v1087
  %v2174 = vunpack.c.l.b16 %v1088
  %v2175 = vunpack.c.h.b16 %v1088
  %v2176 = vunpack.c.l.b16 %v1089
  %v2177 = vunpack.c.h.b16 %v1089
  %v2178 = vunpack.c.l.b16 %v1090
  %v2179 = vunpack.c.h.b16 %v1090
  %v2180 = vunpack.c.l.b16 %v1091
  %v2181 = vunpack.c.h.b16 %v1091
  %v2182 = vunpack.c.l.b16 %v1092
  %v2183 = vunpack.c.h.b16 %v1092
  %v2184 = vunpack.c.l.b16 %v1093
  %v2185 = vunpack.c.h.b16 %v1093
  %v2186 = vunpack.c.l.b16 %v1094
  %v2187 = vunpack.c.h.b16 %v1094
  %v2188 = vunpack.c.l.b16 %v1095
  %v2189 = vunpack.c.h.b16 %v1095
  %v2190 = vunpack.c.l.b16 %v1096
  %v2191 = vunpack.c.h.b16 %v1096
  %v2192 = vunpack.c.l.b16 %v1097
  %v2193 = vunpack.c.h.b16 %v1097
  %v2194 = vunpack.c.l.b16 %v1098
  %v2195 = vunpack.c.h.b16 %v1098
  %v2196 = vunpack.c.l.b16 %v1099
  %v2197 = vunpack.c.h.b16 %v1099
  %v2198 = vunpack.c.l.b16 %v1100
  %v2199 = vunpack.c.h.b16 %v1100
  %v2200 = vunpack.c.l.b16 %v1101
  %v2201 = vunpack.c.h.b16 %v1101
  %v2202 = vunpack.c.l.b16 %v1102
  %v2203 = vunpack.c.h.b16 %v1102
  %v2204 = vunpack.c.l.b16 %v1103
  %v2205 = vunpack.c.h.b16 %v1103
  %v2206 = vunpack.c.l.b16 %v1104
  %v2207 = vunpack.c.h.b16 %v1104
  %v2208 = vunpack.c.l.b16 %v1105
  %v2209 = vunpack.c.h.b16 %v1105
  %v2210 = vunpack.c.l.b16 %v1106
  %v2211 = vunpack.c.h.b16 %v1106
  %v2212 = vunpack.c.l.b16 %v1107
  %v2213 = vunpack.c.h.b16 %v1107
  %v2214 = vunpack.c.l.b16 %v1108
  %v2215 = vunpack.c.h.b16 %v1108
  %v2216 = vunpack.c.l.b16 %v1109
  %v2217 = vunpack.c.h.b16 %v1109
  %v2218 = vunpack.c.l.b16 %v1110
  %v2219 = vunpack.c.h.b16 %v1110
  %v2220 = vunpack.c.l.b16 %v1111
  %v2221 = vunpack.c.h.b16 %v1111
  %v2222 = vunpack.c.l.b16 %v1112
  %v2223 = vunpack.c.h.b16 %v1112
  %v2224 = vunpack.c.l.b16 %v1113
  %v2225 = vunpack.c.h.b16 %v1113
  %v2226 = vunpack.c.l.b16 %v1114
  %v2227 = vunpack.c.h.b16 %v1114
  %v2228 = vunpack.c.l.b16 %v1115
  %v2229 = vunpack.c.h.b16 %v1115
  %v2230 = vunpack.c.l.b16 %v1116
  %v2231 = vunpack.c.h.b16 %v1116
  %v2232 = vunpack.c.l.b16 %v1117
  %v2233 = vunpack.c.h.b16 %v1117
  %v2234 = vunpack.c.l.b16 %v1118
  %v2235 = vunpack.c.h.b16 %v1118
  %v2236 = vunpack.c.l.b16 %v1119
  %v2237 = vunpack.c.h.b16 %v1119
  %v2238 = vunpack.c.l.b16 %v1120
  %v2239 = vunpack.c.h.b16 %v1120
  %v2240 = vunpack.c.l.b16 %v1121
  %v2241 = vunpack.c.h.b16 %v1121
  %v2242 = vunpack.c.l.b16 %v1122
  %v2243 = vunpack.c.h.b16 %v1122
  %v2244 = vunpack.c.l.b16 %v1123
  %v2245 = vunpack.c.h.b16 %v1123
  %v2246 = vunpack.c.l.b16 %v1124
  %v2247 = vunpack.c.h.b16 %v1124
  %v2248 = vunpack.c.l.b16 %v1125
  %v2249 = vunpack.c.h.b16 %v1125
  %v2250 = vunpack.c.l.b16 %v1126
  %v2251 = vunpack.c.h.b16 %v1126
  %v2252 = vunpack.c.l.b16 %v1127
  %v2253 = vunpack.c.h.b16 %v1127
  %v2254 = vunpack.c.l.b16 %v1128
  %v2255 = vunpack.c.h.b16 %v1128
  %v2256 = vunpack.c.l.b16 %v1129
  %v2257 = vunpack.c.h.b16 %v1129
  %v2258 = vunpack.c.l.b16 %v1130
  %v2259 = vunpack.c.h.b16 %v1130
  %v2260 = vunpack.c.l.b16 %v1131
  %v2261 = vunpack.c.h.b16 %v1131
  %v2262 = vunpack.c.l.b16 %v1132
  %v2263 = vunpack.c.h.b16 %v1132
  %v2264 = vunpack.c.l.b16 %v1133
  %v2265 = vunpack.c.h.b16 %v1133
  %v2266 = vunpack.c.l.b16 %v1134
  %v2267 = vunpack.c.h.b16 %v1134
  %v2268 = vunpack.c.l.b16 %v1135
  %v2269 = vunpack.c.h.b16 %v1135
  %v2270 = vunpack.c.l.b16 %v1136
  %v2271 = vunpack.c.h.b16 %v1136
  %v2272 = vunpack.c.l.b16 %v1137
  %v2273 = vunpack.c.h.b16 %v1137
  %v2274 = vunpack.c.l.b16 %v1138
  %v2275 = vunpack.c.h.b16 %v1138
  %v2276 = vunpack.c.l.b16 %v1139
  %v2277 = vunpack.c.h.b16 %v1139
  %v2278 = vunpack.c.l.b16 %v1140
  %v2279 = vunpack.c.h.b16 %v1140
  %v2280 = vunpack.c.l.b16 %v1141
  %v2281 = vunpack.c.h.b16 %v1141
  %v2282 = vunpack.c.l.b16 %v1142
  %v2283 = vunpack.c.h.b16 %v1142
  %v2284 = vunpack.c.l.b16 %v1143
  %v2285 = vunpack.c.h.b16 %v1143
  %v2286 = vunpack.c.l.b16 %v1144
  %v2287 = vunpack.c.h.b16 %v1144
  %v2288 = vunpack.c.l.b16 %v1145
  %v2289 = vunpack.c.h.b16 %v1145
  %v2290 = vunpack.c.l.b16 %v1146
  %v2291 = vunpack.c.h.b16 %v1146
  %v2292 = vunpack.c.l.b16 %v1147
  %v2293 = vunpack.c.h.b16 %v1147
  %v2294 = vunpack.c.l.b16 %v1148
  %v2295 = vunpack.c.h.b16 %v1148
  %v2296 = vunpack.c.l.b16 %v1149
  %v2297 = vunpack.c.h.b16 %v1149
  %v2298 = vunpack.c.l.b16 %v1150
  %v2299 = vunpack.c.h.b16 %v1150
  %v2300 = vunpack.c.l.b16 %v1151
  %v2301 = vunpack.c.h.b16 %v1151
  %v2302 = vunpack.c.l.b16 %v1152
  %v2303 = vunpack.c.h.b16 %v1152
  %v2304 = vunpack.c.l.b16 %v1153
  %v2305 = vunpack.c.h.b16 %v1153
  %v2306 = vunpack.c.l.b16 %v1154
  %v2307 = vunpack.c.h.b16 %v1154
  %v2308 = vunpack.c.l.b16 %v1155
  %v2309 = vunpack.c.h.b16 %v1155
  %v2310 = vunpack.c.l.b16 %v1156
  %v2311 = vunpack.c.h.b16 %v1156
  %v2312 = vunpack.c.l.b16 %v1157
  %v2313 = vunpack.c.h.b16 %v1157
  %v2314 = vunpack.c.l.b16 %v1158
  %v2315 = vunpack.c.h.b16 %v1158
  %v2316 = vunpack.c.l.b16 %v1159
  %v2317 = vunpack.c.h.b16 %v1159
  %v2318 = vunpack.c.l.b16 %v1160
  %v2319 = vunpack.c.h.b16 %v1160
  %v2320 = vunpack.c.l.b16 %v1161
  %v2321 = vunpack.c.h.b16 %v1161
  %v2322 = vunpack.c.l.b16 %v1162
  %v2323 = vunpack.c.h.b16 %v1162
  %v2324 = vunpack.c.l.b16 %v1163
  %v2325 = vunpack.c.h.b16 %v1163
  %v2326 = vunpack.c.l.b16 %v1164
  %v2327 = vunpack.c.h.b16 %v1164
  %v2328 = vunpack.c.l.b16 %v1165
  %v2329 = vunpack.c.h.b16 %v1165
  %v2330 = vunpack.c.l.b16 %v1166
  %v2331 = vunpack.c.h.b16 %v1166
  %v2332 = vunpack.c.l.b16 %v1167
  %v2333 = vunpack.c.h.b16 %v1167
  %v2334 = vunpack.c.l.b16 %v1168
  %v2335 = vunpack.c.h.b16 %v1168
  %v2336 = vunpack.c.l.b16 %v1169
  %v2337 = vunpack.c.h.b16 %v1169
  %v2338 = vunpack.c.l.b16 %v1170
  %v2339 = vunpack.c.h.b16 %v1170
  %v2340 = vunpack.c.l.b16 %v1171
  %v2341 = vunpack.c.h.b16 %v1171
  %v2342 = vunpack.c.l.b16 %v1172
  %v2343 = vunpack.c.h.b16 %v1172
  %v2344 = vunpack.c.l.b16 %v1173
  %v2345 = vunpack.c.h.b16 %v1173
  %v2346 = vunpack.c.l.b16 %v1174
  %v2347 = vunpack.c.h.b16 %v1174
  %v2348 = vunpack.c.l.b16 %v1175
  %v2349 = vunpack.c.h.b16 %v1175
  %v2350 = vunpack.c.l.b16 %v1176
  %v2351 = vunpack.c.h.b16 %v1176
  %v2352 = vunpack.c.l.b16 %v1177
  %v2353 = vunpack.c.h.b16 %v1177
  %v2354 = vunpack.c.l.b16 %v1178
  %v2355 = vunpack.c.h.b16 %v1178
  %v2356 = vunpack.c.l.b16 %v1179
  %v2357 = vunpack.c.h.b16 %v1179
  %v2358 = vunpack.c.l.b16 %v1180
  %v2359 = vunpack.c.h.b16 %v1180
  %v2360 = vunpack.c.l.b16 %v1181
  %v2361 = vunpack.c.h.b16 %v1181
  %v2362 = vunpack.c.l.b16 %v1182
  %v2363 = vunpack.c.h.b16 %v1182
  %v2364 = vunpack.c.l.b16 %v1183
  %v2365 = vunpack.c.h.b16 %v1183
  %v2366 = vunpack.c.l.b16 %v1184
  %v2367 = vunpack.c.h.b16 %v1184
  %v2368 = vunpack.c.l.b16 %v1185
  %v2369 = vunpack.c.h.b16 %v1185
  %v2370 = vunpack.c.l.b16 %v1186
  %v2371 = vunpack.c.h.b16 %v1186
  %v2372 = vunpack.c.l.b16 %v1187
  %v2373 = vunpack.c.h.b16 %v1187
  %v2374 = vunpack.c.l.b16 %v1188
  %v2375 = vunpack.c.h.b16 %v1188
  %v2376 = vunpack.c.l.b16 %v1189
  %v2377 = vunpack.c.h.b16 %v1189
  %v2378 = vunpack.c.l.b16 %v1190
  %v2379 = vunpack.c.h.b16 %v1190
  %v2380 = vunpack.c.l.b16 %v1191
  %v2381 = vunpack.c.h.b16 %v1191
  %v2382 = vunpack.c.l.b16 %v1192
  %v2383 = vunpack.c.h.b16 %v1192
  %v2384 = vunpack.c.l.b16 %v1193
  %v2385 = vunpack.c.h.b16 %v1193
  %v2386 = vunpack.c.l.b16 %v1194
  %v2387 = vunpack.c.h.b16 %v1194
  %v2388 = vunpack.c.l.b16 %v1195
  %v2389 = vunpack.c.h.b16 %v1195
  %v2390 = vunpack.c.l.b16 %v1196
  %v2391 = vunpack.c.h.b16 %v1196
  %v2392 = vunpack.c.l.b16 %v1197
  %v2393 = vunpack.c.h.b16 %v1197
  %v2394 = vunpack.c.l.b16 %v1198
  %v2395 = vunpack.c.h.b16 %v1198
  %v2396 = vunpack.c.l.b16 %v1199
  %v2397 = vunpack.c.h.b16 %v1199
  %v2398 = vunpack.c.l.b16 %v1200
  %v2399 = vunpack.c.h.b16 %v1200
  %v2400 = vunpack.c.l.b16 %v1201
  %v2401 = vunpack.c.h.b16 %v1201
  %v2402 = vunpack.c.l.b16 %v1202
  %v2403 = vunpack.c.h.b16 %v1202
  %v2404 = vunpack.c.l.b16 %v1203
  %v2405 = vunpack.c.h.b16 %v1203
  %v2406 = vunpack.c.l.b16 %v1204
  %v2407 = vunpack.c.h.b16 %v1204
  %v2408 = vunpack.c.l.b16 %v1205
  %v2409 = vunpack.c.h.b16 %v1205
  %v2410 = vunpack.c.l.b16 %v1206
  %v2411 = vunpack.c.h.b16 %v1206
  %v2412 = vunpack.c.l.b16 %v1207
  %v2413 = vunpack.c.h.b16 %v1207
  %v2414 = vunpack.c.l.b16 %v1208
  %v2415 = vunpack.c.h.b16 %v1208
  %v2416 = vunpack.c.l.b16 %v1209
  %v2417 = vunpack.c.h.b16 %v1209
  %v2418 = vunpack.c.l.b16 %v1210
  %v2419 = vunpack.c.h.b16 %v1210
  %v2420 = vunpack.c.l.b16 %v1211
  %v2421 = vunpack.c.h.b16 %v1211
  %v2422 = vunpack.c.l.b16 %v1212
  %v2423 = vunpack.c.h.b16 %v1212
  %v2424 = vunpack.c.l.b16 %v1213
  %v2425 = vunpack.c.h.b16 %v1213
  %v2426 = vunpack.c.l.b16 %v1214
  %v2427 = vunpack.c.h.b16 %v1214
  %v2428 = vunpack.c.l.b16 %v1215
  %v2429 = vunpack.c.h.b16 %v1215
  %v2430 = vunpack.c.l.b16 %v1216
  %v2431 = vunpack.c.h.b16 %v1216
  %v2432 = vunpack.c.l.b16 %v1217
  %v2433 = vunpack.c.h.b16 %v1217
  %v2434 = vunpack.c.l.b16 %v1218
  %v2435 = vunpack.c.h.b16 %v1218
  %v2436 = vunpack.c.l.b16 %v1219
  %v2437 = vunpack.c.h.b16 %v1219
  %v2438 = vunpack.c.l.b16 %v1220
  %v2439 = vunpack.c.h.b16 %v1220
  %v2440 = vunpack.c.l.b16 %v1221
  %v2441 = vunpack.c.h.b16 %v1221
  %v2442 = vunpack.c.l.b16 %v1222
  %v2443 = vunpack.c.h.b16 %v1222
  %v2444 = vunpack.c.l.b16 %v1223
  %v2445 = vunpack.c.h.b16 %v1223
  %v2446 = vunpack.c.l.b16 %v1224
  %v2447 = vunpack.c.h.b16 %v1224
  %v2448 = vunpack.c.l.b16 %v1225
  %v2449 = vunpack.c.h.b16 %v1225
  %v2450 = vunpack.c.l.b16 %v1226
  %v2451 = vunpack.c.h.b16 %v1226
  %v2452 = vunpack.c.l.b16 %v1227
  %v2453 = vunpack.c.h.b16 %v1227
  %v2454 = vunpack.c.l.b16 %v1228
  %v2455 = vunpack.c.h.b16 %v1228
  %v2456 = vunpack.c.l.b16 %v1229
  %v2457 = vunpack.c.h.b16 %v1229
  %v2458 = vunpack.c.l.b16 %v1230
  %v2459 = vunpack.c.h.b16 %v1230
  %v2460 = vunpack.c.l.b16 %v1231
  %v2461 = vunpack.c.h.b16 %v1231
  %v2462 = vunpack.c.l.b16 %v1232
  %v2463 = vunpack.c.h.b16 %v1232
  %v2464 = vunpack.c.l.b16 %v1233
  %v2465 = vunpack.c.h.b16 %v1233
  %v2466 = vunpack.c.l.b16 %v1234
  %v2467 = vunpack.c.h.b16 %v1234
  %v2468 = vunpack.c.l.b16 %v1235
  %v2469 = vunpack.c.h.b16 %v1235
  %v2470 = vunpack.c.l.b16 %v1236
  %v2471 = vunpack.c.h.b16 %v1236
  %v2472 = vunpack.c.l.b16 %v1237
  %v2473 = vunpack.c.h.b16 %v1237
  %v2474 = vunpack.c.l.b16 %v1238
  %v2475 = vunpack.c.h.b16 %v1238
  %v2476 = vunpack.c.l.b16 %v1239
  %v2477 = vunpack.c.h.b16 %v1239
  %v2478 = vunpack.c.l.b16 %v1240
  %v2479 = vunpack.c.h.b16 %v1240
  %v2480 = vunpack.c.l.b16 %v1241
  %v2481 = vunpack.c.h.b16 %v1241
  %v2482 = vunpack.c.l.b16 %v1242
  %v2483 = vunpack.c.h.b16 %v1242
  %v2484 = vunpack.c.l.b16 %v1243
  %v2485 = vunpack.c.h.b16 %v1243
  %v2486 = vunpack.c.l.b16 %v1244
  %v2487 = vunpack.c.h.b16 %v1244
  %v2488 = vunpack.c.l.b16 %v1245
  %v2489 = vunpack.c.h.b16 %v1245
  %v2490 = vunpack.c.l.b16 %v1246
  %v2491 = vunpack.c.h.b16 %v1246
  %v2492 = vunpack.c.l.b16 %v1247
  %v2493 = vunpack.c.h.b16 %v1247
  %v2494 = vunpack.c.l.b16 %v1248
  %v2495 = vunpack.c.h.b16 %v1248
  %v2496 = vunpack.c.l.b16 %v1249
  %v2497 = vunpack.c.h.b16 %v1249
  %v2498 = vunpack.c.l.b16 %v1250
  %v2499 = vunpack.c.h.b16 %v1250
  %v2500 = vunpack.c.l.b16 %v1251
  %v2501 = vunpack.c.h.b16 %v1251
  %v2502 = vunpack.c.l.b16 %v1252
  %v2503 = vunpack.c.h.b16 %v1252
  %v2504 = vunpack.c.l.b16 %v1253
  %v2505 = vunpack.c.h.b16 %v1253
  %v2506 = vunpack.c.l.b16 %v1254
  %v2507 = vunpack.c.h.b16 %v1254
  %v2508 = vunpack.c.l.b16 %v1255
  %v2509 = vunpack.c.h.b16 %v1255
  %v2510 = vunpack.c.l.b16 %v1256
  %v2511 = vunpack.c.h.b16 %v1256
  %v2512 = vunpack.c.l.b16 %v1257
  %v2513 = vunpack.c.h.b16 %v1257
  %v2514 = vunpack.c.l.b16 %v1258
  %v2515 = vunpack.c.h.b16 %v1258
  %v2516 = vunpack.c.l.b16 %v1259
  %v2517 = vunpack.c.h.b16 %v1259
  %v2518 = vunpack.c.l.b16 %v1260
  %v2519 = vunpack.c.h.b16 %v1260
  %v2520 = vunpack.c.l.b16 %v1261
  %v2521 = vunpack.c.h.b16 %v1261
  %v2522 = vunpack.c.l.b16 %v1262
  %v2523 = vunpack.c.h.b16 %v1262
  %v2524 = vunpack.c.l.b16 %v1263
  %v2525 = vunpack.c.h.b16 %v1263
  %v2526 = vunpack.c.l.b16 %v1264
  %v2527 = vunpack.c.h.b16 %v1264
  %v2528 = vunpack.c.l.b16 %v1265
  %v2529 = vunpack.c.h.b16 %v1265
  %v2530 = vunpack.c.l.b16 %v1266
  %v2531 = vunpack.c.h.b16 %v1266
  %v2532 = vunpack.c.l.b16 %v1267
  %v2533 = vunpack.c.h.b16 %v1267
  %v2534 = vunpack.c.l.b16 %v1268
  %v2535 = vunpack.c.h.b16 %v1268
  %v2536 = vunpack.c.l.b16 %v1269
  %v2537 = vunpack.c.h.b16 %v1269
  %v2538 = vunpack.c.l.b16 %v1270
  %v2539 = vunpack.c.h.b16 %v1270
  %v2540 = vunpack.c.l.b16 %v1271
  %v2541 = vunpack.c.h.b16 %v1271
  %v2542 = vunpack.c.l.b16 %v1272
  %v2543 = vunpack.c.h.b16 %v1272
  %v2544 = vunpack.c.l.b16 %v1273
  %v2545 = vunpack.c.h.b16 %v1273
  %v2546 = vunpack.c.l.b16 %v1274
  %v2547 = vunpack.c.h.b16 %v1274
  %v2548 = vunpack.c.l.b16 %v1275
  %v2549 = vunpack.c.h.b16 %v1275
  %v2550 = vunpack.c.l.b16 %v1276
  %v2551 = vunpack.c.h.b16 %v1276
  %v2552 = vunpack.c.l.b16 %v1277
  %v2553 = vunpack.c.h.b16 %v1277
  %v2554 = vunpack.c.l.b16 %v1278
  %v2555 = vunpack.c.h.b16 %v1278
  %v2556 = vunpack.c.l.b16 %v1279
  %v2557 = vunpack.c.h.b16 %v1279
  %v2558 = vunpack.c.l.b16 %v1280
  %v2559 = vunpack.c.h.b16 %v1280
  %v2560 = vunpack.c.l.b16 %v1281
  %v2561 = vunpack.c.h.b16 %v1281
  %v2562 = vunpack.c.l.b16 %v1282
  %v2563 = vunpack.c.h.b16 %v1282
  %v2564 = vunpack.c.l.b16 %v1283
  %v2565 = vunpack.c.h.b16 %v1283
  %v2566 = vunpack.c.l.b16 %v1284
  %v2567 = vunpack.c.h.b16 %v1284
  %v2568 = vunpack.c.l.b16 %v1285
  %v2569 = vunpack.c.h.b16 %v1285
  %v2570 = vunpack.c.l.b16 %v1286
  %v2571 = vunpack.c.h.b16 %v1286
  %v2572 = vunpack.c.l.b16 %v1287
  %v2573 = vunpack.c.h.b16 %v1287
  %v2574 = vunpack.c.l.b16 %v1288
  %v2575 = vunpack.c.h.b16 %v1288
  %v2576 = vunpack.c.l.b16 %v1289
  %v2577 = vunpack.c.h.b16 %v1289
  %v2578 = vunpack.c.l.b16 %v1290
  %v2579 = vunpack.c.h.b16 %v1290
  %v2580 = vunpack.c.l.b16 %v1291
  %v2581 = vunpack.c.h.b16 %v1291
  %v2582 = vunpack.c.l.b16 %v1292
  %v2583 = vunpack.c.h.b16 %v1292
  %v2584 = vunpack.c.l.b16 %v1293
  %v2585 = vunpack.c.h.b16 %v1293
  %v2586 = vunpack.c.l.b16 %v1294
  %v2587 = vunpack.c.h.b16 %v1294
  %v2588 = vunpack.c.l.b16 %v1295
  %v2589 = vunpack.c.h.b16 %v1295
  %v2590 = vunpack.c.l.b16 %v1296
  %v2591 = vunpack.c.h.b16 %v1296
  %v2592 = vunpack.c.l.b16 %v1297
  %v2593 = vunpack.c.h.b16 %v1297
  %v2594 = vunpack.c.l.b16 %v1298
  %v2595 = vunpack.c.h.b16 %v1298
  %v2596 = vunpack.c.l.b16 %v1299
  %v2597 = vunpack.c.h.b16 %v1299
  %v2598 = vunpack.c.l.b16 %v1300
  %v2599 = vunpack.c.h.b16 %v1300
  %v2600 = vunpack.c.l.b16 %v1301
  %v2601 = vunpack.c.h.b16 %v1301
  %v2602 = vunpack.c.l.b16 %v1302
  %v2603 = vunpack.c.h.b16 %v1302
  %v2604 = vunpack.c.l.b16 %v1303
  %v2605 = vunpack.c.h.b16 %v1303
  %v2606 = vunpack.c.l.b16 %v1304
  %v2607 = vunpack.c.h.b16 %v1304
  %v2608 = vunpack.c.l.b16 %v1305
  %v2609 = vunpack.c.h.b16 %v1305
  %v2610 = vunpack.c.l.b16 %v1306
  %v2611 = vunpack.c.h.b16 %v1306
  %v2612 = vunpack.c.l.b16 %v1307
  %v2613 = vunpack.c.h.b16 %v1307
  %v2614 = vunpack.c.l.b16 %v1308
  %v2615 = vunpack.c.h.b16 %v1308
  %v2616 = vunpack.c.l.b16 %v1309
  %v2617 = vunpack.c.h.b16 %v1309
  %v2618 = vunpack.c.l.b16 %v1310
  %v2619 = vunpack.c.h.b16 %v1310
  %v2620 = vunpack.c.l.b16 %v1311
  %v2621 = vunpack.c.h.b16 %v1311
  %v2622 = vunpack.c.l.b16 %v1312
  %v2623 = vunpack.c.h.b16 %v1312
  %v2624 = vunpack.c.l.b16 %v1313
  %v2625 = vunpack.c.h.b16 %v1313
  %v2626 = vunpack.c.l.b16 %v1314
  %v2627 = vunpack.c.h.b16 %v1314
  %v2628 = vunpack.c.l.b16 %v1315
  %v2629 = vunpack.c.h.b16 %v1315
  %v2630 = vunpack.c.l.b16 %v1316
  %v2631 = vunpack.c.h.b16 %v1316
  %v2632 = vunpack.c.l.b16 %v1317
  %v2633 = vunpack.c.h.b16 %v1317
  %v2634 = vunpack.c.l.b16 %v1318
  %v2635 = vunpack.c.h.b16 %v1318
  %v2636 = vunpack.c.l.b16 %v1319
  %v2637 = vunpack.c.h.b16 %v1319
  %v2638 = vunpack.c.l.b16 %v1320
  %v2639 = vunpack.c.h.b16 %v1320
  %v2640 = vunpack.c.l.b16 %v1321
  %v2641 = vunpack.c.h.b16 %v1321
  %v2642 = vunpack.c.l.b16 %v1322
  %v2643 = vunpack.c.h.b16 %v1322
  %v2644 = vunpack.c.l.b16 %v1323
  %v2645 = vunpack.c.h.b16 %v1323
  %v2646 = vunpack.c.l.b16 %v1324
  %v2647 = vunpack.c.h.b16 %v1324
  %v2648 = vunpack.c.l.b16 %v1325
  %v2649 = vunpack.c.h.b16 %v1325
  %v2650 = vunpack.c.l.b16 %v1326
  %v2651 = vunpack.c.h.b16 %v1326
  %v2652 = vunpack.c.l.b16 %v1327
  %v2653 = vunpack.c.h.b16 %v1327
  %v2654 = vunpack.c.l.b16 %v1328
  %v2655 = vunpack.c.h.b16 %v1328
  %v2656 = vunpack.c.l.b16 %v1329
  %v2657 = vunpack.c.h.b16 %v1329
  %v2658 = vunpack.c.l.b16 %v1330
  %v2659 = vunpack.c.h.b16 %v1330
  %v2660 = vunpack.c.l.b16 %v1331
  %v2661 = vunpack.c.h.b16 %v1331
  %v2662 = vunpack.c.l.b16 %v1332
  %v2663 = vunpack.c.h.b16 %v1332
  %v2664 = vunpack.c.l.b16 %v1333
  %v2665 = vunpack.c.h.b16 %v1333
  %v2666 = vunpack.c.l.b16 %v1334
  %v2667 = vunpack.c.h.b16 %v1334
  %v2668 = vunpack.c.l.b16 %v1335
  %v2669 = vunpack.c.h.b16 %v1335
  %v2670 = vunpack.c.l.b16 %v1336
  %v2671 = vunpack.c.h.b16 %v1336
  %v2672 = vunpack.c.l.b16 %v1337
  %v2673 = vunpack.c.h.b16 %v1337
  %v2674 = vunpack.c.l.b16 %v1338
  %v2675 = vunpack.c.h.b16 %v1338
  %v2676 = vunpack.c.l.b16 %v1339
  %v2677 = vunpack.c.h.b16 %v1339
  %v2678 = vunpack.c.l.b16 %v1340
  %v2679 = vunpack.c.h.b16 %v1340
  %v2680 = vunpack.c.l.b16 %v1341
  %v2681 = vunpack.c.h.b16 %v1341
  %v2682 = vunpack.c.l.b16 %v1342
  %v2683 = vunpack.c.h.b16 %v1342
  %v2684 = vunpack.c.l.b16 %v1343
  %v2685 = vunpack.c.h.b16 %v1343
  %v2686 = vunpack.c.l.b16 %v1344
  %v2687 = vunpack.c.h.b16 %v1344
  %v2688 = vunpack.c.l.b16 %v1345
  %v2689 = vunpack.c.h.b16 %v1345
  %v2690 = vunpack.c.l.b16 %v1346
  %v2691 = vunpack.c.h.b16 %v1346
  %v2692 = vunpack.c.l.b16 %v1347
  %v2693 = vunpack.c.h.b16 %v1347
  %v2694 = vunpack.c.l.b16 %v1348
  %v2695 = vunpack.c.h.b16 %v1348
  %v2696 = vunpack.c.l.b16 %v1349
  %v2697 = vunpack.c.h.b16 %v1349
  %v2698 = vunpack.c.l.b16 %v1350
  %v2699 = vunpack.c.h.b16 %v1350
  %v2700 = vunpack.c.l.b16 %v1351
  %v2701 = vunpack.c.h.b16 %v1351
  %v2702 = vunpack.c.l.b16 %v1352
  %v2703 = vunpack.c.h.b16 %v1352
  %v2704 = vunpack.c.l.b16 %v1353
  %v2705 = vunpack.c.h.b16 %v1353
  %v2706 = vunpack.c.l.b16 %v1354
  %v2707 = vunpack.c.h.b16 %v1354
  %v2708 = vunpack.c.l.b16 %v1355
  %v2709 = vunpack.c.h.b16 %v1355
  %v2710 = vunpack.c.l.b16 %v1356
  %v2711 = vunpack.c.h.b16 %v1356
  %v2712 = vunpack.c.l.b16 %v1357
  %v2713 = vunpack.c.h.b16 %v1357
  %v2714 = vunpack.c.l.b16 %v1358
  %v2715 = vunpack.c.h.b16 %v1358
  %v2716 = vunpack.c.l.b16 %v1359
  %v2717 = vunpack.c.h.b16 %v1359
  %v2718 = vunpack.c.l.b16 %v1360
  %v2719 = vunpack.c.h.b16 %v1360
  %v2720 = vunpack.c.l.b16 %v1361
  %v2721 = vunpack.c.h.b16 %v1361
  %v2722 = vunpack.c.l.b16 %v1362
  %v2723 = vunpack.c.h.b16 %v1362
  %v2724 = vunpack.c.l.b16 %v1363
  %v2725 = vunpack.c.h.b16 %v1363
  %v2726 = vunpack.c.l.b16 %v1364
  %v2727 = vunpack.c.h.b16 %v1364
  %v2728 = vunpack.c.l.b16 %v1365
  %v2729 = vunpack.c.h.b16 %v1365
  %v2730 = vunpack.c.l.b16 %v1366
  %v2731 = vunpack.c.h.b16 %v1366
  %v2732 = vunpack.c.l.b16 %v1367
  %v2733 = vunpack.c.h.b16 %v1367
  %v2734 = vunpack.c.l.b16 %v1368
  %v2735 = vunpack.c.h.b16 %v1368
  %v2736 = vunpack.c.l.b16 %v1369
  %v2737 = vunpack.c.h.b16 %v1369
  %v2738 = vunpack.c.l.b16 %v1370
  %v2739 = vunpack.c.h.b16 %v1370
  %v2740 = vunpack.c.l.b16 %v1371
  %v2741 = vunpack.c.h.b16 %v1371
  %v2742 = vunpack.c.l.b16 %v1372
  %v2743 = vunpack.c.h.b16 %v1372
  %v2744 = vunpack.c.l.b16 %v1373
  %v2745 = vunpack.c.h.b16 %v1373
  %v2746 = vunpack.c.l.b16 %v1374
  %v2747 = vunpack.c.h.b16 %v1374
  %v2748 = vunpack.c.l.b16 %v1375
  %v2749 = vunpack.c.h.b16 %v1375
  %v2750 = vunpack.c.l.b16 %v1376
  %v2751 = vunpack.c.h.b16 %v1376
  %v2752 = vunpack.c.l.b16 %v1377
  %v2753 = vunpack.c.h.b16 %v1377
  %v2754 = vunpack.c.l.b16 %v1378
  %v2755 = vunpack.c.h.b16 %v1378
  %v2756 = vunpack.c.l.b16 %v1379
  %v2757 = vunpack.c.h.b16 %v1379
  %v2758 = vunpack.c.l.b16 %v1380
  %v2759 = vunpack.c.h.b16 %v1380
  %v2760 = vunpack.c.l.b16 %v1381
  %v2761 = vunpack.c.h.b16 %v1381
  %v2762 = vunpack.c.l.b16 %v1382
  %v2763 = vunpack.c.h.b16 %v1382
  %v2764 = vunpack.c.l.b16 %v1383
  %v2765 = vunpack.c.h.b16 %v1383
  %v2766 = vunpack.c.l.b16 %v1384
  %v2767 = vunpack.c.h.b16 %v1384
  %v2768 = vunpack.c.l.b16 %v1385
  %v2769 = vunpack.c.h.b16 %v1385
  %v2770 = vunpack.c.l.b16 %v1386
  %v2771 = vunpack.c.h.b16 %v1386
  %v2772 = vunpack.c.l.b16 %v1387
  %v2773 = vunpack.c.h.b16 %v1387
  %v2774 = vunpack.c.l.b16 %v1388
  %v2775 = vunpack.c.h.b16 %v1388
  %v2776 = vunpack.c.l.b16 %v1389
  %v2777 = vunpack.c.h.b16 %v1389
  %v2778 = vunpack.c.l.b16 %v1390
  %v2779 = vunpack.c.h.b16 %v1390
  %v2780 = vunpack.c.l.b16 %v1391
  %v2781 = vunpack.c.h.b16 %v1391
  %v2782 = vunpack.c.l.b16 %v1392
  %v2783 = vunpack.c.h.b16 %v1392
  %v2784 = vunpack.c.l.b16 %v1393
  %v2785 = vunpack.c.h.b16 %v1393
  %v2786 = vunpack.c.l.b16 %v1394
  %v2787 = vunpack.c.h.b16 %v1394
  %v2788 = vunpack.c.l.b16 %v1395
  %v2789 = vunpack.c.h.b16 %v1395
  %v2790 = vunpack.c.l.b16 %v1396
  %v2791 = vunpack.c.h.b16 %v1396
  %v2792 = vunpack.c.l.b16 %v1397
  %v2793 = vunpack.c.h.b16 %v1397
  %v2794 = vunpack.c.l.b16 %v1398
  %v2795 = vunpack.c.h.b16 %v1398
  %v2796 = vunpack.c.l.b16 %v1399
  %v2797 = vunpack.c.h.b16 %v1399
  %v2798 = vunpack.c.l.b16 %v1400
  %v2799 = vunpack.c.h.b16 %v1400
  %v2800 = vunpack.c.l.b16 %v1401
  %v2801 = vunpack.c.h.b16 %v1401
  %v2802 = vunpack.c.l.b16 %v1402
  %v2803 = vunpack.c.h.b16 %v1402
  %v2804 = vunpack.c.l.b16 %v1403
  %v2805 = vunpack.c.h.b16 %v1403
  %v2806 = vunpack.c.l.b16 %v1404
  %v2807 = vunpack.c.h.b16 %v1404
  %v2808 = vunpack.c.l.b16 %v1405
  %v2809 = vunpack.c.h.b16 %v1405
  %v2810 = vunpack.c.l.b16 %v1406
  %v2811 = vunpack.c.h.b16 %v1406
  %v2812 = vunpack.c.l.b16 %v1407
  %v2813 = vunpack.c.h.b16 %v1407
  %v2814 = vunpack.c.l.b16 %v1408
  %v2815 = vunpack.c.h.b16 %v1408
  %v2816 = vunpack.c.l.b16 %v1409
  %v2817 = vunpack.c.h.b16 %v1409
  %v2818 = vunpack.c.l.b16 %v1410
  %v2819 = vunpack.c.h.b16 %v1410
  %v2820 = vunpack.c.l.b16 %v1411
  %v2821 = vunpack.c.h.b16 %v1411
  %v2822 = vunpack.c.l.b16 %v1412
  %v2823 = vunpack.c.h.b16 %v1412
  %v2824 = vunpack.c.l.b16 %v1413
  %v2825 = vunpack.c.h.b16 %v1413
  %v2826 = vunpack.c.l.b16 %v1414
  %v2827 = vunpack.c.h.b16 %v1414
  %v2828 = vunpack.c.l.b16 %v1415
  %v2829 = vunpack.c.h.b16 %v1415
  %v2830 = vunpack.c.l.b16 %v1416
  %v2831 = vunpack.c.h.b16 %v1416
  %v2832 = vunpack.c.l.b16 %v1417
  %v2833 = vunpack.c.h.b16 %v1417
  %v2834 = vunpack.c.l.b16 %v1418
  %v2835 = vunpack.c.h.b16 %v1418
  %v2836 = vunpack.c.l.b16 %v1419
  %v2837 = vunpack.c.h.b16 %v1419
  %v2838 = vunpack.c.l.b16 %v1420
  %v2839 = vunpack.c.h.b16 %v1420
  %v2840 = vunpack.c.l.b16 %v1421
  %v2841 = vunpack.c.h.b16 %v1421
  %v2842 = vunpack.c.l.b16 %v1422
  %v2843 = vunpack.c.h.b16 %v1422
  %v2844 = vunpack.c.l.b16 %v1423
  %v2845 = vunpack.c.h.b16 %v1423
  %v2846 = vunpack.c.l.b16 %v1424
  %v2847 = vunpack.c.h.b16 %v1424
  %v2848 = vunpack.c.l.b16 %v1425
  %v2849 = vunpack.c.h.b16 %v1425
  %v2850 = vunpack.c.l.b16 %v1426
  %v2851 = vunpack.c.h.b16 %v1426
  %v2852 = vunpack.c.l.b16 %v1427
  %v2853 = vunpack.c.h.b16 %v1427
  %v2854 = vunpack.c.l.b16 %v1428
  %v2855 = vunpack.c.h.b16 %v1428
  %v2856 = vunpack.c.l.b16 %v1429
  %v2857 = vunpack.c.h.b16 %v1429
  %v2858 = vunpack.c.l.b16 %v1430
  %v2859 = vunpack.c.h.b16 %v1430
  %v2860 = vunpack.c.l.b16 %v1431
  %v2861 = vunpack.c.h.b16 %v1431
  %v2862 = vunpack.c.l.b16 %v1432
  %v2863 = vunpack.c.h.b16 %v1432
  %v2864 = vunpack.c.l.b16 %v1433
  %v2865 = vunpack.c.h.b16 %v1433
  %v2866 = vunpack.c.l.b16 %v1434
  %v2867 = vunpack.c.h.b16 %v1434
  %v2868 = vunpack.c.l.b16 %v1435
  %v2869 = vunpack.c.h.b16 %v1435
  %v2870 = vunpack.c.l.b16 %v1436
  %v2871 = vunpack.c.h.b16 %v1436
  %v2872 = vunpack.c.l.b16 %v1437
  %v2873 = vunpack.c.h.b16 %v1437
  %v2874 = vunpack.c.l.b16 %v1438
  %v2875 = vunpack.c.h.b16 %v1438
  %v2876 = vunpack.c.l.b16 %v1439
  %v2877 = vunpack.c.h.b16 %v1439
  %v2878 = vunpack.c.l.b16 %v1440
  %v2879 = vunpack.c.h.b16 %v1440
  %v2880 = vunpack.c.l.b16 %v1441
  %v2881 = vunpack.c.h.b16 %v1441
  %v2882 = vunpack.c.l.b16 %v1442
  %v2883 = vunpack.c.h.b16 %v1442
  %v2884 = vunpack.c.l.b16 %v1443
  %v2885 = vunpack.c.h.b16 %v1443
  %v2886 = vunpack.c.l.b16 %v1444
  %v2887 = vunpack.c.h.b16 %v1444
  %v2888 = vunpack.c.l.b16 %v1445
  %v2889 = vunpack.c.h.b16 %v1445
  %v2890 = vunpack.c.l.b16 %v1446
  %v2891 = vunpack.c.h.b16 %v1446
  %v2892 = vunpack.c.l.b16 %v1447
  %v2893 = vunpack.c.h.b16 %v1447
  %v2894 = vunpack.c.l.b16 %v1448
  %v2895 = vunpack.c.h.b16 %v1448
  %v2896 = vunpack.c.l.b16 %v1449
  %v2897 = vunpack.c.h.b16 %v1449
  %v2898 = vunpack.c.l.b16 %v1450
  %v2899 = vunpack.c.h.b16 %v1450
  %v2900 = vunpack.c.l.b16 %v1451
  %v2901 = vunpack.c.h.b16 %v1451
  %v2902 = vunpack.c.l.b16 %v1452
  %v2903 = vunpack.c.h.b16 %v1452
  %v2904 = vunpack.c.l.b16 %v1453
  %v2905 = vunpack.c.h.b16 %v1453
  %v2906 = vunpack.c.l.b16 %v1454
  %v2907 = vunpack.c.h.b16 %v1454
  %v2908 = vunpack.c.l.b16 %v1455
  %v2909 = vunpack.c.h.b16 %v1455
  %v2910 = vunpack.c.l.b16 %v1456
  %v2911 = vunpack.c.h.b16 %v1456
  %v2912 = vunpack.c.l.b16 %v1457
  %v2913 = vunpack.c.h.b16 %v1457
  %v2914 = vunpack.c.l.b16 %v1458
  %v2915 = vunpack.c.h.b16 %v1458
  %v2916 = vunpack.c.l.b16 %v1459
  %v2917 = vunpack.c.h.b16 %v1459
  %v2918 = vunpack.c.l.b16 %v1460
  %v2919 = vunpack.c.h.b16 %v1460
  %v2920 = vunpack.c.l.b16 %v1461
  %v2921 = vunpack.c.h.b16 %v1461
  %v2922 = vunpack.c.l.b16 %v1462
  %v2923 = vunpack.c.h.b16 %v1462
  %v2924 = vunpack.c.l.b16 %v1463
  %v2925 = vunpack.c.h.b16 %v1463
  %v2926 = vunpack.c.l.b16 %v1464
  %v2927 = vunpack.c.h.b16 %v1464
  %v2928 = vunpack.c.l.b16 %v1465
  %v2929 = vunpack.c.h.b16 %v1465
  %v2930 = vunpack.c.l.b16 %v1466
  %v2931 = vunpack.c.h.b16 %v1466
  %v2932 = vunpack.c.l.b16 %v1467
  %v2933 = vunpack.c.h.b16 %v1467
  %v2934 = vunpack.c.l.b16 %v1468
  %v2935 = vunpack.c.h.b16 %v1468
  %v2936 = vunpack.c.l.b16 %v1469
  %v2937 = vunpack.c.h.b16 %v1469
  %v2938 = vunpack.c.l.b16 %v1470
  %v2939 = vunpack.c.h.b16 %v1470
  %v2940 = vunpack.c.l.b16 %v1471
  %v2941 = vunpack.c.h.b16 %v1471
  %v2942 = vunpack.c.l.b16 %v1472
  %v2943 = vunpack.c.h.b16 %v1472
  %v2944 = vunpack.c.l.b16 %v1473
  %v2945 = vunpack.c.h.b16 %v1473
  %v2946 = vunpack.c.l.b16 %v1474
  %v2947 = vunpack.c.h.b16 %v1474
  %v2948 = vunpack.c.l.b16 %v1475
  %v2949 = vunpack.c.h.b16 %v1475
  %v2950 = vunpack.c.l.b16 %v1476
  %v2951 = vunpack.c.h.b16 %v1476
  %v2952 = vunpack.c.l.b16 %v1477
  %v2953 = vunpack.c.h.b16 %v1477
  %v2954 = vunpack.c.l.b16 %v1478
  %v2955 = vunpack.c.h.b16 %v1478
  %v2956 = vunpack.c.l.b16 %v1479
  %v2957 = vunpack.c.h.b16 %v1479
  %v2958 = vunpack.c.l.b16 %v1480
  %v2959 = vunpack.c.h.b16 %v1480
  %v2960 = vunpack.c.l.b16 %v1481
  %v2961 = vunpack.c.h.b16 %v1481
  %v2962 = vunpack.c.l.b16 %v1482
  %v2963 = vunpack.c.h.b16 %v1482
  %v2964 = vunpack.c.l.b16 %v1483
  %v2965 = vunpack.c.h.b16 %v1483
  %v2966 = vunpack.c.l.b16 %v1484
  %v2967 = vunpack.c.h.b16 %v1484
  %v2968 = vunpack.c.l.b16 %v1485
  %v2969 = vunpack.c.h.b16 %v1485
  %v2970 = vunpack.c.l.b16 %v1486
  %v2971 = vunpack.c.h.b16 %v1486
  %v2972 = vunpack.c.l.b16 %v1487
  %v2973 = vunpack.c.h.b16 %v1487
  %v2974 = vunpack.c.l.b16 %v1488
  %v2975 = vunpack.c.h.b16 %v1488
  %v2976 = vunpack.c.l.b16 %v1489
  %v2977 = vunpack.c.h.b16 %v1489
  %v2978 = vunpack.c.l.b16 %v1490
  %v2979 = vunpack.c.h.b16 %v1490
  %v2980 = vunpack.c.l.b16 %v1491
  %v2981 = vunpack.c.h.b16 %v1491
  %v2982 = vunpack.c.l.b16 %v1492
  %v2983 = vunpack.c.h.b16 %v1492
  %v2984 = vunpack.c.l.b16 %v1493
  %v2985 = vunpack.c.h.b16 %v1493
  %v2986 = vunpack.c.l.b16 %v1494
  %v2987 = vunpack.c.h.b16 %v1494
  %v2988 = vunpack.c.l.b16 %v1495
  %v2989 = vunpack.c.h.b16 %v1495
  %v2990 = vunpack.c.l.b16 %v1496
  %v2991 = vunpack.c.h.b16 %v1496
  %v2992 = vunpack.c.l.b16 %v1497
  %v2993 = vunpack.c.h.b16 %v1497
  %v2994 = vunpack.c.l.b16 %v1498
  %v2995 = vunpack.c.h.b16 %v1498
  %v2996 = vunpack.c.l.b16 %v1499
  %v2997 = vunpack.c.h.b16 %v1499
  %v2998 = vunpack.c.l.b16 %v1500
  %v2999 = vunpack.c.h.b16 %v1500
  %v3000 = vunpack.c.l.b16 %v1501
  %v3001 = vunpack.c.h.b16 %v1501
  %v3002 = vunpack.c.l.b16 %v1502
  %v3003 = vunpack.c.h.b16 %v1502
  %v3004 = vunpack.c.l.b16 %v1503
  %v3005 = vunpack.c.h.b16 %v1503
  %v3006 = vunpack.c.l.b16 %v1504
  %v3007 = vunpack.c.h.b16 %v1504
  %v3008 = vunpack.c.l.b16 %v1505
  %v3009 = vunpack.c.h.b16 %v1505
  %v3010 = vunpack.c.l.b16 %v1506
  %v3011 = vunpack.c.h.b16 %v1506
  %v3012 = vunpack.c.l.b16 %v1507
  %v3013 = vunpack.c.h.b16 %v1507
  %v3014 = vunpack.c.l.b16 %v1508
  %v3015 = vunpack.c.h.b16 %v1508
  %v3016 = vunpack.c.l.b16 %v1509
  %v3017 = vunpack.c.h.b16 %v1509
  %v3018 = vunpack.c.l.b16 %v1510
  %v3019 = vunpack.c.h.b16 %v1510
  %v3020 = vunpack.c.l.b16 %v1511
  %v3021 = vunpack.c.h.b16 %v1511
  %v3022 = vunpack.c.l.b16 %v1512
  %v3023 = vunpack.c.h.b16 %v1512
  %v3024 = vunpack.c.l.b16 %v1513
  %v3025 = vunpack.c.h.b16 %v1513
  %v3026 = vunpack.c.l.b16 %v1514
  %v3027 = vunpack.c.h.b16 %v1514
  %v3028 = vunpack.c.l.b16 %v1515
  %v3029 = vunpack.c.h.b16 %v1515
  %v3030 = vunpack.c.l.b16 %v1516
  %v3031 = vunpack.c.h.b16 %v1516
  %v3032 = vunpack.c.l.b16 %v1517
  %v3033 = vunpack.c.h.b16 %v1517
  %v3034 = vunpack.c.l.b16 %v1518
  %v3035 = vunpack.c.h.b16 %v1518
  %v3036 = vunpack.c.l.b16 %v1519
  %v3037 = vunpack.c.h.b16 %v1519
  %v3038 = vunpack.c.l.b16 %v1520
  %v3039 = vunpack.c.h.b16 %v1520
  %v3040 = vunpack.c.l.b16 %v1521
  %v3041 = vunpack.c.h.b16 %v1521
  %v3042 = vunpack.c.l.b16 %v1522
  %v3043 = vunpack.c.h.b16 %v1522
  %v3044 = vunpack.c.l.b16 %v1523
  %v3045 = vunpack.c.h.b16 %v1523
  %v3046 = vunpack.c.l.b16 %v1524
  %v3047 = vunpack.c.h.b16 %v1524
  %v3048 = vunpack.c.l.b16 %v1525
  %v3049 = vunpack.c.h.b16 %v1525
  %v3050 = vunpack.c.l.b16 %v1526
  %v3051 = vunpack.c.h.b16 %v1526
  %v3052 = vunpack.c.l.b16 %v1527
  %v3053 = vunpack.c.h.b16 %v1527
  %v3054 = vunpack.c.l.b16 %v1528
  %v3055 = vunpack.c.h.b16 %v1528
  %v3056 = vunpack.c.l.b16 %v1529
  %v3057 = vunpack.c.h.b16 %v1529
  %v3058 = vunpack.c.l.b16 %v1530
  %v3059 = vunpack.c.h.b16 %v1530
  %v3060 = vunpack.c.l.b16 %v1531
  %v3061 = vunpack.c.h.b16 %v1531
  %v3062 = vunpack.c.l.b16 %v1532
  %v3063 = vunpack.c.h.b16 %v1532
  %v3064 = vunpack.c.l.b16 %v1533
  %v3065 = vunpack.c.h.b16 %v1533
  %v3066 = vunpack.c.l.b16 %v1534
  %v3067 = vunpack.c.h.b16 %v1534
  %v3068 = vunpack.c.l.b16 %v1535
  %v3069 = vunpack.c.h.b16 %v1535
  %v3070 = vunpack.c.l.b16 %v1536
  %v3071 = vunpack.c.h.b16 %v1536
  %v3072 = vunpack.c.l.b16 %v1537
  %v3073 = vunpack.c.h.b16 %v1537
  %v3074 = vunpack.c.l.b16 %v1538
  %v3075 = vunpack.c.h.b16 %v1538
  %v3076 = vunpack.c.l.b16 %v1539
  %v3077 = vunpack.c.h.b16 %v1539
  %v3078 = vunpack.c.l.b16 %v1540
  %v3079 = vunpack.c.h.b16 %v1540
  %v3080 = vunpack.c.l.b16 %v1541
  %v3081 = vunpack.c.h.b16 %v1541
  %v3082 = vunpack.c.l.b16 %v1542
  %v3083 = vunpack.c.h.b16 %v1542
  %v3084 = vunpack.c.l.b16 %v1543
  %v3085 = vunpack.c.h.b16 %v1543
  %v3086 = vunpack.c.l.b16 %v1544
  %v3087 = vunpack.c.h.b16 %v1544
  %v3088 = vunpack.c.l.b16 %v1545
  %v3089 = vunpack.c.h.b16 %v1545
  %v3090 = vunpack.c.l.b16 %v1546
  %v3091 = vunpack.c.h.b16 %v1546
  %v3092 = vunpack.c.l.b16 %v1547
  %v3093 = vunpack.c.h.b16 %v1547
  %v3094 = vunpack.c.l.b16 %v1548
  %v3095 = vunpack.c.h.b16 %v1548
  %v3096 = vunpack.c.l.b16 %v1549
  %v3097 = vunpack.c.h.b16 %v1549
  %v3098 = vunpack.c.l.b16 %v1550
  %v3099 = vunpack.c.h.b16 %v1550
  %v3100 = vunpack.c.l.b16 %v1551
  %v3101 = vunpack.c.h.b16 %v1551
  %v3102 = vunpack.c.l.b16 %v1552
  %v3103 = vunpack.c.h.b16 %v1552
  %v3104 = vunpack.c.l.b16 %v1553
  %v3105 = vunpack.c.h.b16 %v1553
  %v3106 = vunpack.c.l.b16 %v1554
  %v3107 = vunpack.c.h.b16 %v1554
  %v3108 = vunpack.c.l.b16 %v1555
  %v3109 = vunpack.c.h.b16 %v1555
  %v3110 = vpack.c.b16 %v2094, %v2086
  %v3111 = vpack.c.b16 %v2095, %v2087
  %v3112 = vpack.c.b16 %v2096, %v2088
  %v3113 = vpack.c.b16 %v2097, %v2089
  %v3114 = vpack.c.b16 %v2098, %v2090
  %v3115 = vpack.c.b16 %v2099, %v2091
  %v3116 = vpack.c.b16 %v2100, %v2092
  %v3117 = vpack.c.b16 %v2101, %v2093
  %v3118 = vpack.c.b16 %v2110, %v2102
  %v3119 = vpack.c.b16 %v2111, %v2103
  %v3120 = vpack.c.b16 %v2112, %v2104
  %v3121 = vpack.c.b16 %v2113, %v2105
  %v3122 = vpack.c.b16 %v2114, %v2106
  %v3123 = vpack.c.b16 %v2115, %v2107
  %v3124 = vpack.c.b16 %v2116, %v2108
  %v3125 = vpack.c.b16 %v2117, %v2109
  %v3126 = vpack.c.b16 %v2126, %v2118
  %v3127 = vpack.c.b16 %v2127, %v2119
  %v3128 = vpack.c.b16 %v2128, %v2120
  %v3129 = vpack.c.b16 %v2129, %v2121
  %v3130 = vpack.c.b16 %v2130, %v2122
  %v3131 = vpack.c.b16 %v2131, %v2123
  %v3132 = vpack.c.b16 %v2132, %v2124
  %v3133 = vpack.c.b16 %v2133, %v2125
  %v3134 = vpack.c.b16 %v2142, %v2134
  %v3135 = vpack.c.b16 %v2143, %v2135
  %v3136 = vpack.c.b16 %v2144, %v2136
  %v3137 = vpack.c.b16 %v2145, %v2137
  %v3138 = vpack.c.b16 %v2146, %v2138
  %v3139 = vpack.c.b16 %v2147, %v2139
  %v3140 = vpack.c.b16 %v2148, %v2140
  %v3141 = vpack.c.b16 %v2149, %v2141
  %v3142 = vpack.c.b16 %v2158, %v2150
  %v3143 = vpack.c.b16 %v2159, %v2151
  %v3144 = vpack.c.b16 %v2160, %v2152
  %v3145 = vpack.c.b16 %v2161, %v2153
  %v3146 = vpack.c.b16 %v2162, %v2154
  %v3147 = vpack.c.b16 %v2163, %v2155
  %v3148 = vpack.c.b16 %v2164, %v2156
  %v3149 = vpack.c.b16 %v2165, %v2157
  %v3150 = vpack.c.b16 %v2174, %v2166
  %v3151 = vpack.c.b16 %v2175, %v2167
  %v3152 = vpack.c.b16 %v2176, %v2168
  %v3153 = vpack.c.b16 %v2177, %v2169
  %v3154 = vpack.c.b16 %v2178, %v2170
  %v3155 = vpack.c.b16 %v2179, %v2171
  %v3156 = vpack.c.b16 %v2180, %v2172
  %v3157 = vpack.c.b16 %v2181, %v2173
  %v3158 = vpack.c.b16 %v2190, %v2182
  %v3159 = vpack.c.b16 %v2191, %v2183
  %v3160 = vpack.c.b16 %v2192, %v2184
  %v3161 = vpack.c.b16 %v2193, %v2185
  %v3162 = vpack.c.b16 %v2194, %v2186
  %v3163 = vpack.c.b16 %v2195, %v2187
  %v3164 = vpack.c.b16 %v2196, %v2188
  %v3165 = vpack.c.b16 %v2197, %v2189
  %v3166 = vpack.c.b16 %v2206, %v2198
  %v3167 = vpack.c.b16 %v2207, %v2199
  %v3168 = vpack.c.b16 %v2208, %v2200
  %v3169 = vpack.c.b16 %v2209, %v2201
  %v3170 = vpack.c.b16 %v2210, %v2202
  %v3171 = vpack.c.b16 %v2211, %v2203
  %v3172 = vpack.c.b16 %v2212, %v2204
  %v3173 = vpack.c.b16 %v2213, %v2205
  %v3174 = vpack.c.b16 %v2222, %v2214
  %v3175 = vpack.c.b16 %v2223, %v2215
  %v3176 = vpack.c.b16 %v2224, %v2216
  %v3177 = vpack.c.b16 %v2225, %v2217
  %v3178 = vpack.c.b16 %v2226, %v2218
  %v3179 = vpack.c.b16 %v2227, %v2219
  %v3180 = vpack.c.b16 %v2228, %v2220
  %v3181 = vpack.c.b16 %v2229, %v2221
  %v3182 = vpack.c.b16 %v2238, %v2230
  %v3183 = vpack.c.b16 %v2239, %v2231
  %v3184 = vpack.c.b16 %v2240, %v2232
  %v3185 = vpack.c.b16 %v2241, %v2233
  %v3186 = vpack.c.b16 %v2242, %v2234
  %v3187 = vpack.c.b16 %v2243, %v2235
  %v3188 = vpack.c.b16 %v2244, %v2236
  %v3189 = vpack.c.b16 %v2245, %v2237
  %v3190 = vpack.c.b16 %v2254, %v2246
  %v3191 = vpack.c.b16 %v2255, %v2247
  %v3192 = vpack.c.b16 %v2256, %v2248
  %v3193 = vpack.c.b16 %v2257, %v2249
  %v3194 = vpack.c.b16 %v2258, %v2250
  %v3195 = vpack.c.b16 %v2259, %v2251
  %v3196 = vpack.c.b16 %v2260, %v2252
  %v3197 = vpack.c.b16 %v2261, %v2253
  %v3198 = vpack.c.b16 %v2270, %v2262
  %v3199 = vpack.c.b16 %v2271, %v2263
  %v3200 = vpack.c.b16 %v2272, %v2264
  %v3201 = vpack.c.b16 %v2273, %v2265
  %v3202 = vpack.c.b16 %v2274, %v2266
  %v3203 = vpack.c.b16 %v2275, %v2267
  %v3204 = vpack.c.b16 %v2276, %v2268
  %v3205 = vpack.c.b16 %v2277, %v2269
  %v3206 = vpack.c.b16 %v2286, %v2278
  %v3207 = vpack.c.b16 %v2287, %v2279
  %v3208 = vpack.c.b16 %v2288, %v2280
  %v3209 = vpack.c.b16 %v2289, %v2281
  %v3210 = vpack.c.b16 %v2290, %v2282
  %v3211 = vpack.c.b16 %v2291, %v2283
  %v3212 = vpack.c.b16 %v2292, %v2284
  %v3213 = vpack.c.b16 %v2293, %v2285
  %v3214 = vpack.c.b16 %v2302, %v2294
  %v3215 = vpack.c.b16 %v2303, %v2295
  %v3216 = vpack.c.b16 %v2304, %v2296
  %v3217 = vpack.c.b16 %v2305, %v2297
  %v3218 = vpack.c.b16 %v2306, %v2298
  %v3219 = vpack.c.b16 %v2307, %v2299
  %v3220 = vpack.c.b16 %v2308, %v2300
  %v3221 = vpack.c.b16 %v2309, %v2301
  %v3222 = vpack.c.b16 %v2318, %v2310
  %v3223 = vpack.c.b16 %v2319, %v2311
  %v3224 = vpack.c.b16 %v2320, %v2312
  %v3225 = vpack.c.b16 %v2321, %v2313
  %v3226 = vpack.c.b16 %v2322, %v2314
  %v3227 = vpack.c.b16 %v2323, %v2315
  %v3228 = vpack.c.b16 %v2324, %v2316
  %v3229 = vpack.c.b16 %v2325, %v2317
  %v3230 = vpack.c.b16 %v2334, %v2326
  %v3231 = vpack.c.b16 %v2335, %v2327
  %v3232 = vpack.c.b16 %v2336, %v2328
  %v3233 = vpack.c.b16 %v2337, %v2329
  %v3234 = vpack.c.b16 %v2338, %v2330
  %v3235 = vpack.c.b16 %v2339, %v2331
  %v3236 = vpack.c.b16 %v2340, %v2332
  %v3237 = vpack.c.b16 %v2341, %v2333
  %v3238 = vpack.c.b16 %v2350, %v2342
  %v3239 = vpack.c.b16 %v2351, %v2343
  %v3240 = vpack.c.b16 %v2352, %v2344
  %v3241 = vpack.c.b16 %v2353, %v2345
  %v3242 = vpack.c.b16 %v2354, %v2346
  %v3243 = vpack.c.b16 %v2355, %v2347
  %v3244 = vpack.c.b16 %v2356, %v2348
  %v3245 = vpack.c.b16 %v2357, %v2349
  %v3246 = vpack.c.b16 %v2366, %v2358
  %v3247 = vpack.c.b16 %v2367, %v2359
  %v3248 = vpack.c.b16 %v2368, %v2360
  %v3249 = vpack.c.b16 %v2369, %v2361
  %v3250 = vpack.c.b16 %v2370, %v2362
  %v3251 = vpack.c.b16 %v2371, %v2363
  %v3252 = vpack.c.b16 %v2372, %v2364
  %v3253 = vpack.c.b16 %v2373, %v2365
  %v3254 = vpack.c.b16 %v2382, %v2374
  %v3255 = vpack.c.b16 %v2383, %v2375
  %v3256 = vpack.c.b16 %v2384, %v2376
  %v3257 = vpack.c.b16 %v2385, %v2377
  %v3258 = vpack.c.b16 %v2386, %v2378
  %v3259 = vpack.c.b16 %v2387, %v2379
  %v3260 = vpack.c.b16 %v2388, %v2380
  %v3261 = vpack.c.b16 %v2389, %v2381
  %v3262 = vpack.c.b16 %v2398, %v2390
  %v3263 = vpack.c.b16 %v2399, %v2391
  %v3264 = vpack.c.b16 %v2400, %v2392
  %v3265 = vpack.c.b16 %v2401, %v2393
  %v3266 = vpack.c.b16 %v2402, %v2394
  %v3267 = vpack.c.b16 %v2403, %v2395
  %v3268 = vpack.c.b16 %v2404, %v2396
  %v3269 = vpack.c.b16 %v2405, %v2397
  %v3270 = vpack.c.b16 %v2414, %v2406
  %v3271 = vpack.c.b16 %v2415, %v2407
  %v3272 = vpack.c.b16 %v2416, %v2408
  %v3273 = vpack.c.b16 %v2417, %v2409
  %v3274 = vpack.c.b16 %v2418, %v2410
  %v3275 = vpack.c.b16 %v2419, %v2411
  %v3276 = vpack.c.b16 %v2420, %v2412
  %v3277 = vpack.c.b16 %v2421, %v2413
  %v3278 = vpack.c.b16 %v2430, %v2422
  %v3279 = vpack.c.b16 %v2431, %v2423
  %v3280 = vpack.c.b16 %v2432, %v2424
  %v3281 = vpack.c.b16 %v2433, %v2425
  %v3282 = vpack.c.b16 %v2434, %v2426
  %v3283 = vpack.c.b16 %v2435, %v2427
  %v3284 = vpack.c.b16 %v2436, %v2428
  %v3285 = vpack.c.b16 %v2437, %v2429
  %v3286 = vpack.c.b16 %v2446, %v2438
  %v3287 = vpack.c.b16 %v2447, %v2439
  %v3288 = vpack.c.b16 %v2448, %v2440
  %v3289 = vpack.c.b16 %v2449, %v2441
  %v3290 = vpack.c.b16 %v2450, %v2442
  %v3291 = vpack.c.b16 %v2451, %v2443
  %v3292 = vpack.c.b16 %v2452, %v2444
  %v3293 = vpack.c.b16 %v2453, %v2445
  %v3294 = vpack.c.b16 %v2462, %v2454
  %v3295 = vpack.c.b16 %v2463, %v2455
  %v3296 = vpack.c.b16 %v2464, %v2456
  %v3297 = vpack.c.b16 %v2465, %v2457
  %v3298 = vpack.c.b16 %v2466, %v2458
  %v3299 = vpack.c.b16 %v2467, %v2459
  %v3300 = vpack.c.b16 %v2468, %v2460
  %v3301 = vpack.c.b16 %v2469, %v2461
  %v3302 = vpack.c.b16 %v2478, %v2470
  %v3303 = vpack.c.b16 %v2479, %v2471
  %v3304 = vpack.c.b16 %v2480, %v2472
  %v3305 = vpack.c.b16 %v2481, %v2473
  %v3306 = vpack.c.b16 %v2482, %v2474
  %v3307 = vpack.c.b16 %v2483, %v2475
  %v3308 = vpack.c.b16 %v2484, %v2476
  %v3309 = vpack.c.b16 %v2485, %v2477
  %v3310 = vpack.c.b16 %v2494, %v2486
  %v3311 = vpack.c.b16 %v2495, %v2487
  %v3312 = vpack.c.b16 %v2496, %v2488
  %v3313 = vpack.c.b16 %v2497, %v2489
  %v3314 = vpack.c.b16 %v2498, %v2490
  %v3315 = vpack.c.b16 %v2499, %v2491
  %v3316 = vpack.c.b16 %v2500, %v2492
  %v3317 = vpack.c.b16 %v2501, %v2493
  %v3318 = vpack.c.b16 %v2510, %v2502
  %v3319 = vpack.c.b16 %v2511, %v2503
  %v3320 = vpack.c.b16 %v2512, %v2504
  %v3321 = vpack.c.b16 %v2513, %v2505
  %v3322 = vpack.c.b16 %v2514, %v2506
  %v3323 = vpack.c.b16 %v2515, %v2507
  %v3324 = vpack.c.b16 %v2516, %v2508
  %v3325 = vpack.c.b16 %v2517, %v2509
  %v3326 = vpack.c.b16 %v2526, %v2518
  %v3327 = vpack.c.b16 %v2527, %v2519
  %v3328 = vpack.c.b16 %v2528, %v2520
  %v3329 = vpack.c.b16 %v2529, %v2521
  %v3330 = vpack.c.b16 %v2530, %v2522
  %v3331 = vpack.c.b16 %v2531, %v2523
  %v3332 = vpack.c.b16 %v2532, %v2524
  %v3333 = vpack.c.b16 %v2533, %v2525
  %v3334 = vpack.c.b16 %v2542, %v2534
  %v3335 = vpack.c.b16 %v2543, %v2535
  %v3336 = vpack.c.b16 %v2544, %v2536
  %v3337 = vpack.c.b16 %v2545, %v2537
  %v3338 = vpack.c.b16 %v2546, %v2538
  %v3339 = vpack.c.b16 %v2547, %v2539
  %v3340 = vpack.c.b16 %v2548, %v2540
  %v3341 = vpack.c.b16 %v2549, %v2541
  %v3342 = vpack.c.b16 %v2558, %v2550
  %v3343 = vpack.c.b16 %v2559, %v2551
  %v3344 = vpack.c.b16 %v2560, %v2552
  %v3345 = vpack.c.b16 %v2561, %v2553
  %v3346 = vpack.c.b16 %v2562, %v2554
  %v3347 = vpack.c.b16 %v2563, %v2555
  %v3348 = vpack.c.b16 %v2564, %v2556
  %v3349 = vpack.c.b16 %v2565, %v2557
  %v3350 = vpack.c.b16 %v2574, %v2566
  %v3351 = vpack.c.b16 %v2575, %v2567
  %v3352 = vpack.c.b16 %v2576, %v2568
  %v3353 = vpack.c.b16 %v2577, %v2569
  %v3354 = vpack.c.b16 %v2578, %v2570
  %v3355 = vpack.c.b16 %v2579, %v2571
  %v3356 = vpack.c.b16 %v2580, %v2572
  %v3357 = vpack.c.b16 %v2581, %v2573
  %v3358 = vpack.c.b16 %v2590, %v2582
  %v3359 = vpack.c.b16 %v2591, %v2583
  %v3360 = vpack.c.b16 %v2592, %v2584
  %v3361 = vpack.c.b16 %v2593, %v2585
  %v3362 = vpack.c.b16 %v2594, %v2586
  %v3363 = vpack.c.b16 %v2595, %v2587
  %v3364 = vpack.c.b16 %v2596, %v2588
  %v3365 = vpack.c.b16 %v2597, %v2589
  %v3366 = vpack.c.b16 %v2606, %v2598
  %v3367 = vpack.c.b16 %v2607, %v2599
  %v3368 = vpack.c.b16 %v2608, %v2600
  %v3369 = vpack.c.b16 %v2609, %v2601
  %v3370 = vpack.c.b16 %v2610, %v2602
  %v3371 = vpack.c.b16 %v2611, %v2603
  %v3372 = vpack.c.b16 %v2612, %v2604
  %v3373 = vpack.c.b16 %v2613, %v2605
  %v3374 = vpack.c.b16 %v2622, %v2614
  %v3375 = vpack.c.b16 %v2623, %v2615
  %v3376 = vpack.c.b16 %v2624, %v2616
  %v3377 = vpack.c.b16 %v2625, %v2617
  %v3378 = vpack.c.b16 %v2626, %v2618
  %v3379 = vpack.c.b16 %v2627, %v2619
  %v3380 = vpack.c.b16 %v2628, %v2620
  %v3381 = vpack.c.b16 %v2629, %v2621
  %v3382 = vpack.c.b16 %v2638, %v2630
  %v3383 = vpack.c.b16 %v2639, %v2631
  %v3384 = vpack.c.b16 %v2640, %v2632
  %v3385 = vpack.c.b16 %v2641, %v2633
  %v3386 = vpack.c.b16 %v2642, %v2634
  %v3387 = vpack.c.b16 %v2643, %v2635
  %v3388 = vpack.c.b16 %v2644, %v2636
  %v3389 = vpack.c.b16 %v2645, %v2637
  %v3390 = vpack.c.b16 %v2654, %v2646
  %v3391 = vpack.c.b16 %v2655, %v2647
  %v3392 = vpack.c.b16 %v2656, %v2648
  %v3393 = vpack.c.b16 %v2657, %v2649
  %v3394 = vpack.c.b16 %v2658, %v2650
  %v3395 = vpack.c.b16 %v2659, %v2651
  %v3396 = vpack.c.b16 %v2660, %v2652
  %v3397 = vpack.c.b16 %v2661, %v2653
  %v3398 = vpack.c.b16 %v2670, %v2662
  %v3399 = vpack.c.b16 %v2671, %v2663
  %v3400 = vpack.c.b16 %v2672, %v2664
  %v3401 = vpack.c.b16 %v2673, %v2665
  %v3402 = vpack.c.b16 %v2674, %v2666
  %v3403 = vpack.c.b16 %v2675, %v2667
  %v3404 = vpack.c.b16 %v2676, %v2668
  %v3405 = vpack.c.b16 %v2677, %v2669
  %v3406 = vpack.c.b16 %v2686, %v2678
  %v3407 = vpack.c.b16 %v2687, %v2679
  %v3408 = vpack.c.b16 %v2688, %v2680
  %v3409 = vpack.c.b16 %v2689, %v2681
  %v3410 = vpack.c.b16 %v2690, %v2682
  %v3411 = vpack.c.b16 %v2691, %v2683
  %v3412 = vpack.c.b16 %v2692, %v2684
  %v3413 = vpack.c.b16 %v2693, %v2685
  %v3414 = vpack.c.b16 %v2702, %v2694
  %v3415 = vpack.c.b16 %v2703, %v2695
  %v3416 = vpack.c.b16 %v2704, %v2696
  %v3417 = vpack.c.b16 %v2705, %v2697
  %v3418 = vpack.c.b16 %v2706, %v2698
  %v3419 = vpack.c.b16 %v2707, %v2699
  %v3420 = vpack.c.b16 %v2708, %v2700
  %v3421 = vpack.c.b16 %v2709, %v2701
  %v3422 = vpack.c.b16 %v2718, %v2710
  %v3423 = vpack.c.b16 %v2719, %v2711
  %v3424 = vpack.c.b16 %v2720, %v2712
  %v3425 = vpack.c.b16 %v2721, %v2713
  %v3426 = vpack.c.b16 %v2722, %v2714
  %v3427 = vpack.c.b16 %v2723, %v2715
  %v3428 = vpack.c.b16 %v2724, %v2716
  %v3429 = vpack.c.b16 %v2725, %v2717
  %v3430 = vpack.c.b16 %v2734, %v2726
  %v3431 = vpack.c.b16 %v2735, %v2727
  %v3432 = vpack.c.b16 %v2736, %v2728
  %v3433 = vpack.c.b16 %v2737, %v2729
  %v3434 = vpack.c.b16 %v2738, %v2730
  %v3435 = vpack.c.b16 %v2739, %v2731
  %v3436 = vpack.c.b16 %v2740, %v2732
  %v3437 = vpack.c.b16 %v2741, %v2733
  %v3438 = vpack.c.b16 %v2750, %v2742
  %v3439 = vpack.c.b16 %v2751, %v2743
  %v3440 = vpack.c.b16 %v2752, %v2744
  %v3441 = vpack.c.b16 %v2753, %v2745
  %v3442 = vpack.c.b16 %v2754, %v2746
  %v3443 = vpack.c.b16 %v2755, %v2747
  %v3444 = vpack.c.b16 %v2756, %v2748
  %v3445 = vpack.c.b16 %v2757, %v2749
  %v3446 = vpack.c.b16 %v2766, %v2758
  %v3447 = vpack.c.b16 %v2767, %v2759
  %v3448 = vpack.c.b16 %v2768, %v2760
  %v3449 = vpack.c.b16 %v2769, %v2761
  %v3450 = vpack.c.b16 %v2770, %v2762
  %v3451 = vpack.c.b16 %v2771, %v2763
  %v3452 = vpack.c.b16 %v2772, %v2764
  %v3453 = vpack.c.b16 %v2773, %v2765
  %v3454 = vpack.c.b16 %v2782, %v2774
  %v3455 = vpack.c.b16 %v2783, %v2775
  %v3456 = vpack.c.b16 %v2784, %v2776
  %v3457 = vpack.c.b16 %v2785, %v2777
  %v3458 = vpack.c.b16 %v2786, %v2778
  %v3459 = vpack.c.b16 %v2787, %v2779
  %v3460 = vpack.c.b16 %v2788, %v2780
  %v3461 = vpack.c.b16 %v2789, %v2781
  %v3462 = vpack.c.b16 %v2798, %v2790
  %v3463 = vpack.c.b16 %v2799, %v2791
  %v3464 = vpack.c.b16 %v2800, %v2792
  %v3465 = vpack.c.b16 %v2801, %v2793
  %v3466 = vpack.c.b16 %v2802, %v2794
  %v3467 = vpack.c.b16 %v2803, %v2795
  %v3468 = vpack.c.b16 %v2804, %v2796
  %v3469 = vpack.c.b16 %v2805, %v2797
  %v3470 = vpack.c.b16 %v2814, %v2806
  %v3471 = vpack.c.b16 %v2815, %v2807
  %v3472 = vpack.c.b16 %v2816, %v2808
  %v3473 = vpack.c.b16 %v2817, %v2809
  %v3474 = vpack.c.b16 %v2818, %v2810
  %v3475 = vpack.c.b16 %v2819, %v2811
  %v3476 = vpack.c.b16 %v2820, %v2812
  %v3477 = vpack.c.b16 %v2821, %v2813
  %v3478 = vpack.c.b16 %v2830, %v2822
  %v3479 = vpack.c.b16 %v2831, %v2823
  %v3480 = vpack.c.b16 %v2832, %v2824
  %v3481 = vpack.c.b16 %v2833, %v2825
  %v3482 = vpack.c.b16 %v2834, %v2826
  %v3483 = vpack.c.b16 %v2835, %v2827
  %v3484 = vpack.c.b16 %v2836, %v2828
  %v3485 = vpack.c.b16 %v2837, %v2829
  %v3486 = vpack.c.b16 %v2846, %v2838
  %v3487 = vpack.c.b16 %v2847, %v2839
  %v3488 = vpack.c.b16 %v2848, %v2840
  %v3489 = vpack.c.b16 %v2849, %v2841
  %v3490 = vpack.c.b16 %v2850, %v2842
  %v3491 = vpack.c.b16 %v2851, %v2843
  %v3492 = vpack.c.b16 %v2852, %v2844
  %v3493 = vpack.c.b16 %v2853, %v2845
  %v3494 = vpack.c.b16 %v2862, %v2854
  %v3495 = vpack.c.b16 %v2863, %v2855
  %v3496 = vpack.c.b16 %v2864, %v2856
  %v3497 = vpack.c.b16 %v2865, %v2857
  %v3498 = vpack.c.b16 %v2866, %v2858
  %v3499 = vpack.c.b16 %v2867, %v2859
  %v3500 = vpack.c.b16 %v2868, %v2860
  %v3501 = vpack.c.b16 %v2869, %v2861
  %v3502 = vpack.c.b16 %v2878, %v2870
  %v3503 = vpack.c.b16 %v2879, %v2871
  %v3504 = vpack.c.b16 %v2880, %v2872
  %v3505 = vpack.c.b16 %v2881, %v2873
  %v3506 = vpack.c.b16 %v2882, %v2874
  %v3507 = vpack.c.b16 %v2883, %v2875
  %v3508 = vpack.c.b16 %v2884, %v2876
  %v3509 = vpack.c.b16 %v2885, %v2877
  %v3510 = vpack.c.b16 %v2894, %v2886
  %v3511 = vpack.c.b16 %v2895, %v2887
  %v3512 = vpack.c.b16 %v2896, %v2888
  %v3513 = vpack.c.b16 %v2897, %v2889
  %v3514 = vpack.c.b16 %v2898, %v2890
  %v3515 = vpack.c.b16 %v2899, %v2891
  %v3516 = vpack.c.b16 %v2900, %v2892
  %v3517 = vpack.c.b16 %v2901, %v2893
  %v3518 = vpack.c.b16 %v2910, %v2902
  %v3519 = vpack.c.b16 %v2911, %v2903
  %v3520 = vpack.c.b16 %v2912, %v2904
  %v3521 = vpack.c.b16 %v2913, %v2905
  %v3522 = vpack.c.b16 %v2914, %v2906
  %v3523 = vpack.c.b16 %v2915, %v2907
  %v3524 = vpack.c.b16 %v2916, %v2908
  %v3525 = vpack.c.b16 %v2917, %v2909
  %v3526 = vpack.c.b16 %v2926, %v2918
  %v3527 = vpack.c.b16 %v2927, %v2919
  %v3528 = vpack.c.b16 %v2928, %v2920
  %v3529 = vpack.c.b16 %v2929, %v2921
  %v3530 = vpack.c.b16 %v2930, %v2922
  %v3531 = vpack.c.b16 %v2931, %v2923
  %v3532 = vpack.c.b16 %v2932, %v2924
  %v3533 = vpack.c.b16 %v2933, %v2925
  %v3534 = vpack.c.b16 %v2942, %v2934
  %v3535 = vpack.c.b16 %v2943, %v2935
  %v3536 = vpack.c.b16 %v2944, %v2936
  %v3537 = vpack.c.b16 %v2945, %v2937
  %v3538 = vpack.c.b16 %v2946, %v2938
  %v3539 = vpack.c.b16 %v2947, %v2939
  %v3540 = vpack.c.b16 %v2948, %v2940
  %v3541 = vpack.c.b16 %v2949, %v2941
  %v3542 = vpack.c.b16 %v2958, %v2950
  %v3543 = vpack.c.b16 %v2959, %v2951
  %v3544 = vpack.c.b16 %v2960, %v2952
  %v3545 = vpack.c.b16 %v2961, %v2953
  %v3546 = vpack.c.b16 %v2962, %v2954
  %v3547 = vpack.c.b16 %v2963, %v2955
  %v3548 = vpack.c.b16 %v2964, %v2956
  %v3549 = vpack.c.b16 %v2965, %v2957
  %v3550 = vpack.c.b16 %v2974, %v2966
  %v3551 = vpack.c.b16 %v2975, %v2967
  %v3552 = vpack.c.b16 %v2976, %v2968
  %v3553 = vpack.c.b16 %v2977, %v2969
  %v3554 = vpack.c.b16 %v2978, %v2970
  %v3555 = vpack.c.b16 %v2979, %v2971
  %v3556 = vpack.c.b16 %v2980, %v2972
  %v3557 = vpack.c.b16 %v2981, %v2973
  %v3558 = vpack.c.b16 %v2990, %v2982
  %v3559 = vpack.c.b16 %v2991, %v2983
  %v3560 = vpack.c.b16 %v2992, %v2984
  %v3561 = vpack.c.b16 %v2993, %v2985
  %v3562 = vpack.c.b16 %v2994, %v2986
  %v3563 = vpack.c.b16 %v2995, %v2987
  %v3564 = vpack.c.b16 %v2996, %v2988
  %v3565 = vpack.c.b16 %v2997, %v2989
  %v3566 = vpack.c.b16 %v3006, %v2998
  %v3567 = vpack.c.b16 %v3007, %v2999
  %v3568 = vpack.c.b16 %v3008, %v3000
  %v3569 = vpack.c.b16 %v3009, %v3001
  %v3570 = vpack.c.b16 %v3010, %v3002
  %v3571 = vpack.c.b16 %v3011, %v3003
  %v3572 = vpack.c.b16 %v3012, %v3004
  %v3573 = vpack.c.b16 %v3013, %v3005
  %v3574 = vpack.c.b16 %v3022, %v3014
  %v3575 = vpack.c.b16 %v3023, %v3015
  %v3576 = vpack.c.b16 %v3024, %v3016
  %v3577 = vpack.c.b16 %v3025, %v3017
  %v3578 = vpack.c.b16 %v3026, %v3018
  %v3579 = vpack.c.b16 %v3027, %v3019
  %v3580 = vpack.c.b16 %v3028, %v3020
  %v3581 = vpack.c.b16 %v3029, %v3021
  %v3582 = vpack.c.b16 %v3038, %v3030
  %v3583 = vpack.c.b16 %v3039, %v3031
  %v3584 = vpack.c.b16 %v3040, %v3032
  %v3585 = vpack.c.b16 %v3041, %v3033
  %v3586 = vpack.c.b16 %v3042, %v3034
  %v3587 = vpack.c.b16 %v3043, %v3035
  %v3588 = vpack.c.b16 %v3044, %v3036
  %v3589 = vpack.c.b16 %v3045, %v3037
  %v3590 = vpack.c.b16 %v3054, %v3046
  %v3591 = vpack.c.b16 %v3055, %v3047
  %v3592 = vpack.c.b16 %v3056, %v3048
  %v3593 = vpack.c.b16 %v3057, %v3049
  %v3594 = vpack.c.b16 %v3058, %v3050
  %v3595 = vpack.c.b16 %v3059, %v3051
  %v3596 = vpack.c.b16 %v3060, %v3052
  %v3597 = vpack.c.b16 %v3061, %v3053
  %v3598 = vpack.c.b16 %v3070, %v3062
  %v3599 = vpack.c.b16 %v3071, %v3063
  %v3600 = vpack.c.b16 %v3072, %v3064
  %v3601 = vpack.c.b16 %v3073, %v3065
  %v3602 = vpack.c.b16 %v3074, %v3066
  %v3603 = vpack.c.b16 %v3075, %v3067
  %v3604 = vpack.c.b16 %v3076, %v3068
  %v3605 = vpack.c.b16 %v3077, %v3069
  %v3606 = vpack.c.b16 %v3086, %v3078
  %v3607 = vpack.c.b16 %v3087, %v3079
  %v3608 = vpack.c.b16 %v3088, %v3080
  %v3609 = vpack.c.b16 %v3089, %v3081
  %v3610 = vpack.c.b16 %v3090, %v3082
  %v3611 = vpack.c.b16 %v3091, %v3083
  %v3612 = vpack.c.b16 %v3092, %v3084
  %v3613 = vpack.c.b16 %v3093, %v3085
  %v3614 = vpack.c.b16 %v3102, %v3094
  %v3615 = vpack.c.b16 %v3103, %v3095
  %v3616 = vpack.c.b16 %v3104, %v3096
  %v3617 = vpack.c.b16 %v3105, %v3097
  %v3618 = vpack.c.b16 %v3106, %v3098
  %v3619 = vpack.c.b16 %v3107, %v3099
  %v3620 = vpack.c.b16 %v3108, %v3100
  %v3621 = vpack.c.b16 %v3109, %v3101
  %4134 = vmatpush.bf16.msra.mxu0 %v3166
  %4135 = vmatpush.bf16.msra.mxu0 %v3158
  %4136 = vmatpush.bf16.msra.mxu0 %v3150
  %4137 = vmatpush.bf16.msra.mxu0 %v3142
  %4138 = vmatpush.bf16.msra.mxu0 %v3134
  %4139 = vmatpush.bf16.msra.mxu0 %v3126
  %4140 = vmatpush.bf16.msra.mxu0 %v3118
  %4141 = vmatpush.bf16.msra.mxu0 %v3110
  %4142 = vmatmul.bf16.gmra.mxu0 %v1036
  %v4143 = vpop.f32.mrf.mxu0
  %v4144 = vadd.f32 %v1558, %v4143
  %v4145 = vpop.f32.mrf.mxu0
  %4146 = vdwg.mxu0
  %4147 = vmatpush.bf16.msra.mxu0 %v3230
  %4148 = vmatpush.bf16.msra.mxu0 %v3222
  %4149 = vmatpush.bf16.msra.mxu0 %v3214
  %4150 = vmatpush.bf16.msra.mxu0 %v3206
  %4151 = vmatpush.bf16.msra.mxu0 %v3198
  %4152 = vmatpush.bf16.msra.mxu0 %v3190
  %4153 = vmatpush.bf16.msra.mxu0 %v3182
  %4154 = vmatpush.bf16.msra.mxu0 %v3174
  %4155 = vmatmul.bf16.gmra.mxu0 %v1037
  %v4156 = vpop.f32.mrf.mxu0
  %v4157 = vadd.f32 %v4144, %v4156
  %v4158 = vpop.f32.mrf.mxu0
  %4159 = vdwg.mxu0
  %4160 = vmatpush.bf16.msra.mxu0 %v3294
  %4161 = vmatpush.bf16.msra.mxu0 %v3286
  %4162 = vmatpush.bf16.msra.mxu0 %v3278
  %4163 = vmatpush.bf16.msra.mxu0 %v3270
  %4164 = vmatpush.bf16.msra.mxu0 %v3262
  %4165 = vmatpush.bf16.msra.mxu0 %v3254
  %4166 = vmatpush.bf16.msra.mxu0 %v3246
  %4167 = vmatpush.bf16.msra.mxu0 %v3238
  %4168 = vmatmul.bf16.gmra.mxu0 %v1038
  %v4169 = vpop.f32.mrf.mxu0
  %v4170 = vadd.f32 %v4157, %v4169
  %v4171 = vpop.f32.mrf.mxu0
  %4172 = vdwg.mxu0
  %4173 = vmatpush.bf16.msra.mxu0 %v3358
  %4174 = vmatpush.bf16.msra.mxu0 %v3350
  %4175 = vmatpush.bf16.msra.mxu0 %v3342
  %4176 = vmatpush.bf16.msra.mxu0 %v3334
  %4177 = vmatpush.bf16.msra.mxu0 %v3326
  %4178 = vmatpush.bf16.msra.mxu0 %v3318
  %4179 = vmatpush.bf16.msra.mxu0 %v3310
  %4180 = vmatpush.bf16.msra.mxu0 %v3302
  %4181 = vmatmul.bf16.gmra.mxu0 %v1039
  %v4182 = vpop.f32.mrf.mxu0
  %v4183 = vadd.f32 %v4170, %v4182
  %v4184 = vpop.f32.mrf.mxu0
  %4185 = vdwg.mxu0
  %4186 = vmatpush.bf16.msra.mxu0 %v3422
  %4187 = vmatpush.bf16.msra.mxu0 %v3414
  %4188 = vmatpush.bf16.msra.mxu0 %v3406
  %4189 = vmatpush.bf16.msra.mxu0 %v3398
  %4190 = vmatpush.bf16.msra.mxu0 %v3390
  %4191 = vmatpush.bf16.msra.mxu0 %v3382
  %4192 = vmatpush.bf16.msra.mxu0 %v3374
  %4193 = vmatpush.bf16.msra.mxu0 %v3366
  %4194 = vmatmul.bf16.gmra.mxu0 %v1040
  %v4195 = vpop.f32.mrf.mxu0
  %v4196 = vadd.f32 %v4183, %v4195
  %v4197 = vpop.f32.mrf.mxu0
  %4198 = vdwg.mxu0
  %4199 = vmatpush.bf16.msra.mxu0 %v3486
  %4200 = vmatpush.bf16.msra.mxu0 %v3478
  %4201 = vmatpush.bf16.msra.mxu0 %v3470
  %4202 = vmatpush.bf16.msra.mxu0 %v3462
  %4203 = vmatpush.bf16.msra.mxu0 %v3454
  %4204 = vmatpush.bf16.msra.mxu0 %v3446
  %4205 = vmatpush.bf16.msra.mxu0 %v3438
  %4206 = vmatpush.bf16.msra.mxu0 %v3430
  %4207 = vmatmul.bf16.gmra.mxu0 %v1041
  %v4208 = vpop.f32.mrf.mxu0
  %v4209 = vadd.f32 %v4196, %v4208
  %v4210 = vpop.f32.mrf.mxu0
  %4211 = vdwg.mxu0
  %4212 = vmatpush.bf16.msra.mxu0 %v3550
  %4213 = vmatpush.bf16.msra.mxu0 %v3542
  %4214 = vmatpush.bf16.msra.mxu0 %v3534
  %4215 = vmatpush.bf16.msra.mxu0 %v3526
  %4216 = vmatpush.bf16.msra.mxu0 %v3518
  %4217 = vmatpush.bf16.msra.mxu0 %v3510
  %4218 = vmatpush.bf16.msra.mxu0 %v3502
  %4219 = vmatpush.bf16.msra.mxu0 %v3494
  %4220 = vmatmul.bf16.gmra.mxu0 %v1042
  %v4221 = vpop.f32.mrf.mxu0
  %v4222 = vadd.f32 %v4209, %v4221
  %v4223 = vpop.f32.mrf.mxu0
  %4224 = vdwg.mxu0
  %4225 = vmatpush.bf16.msra.mxu0 %v3614
  %4226 = vmatpush.bf16.msra.mxu0 %v3606
  %4227 = vmatpush.bf16.msra.mxu0 %v3598
  %4228 = vmatpush.bf16.msra.mxu0 %v3590
  %4229 = vmatpush.bf16.msra.mxu0 %v3582
  %4230 = vmatpush.bf16.msra.mxu0 %v3574
  %4231 = vmatpush.bf16.msra.mxu0 %v3566
  %4232 = vmatpush.bf16.msra.mxu0 %v3558
  %4233 = vmatmul.bf16.gmra.mxu0 %v1043
  %v4234 = vpop.f32.mrf.mxu0
  %v4235 = vadd.f32 %v4222, %v4234
  %v4236 = vpop.f32.mrf.mxu0
  %4237 = vdwg.mxu0
  %4238 = vmatpush.bf16.msra.mxu0 %v3167
  %4239 = vmatpush.bf16.msra.mxu0 %v3159
  %4240 = vmatpush.bf16.msra.mxu0 %v3151
  %4241 = vmatpush.bf16.msra.mxu0 %v3143
  %4242 = vmatpush.bf16.msra.mxu0 %v3135
  %4243 = vmatpush.bf16.msra.mxu0 %v3127
  %4244 = vmatpush.bf16.msra.mxu0 %v3119
  %4245 = vmatpush.bf16.msra.mxu0 %v3111
  %4246 = vmatmul.bf16.gmra.mxu0 %v1036
  %v4247 = vpop.f32.mrf.mxu0
  %v4248 = vadd.f32 %v1559, %v4247
  %v4249 = vpop.f32.mrf.mxu0
  %4250 = vdwg.mxu0
  %4251 = vmatpush.bf16.msra.mxu0 %v3231
  %4252 = vmatpush.bf16.msra.mxu0 %v3223
  %4253 = vmatpush.bf16.msra.mxu0 %v3215
  %4254 = vmatpush.bf16.msra.mxu0 %v3207
  %4255 = vmatpush.bf16.msra.mxu0 %v3199
  %4256 = vmatpush.bf16.msra.mxu0 %v3191
  %4257 = vmatpush.bf16.msra.mxu0 %v3183
  %4258 = vmatpush.bf16.msra.mxu0 %v3175
  %4259 = vmatmul.bf16.gmra.mxu0 %v1037
  %v4260 = vpop.f32.mrf.mxu0
  %v4261 = vadd.f32 %v4248, %v4260
  %v4262 = vpop.f32.mrf.mxu0
  %4263 = vdwg.mxu0
  %4264 = vmatpush.bf16.msra.mxu0 %v3295
  %4265 = vmatpush.bf16.msra.mxu0 %v3287
  %4266 = vmatpush.bf16.msra.mxu0 %v3279
  %4267 = vmatpush.bf16.msra.mxu0 %v3271
  %4268 = vmatpush.bf16.msra.mxu0 %v3263
  %4269 = vmatpush.bf16.msra.mxu0 %v3255
  %4270 = vmatpush.bf16.msra.mxu0 %v3247
  %4271 = vmatpush.bf16.msra.mxu0 %v3239
  %4272 = vmatmul.bf16.gmra.mxu0 %v1038
  %v4273 = vpop.f32.mrf.mxu0
  %v4274 = vadd.f32 %v4261, %v4273
  %v4275 = vpop.f32.mrf.mxu0
  %4276 = vdwg.mxu0
  %4277 = vmatpush.bf16.msra.mxu0 %v3359
  %4278 = vmatpush.bf16.msra.mxu0 %v3351
  %4279 = vmatpush.bf16.msra.mxu0 %v3343
  %4280 = vmatpush.bf16.msra.mxu0 %v3335
  %4281 = vmatpush.bf16.msra.mxu0 %v3327
  %4282 = vmatpush.bf16.msra.mxu0 %v3319
  %4283 = vmatpush.bf16.msra.mxu0 %v3311
  %4284 = vmatpush.bf16.msra.mxu0 %v3303
  %4285 = vmatmul.bf16.gmra.mxu0 %v1039
  %v4286 = vpop.f32.mrf.mxu0
  %v4287 = vadd.f32 %v4274, %v4286
  %v4288 = vpop.f32.mrf.mxu0
  %4289 = vdwg.mxu0
  %4290 = vmatpush.bf16.msra.mxu0 %v3423
  %4291 = vmatpush.bf16.msra.mxu0 %v3415
  %4292 = vmatpush.bf16.msra.mxu0 %v3407
  %4293 = vmatpush.bf16.msra.mxu0 %v3399
  %4294 = vmatpush.bf16.msra.mxu0 %v3391
  %4295 = vmatpush.bf16.msra.mxu0 %v3383
  %4296 = vmatpush.bf16.msra.mxu0 %v3375
  %4297 = vmatpush.bf16.msra.mxu0 %v3367
  %4298 = vmatmul.bf16.gmra.mxu0 %v1040
  %v4299 = vpop.f32.mrf.mxu0
  %v4300 = vadd.f32 %v4287, %v4299
  %v4301 = vpop.f32.mrf.mxu0
  %4302 = vdwg.mxu0
  %4303 = vmatpush.bf16.msra.mxu0 %v3487
  %4304 = vmatpush.bf16.msra.mxu0 %v3479
  %4305 = vmatpush.bf16.msra.mxu0 %v3471
  %4306 = vmatpush.bf16.msra.mxu0 %v3463
  %4307 = vmatpush.bf16.msra.mxu0 %v3455
  %4308 = vmatpush.bf16.msra.mxu0 %v3447
  %4309 = vmatpush.bf16.msra.mxu0 %v3439
  %4310 = vmatpush.bf16.msra.mxu0 %v3431
  %4311 = vmatmul.bf16.gmra.mxu0 %v1041
  %v4312 = vpop.f32.mrf.mxu0
  %v4313 = vadd.f32 %v4300, %v4312
  %v4314 = vpop.f32.mrf.mxu0
  %4315 = vdwg.mxu0
  %4316 = vmatpush.bf16.msra.mxu0 %v3551
  %4317 = vmatpush.bf16.msra.mxu0 %v3543
  %4318 = vmatpush.bf16.msra.mxu0 %v3535
  %4319 = vmatpush.bf16.msra.mxu0 %v3527
  %4320 = vmatpush.bf16.msra.mxu0 %v3519
  %4321 = vmatpush.bf16.msra.mxu0 %v3511
  %4322 = vmatpush.bf16.msra.mxu0 %v3503
  %4323 = vmatpush.bf16.msra.mxu0 %v3495
  %4324 = vmatmul.bf16.gmra.mxu0 %v1042
  %v4325 = vpop.f32.mrf.mxu0
  %v4326 = vadd.f32 %v4313, %v4325
  %v4327 = vpop.f32.mrf.mxu0
  %4328 = vdwg.mxu0
  %4329 = vmatpush.bf16.msra.mxu0 %v3615
  %4330 = vmatpush.bf16.msra.mxu0 %v3607
  %4331 = vmatpush.bf16.msra.mxu0 %v3599
  %4332 = vmatpush.bf16.msra.mxu0 %v3591
  %4333 = vmatpush.bf16.msra.mxu0 %v3583
  %4334 = vmatpush.bf16.msra.mxu0 %v3575
  %4335 = vmatpush.bf16.msra.mxu0 %v3567
  %4336 = vmatpush.bf16.msra.mxu0 %v3559
  %4337 = vmatmul.bf16.gmra.mxu0 %v1043
  %v4338 = vpop.f32.mrf.mxu0
  %v4339 = vadd.f32 %v4326, %v4338
  %v4340 = vpop.f32.mrf.mxu0
  %4341 = vdwg.mxu0
  %4342 = vmatpush.bf16.msra.mxu0 %v3168
  %4343 = vmatpush.bf16.msra.mxu0 %v3160
  %4344 = vmatpush.bf16.msra.mxu0 %v3152
  %4345 = vmatpush.bf16.msra.mxu0 %v3144
  %4346 = vmatpush.bf16.msra.mxu0 %v3136
  %4347 = vmatpush.bf16.msra.mxu0 %v3128
  %4348 = vmatpush.bf16.msra.mxu0 %v3120
  %4349 = vmatpush.bf16.msra.mxu0 %v3112
  %4350 = vmatmul.bf16.gmra.mxu0 %v1036
  %v4351 = vpop.f32.mrf.mxu0
  %v4352 = vadd.f32 %v1560, %v4351
  %v4353 = vpop.f32.mrf.mxu0
  %4354 = vdwg.mxu0
  %4355 = vmatpush.bf16.msra.mxu0 %v3232
  %4356 = vmatpush.bf16.msra.mxu0 %v3224
  %4357 = vmatpush.bf16.msra.mxu0 %v3216
  %4358 = vmatpush.bf16.msra.mxu0 %v3208
  %4359 = vmatpush.bf16.msra.mxu0 %v3200
  %4360 = vmatpush.bf16.msra.mxu0 %v3192
  %4361 = vmatpush.bf16.msra.mxu0 %v3184
  %4362 = vmatpush.bf16.msra.mxu0 %v3176
  %4363 = vmatmul.bf16.gmra.mxu0 %v1037
  %v4364 = vpop.f32.mrf.mxu0
  %v4365 = vadd.f32 %v4352, %v4364
  %v4366 = vpop.f32.mrf.mxu0
  %4367 = vdwg.mxu0
  %4368 = vmatpush.bf16.msra.mxu0 %v3296
  %4369 = vmatpush.bf16.msra.mxu0 %v3288
  %4370 = vmatpush.bf16.msra.mxu0 %v3280
  %4371 = vmatpush.bf16.msra.mxu0 %v3272
  %4372 = vmatpush.bf16.msra.mxu0 %v3264
  %4373 = vmatpush.bf16.msra.mxu0 %v3256
  %4374 = vmatpush.bf16.msra.mxu0 %v3248
  %4375 = vmatpush.bf16.msra.mxu0 %v3240
  %4376 = vmatmul.bf16.gmra.mxu0 %v1038
  %v4377 = vpop.f32.mrf.mxu0
  %v4378 = vadd.f32 %v4365, %v4377
  %v4379 = vpop.f32.mrf.mxu0
  %4380 = vdwg.mxu0
  %4381 = vmatpush.bf16.msra.mxu0 %v3360
  %4382 = vmatpush.bf16.msra.mxu0 %v3352
  %4383 = vmatpush.bf16.msra.mxu0 %v3344
  %4384 = vmatpush.bf16.msra.mxu0 %v3336
  %4385 = vmatpush.bf16.msra.mxu0 %v3328
  %4386 = vmatpush.bf16.msra.mxu0 %v3320
  %4387 = vmatpush.bf16.msra.mxu0 %v3312
  %4388 = vmatpush.bf16.msra.mxu0 %v3304
  %4389 = vmatmul.bf16.gmra.mxu0 %v1039
  %v4390 = vpop.f32.mrf.mxu0
  %v4391 = vadd.f32 %v4378, %v4390
  %v4392 = vpop.f32.mrf.mxu0
  %4393 = vdwg.mxu0
  %4394 = vmatpush.bf16.msra.mxu0 %v3424
  %4395 = vmatpush.bf16.msra.mxu0 %v3416
  %4396 = vmatpush.bf16.msra.mxu0 %v3408
  %4397 = vmatpush.bf16.msra.mxu0 %v3400
  %4398 = vmatpush.bf16.msra.mxu0 %v3392
  %4399 = vmatpush.bf16.msra.mxu0 %v3384
  %4400 = vmatpush.bf16.msra.mxu0 %v3376
  %4401 = vmatpush.bf16.msra.mxu0 %v3368
  %4402 = vmatmul.bf16.gmra.mxu0 %v1040
  %v4403 = vpop.f32.mrf.mxu0
  %v4404 = vadd.f32 %v4391, %v4403
  %v4405 = vpop.f32.mrf.mxu0
  %4406 = vdwg.mxu0
  %4407 = vmatpush.bf16.msra.mxu0 %v3488
  %4408 = vmatpush.bf16.msra.mxu0 %v3480
  %4409 = vmatpush.bf16.msra.mxu0 %v3472
  %4410 = vmatpush.bf16.msra.mxu0 %v3464
  %4411 = vmatpush.bf16.msra.mxu0 %v3456
  %4412 = vmatpush.bf16.msra.mxu0 %v3448
  %4413 = vmatpush.bf16.msra.mxu0 %v3440
  %4414 = vmatpush.bf16.msra.mxu0 %v3432
  %4415 = vmatmul.bf16.gmra.mxu0 %v1041
  %v4416 = vpop.f32.mrf.mxu0
  %v4417 = vadd.f32 %v4404, %v4416
  %v4418 = vpop.f32.mrf.mxu0
  %4419 = vdwg.mxu0
  %4420 = vmatpush.bf16.msra.mxu0 %v3552
  %4421 = vmatpush.bf16.msra.mxu0 %v3544
  %4422 = vmatpush.bf16.msra.mxu0 %v3536
  %4423 = vmatpush.bf16.msra.mxu0 %v3528
  %4424 = vmatpush.bf16.msra.mxu0 %v3520
  %4425 = vmatpush.bf16.msra.mxu0 %v3512
  %4426 = vmatpush.bf16.msra.mxu0 %v3504
  %4427 = vmatpush.bf16.msra.mxu0 %v3496
  %4428 = vmatmul.bf16.gmra.mxu0 %v1042
  %v4429 = vpop.f32.mrf.mxu0
  %v4430 = vadd.f32 %v4417, %v4429
  %v4431 = vpop.f32.mrf.mxu0
  %4432 = vdwg.mxu0
  %4433 = vmatpush.bf16.msra.mxu0 %v3616
  %4434 = vmatpush.bf16.msra.mxu0 %v3608
  %4435 = vmatpush.bf16.msra.mxu0 %v3600
  %4436 = vmatpush.bf16.msra.mxu0 %v3592
  %4437 = vmatpush.bf16.msra.mxu0 %v3584
  %4438 = vmatpush.bf16.msra.mxu0 %v3576
  %4439 = vmatpush.bf16.msra.mxu0 %v3568
  %4440 = vmatpush.bf16.msra.mxu0 %v3560
  %4441 = vmatmul.bf16.gmra.mxu0 %v1043
  %v4442 = vpop.f32.mrf.mxu0
  %v4443 = vadd.f32 %v4430, %v4442
  %v4444 = vpop.f32.mrf.mxu0
  %4445 = vdwg.mxu0
  %4446 = vmatpush.bf16.msra.mxu0 %v3169
  %4447 = vmatpush.bf16.msra.mxu0 %v3161
  %4448 = vmatpush.bf16.msra.mxu0 %v3153
  %4449 = vmatpush.bf16.msra.mxu0 %v3145
  %4450 = vmatpush.bf16.msra.mxu0 %v3137
  %4451 = vmatpush.bf16.msra.mxu0 %v3129
  %4452 = vmatpush.bf16.msra.mxu0 %v3121
  %4453 = vmatpush.bf16.msra.mxu0 %v3113
  %4454 = vmatmul.bf16.gmra.mxu0 %v1036
  %v4455 = vpop.f32.mrf.mxu0
  %v4456 = vadd.f32 %v1561, %v4455
  %v4457 = vpop.f32.mrf.mxu0
  %4458 = vdwg.mxu0
  %4459 = vmatpush.bf16.msra.mxu0 %v3233
  %4460 = vmatpush.bf16.msra.mxu0 %v3225
  %4461 = vmatpush.bf16.msra.mxu0 %v3217
  %4462 = vmatpush.bf16.msra.mxu0 %v3209
  %4463 = vmatpush.bf16.msra.mxu0 %v3201
  %4464 = vmatpush.bf16.msra.mxu0 %v3193
  %4465 = vmatpush.bf16.msra.mxu0 %v3185
  %4466 = vmatpush.bf16.msra.mxu0 %v3177
  %4467 = vmatmul.bf16.gmra.mxu0 %v1037
  %v4468 = vpop.f32.mrf.mxu0
  %v4469 = vadd.f32 %v4456, %v4468
  %v4470 = vpop.f32.mrf.mxu0
  %4471 = vdwg.mxu0
  %4472 = vmatpush.bf16.msra.mxu0 %v3297
  %4473 = vmatpush.bf16.msra.mxu0 %v3289
  %4474 = vmatpush.bf16.msra.mxu0 %v3281
  %4475 = vmatpush.bf16.msra.mxu0 %v3273
  %4476 = vmatpush.bf16.msra.mxu0 %v3265
  %4477 = vmatpush.bf16.msra.mxu0 %v3257
  %4478 = vmatpush.bf16.msra.mxu0 %v3249
  %4479 = vmatpush.bf16.msra.mxu0 %v3241
  %4480 = vmatmul.bf16.gmra.mxu0 %v1038
  %v4481 = vpop.f32.mrf.mxu0
  %v4482 = vadd.f32 %v4469, %v4481
  %v4483 = vpop.f32.mrf.mxu0
  %4484 = vdwg.mxu0
  %4485 = vmatpush.bf16.msra.mxu0 %v3361
  %4486 = vmatpush.bf16.msra.mxu0 %v3353
  %4487 = vmatpush.bf16.msra.mxu0 %v3345
  %4488 = vmatpush.bf16.msra.mxu0 %v3337
  %4489 = vmatpush.bf16.msra.mxu0 %v3329
  %4490 = vmatpush.bf16.msra.mxu0 %v3321
  %4491 = vmatpush.bf16.msra.mxu0 %v3313
  %4492 = vmatpush.bf16.msra.mxu0 %v3305
  %4493 = vmatmul.bf16.gmra.mxu0 %v1039
  %v4494 = vpop.f32.mrf.mxu0
  %v4495 = vadd.f32 %v4482, %v4494
  %v4496 = vpop.f32.mrf.mxu0
  %4497 = vdwg.mxu0
  %4498 = vmatpush.bf16.msra.mxu0 %v3425
  %4499 = vmatpush.bf16.msra.mxu0 %v3417
  %4500 = vmatpush.bf16.msra.mxu0 %v3409
  %4501 = vmatpush.bf16.msra.mxu0 %v3401
  %4502 = vmatpush.bf16.msra.mxu0 %v3393
  %4503 = vmatpush.bf16.msra.mxu0 %v3385
  %4504 = vmatpush.bf16.msra.mxu0 %v3377
  %4505 = vmatpush.bf16.msra.mxu0 %v3369
  %4506 = vmatmul.bf16.gmra.mxu0 %v1040
  %v4507 = vpop.f32.mrf.mxu0
  %v4508 = vadd.f32 %v4495, %v4507
  %v4509 = vpop.f32.mrf.mxu0
  %4510 = vdwg.mxu0
  %4511 = vmatpush.bf16.msra.mxu0 %v3489
  %4512 = vmatpush.bf16.msra.mxu0 %v3481
  %4513 = vmatpush.bf16.msra.mxu0 %v3473
  %4514 = vmatpush.bf16.msra.mxu0 %v3465
  %4515 = vmatpush.bf16.msra.mxu0 %v3457
  %4516 = vmatpush.bf16.msra.mxu0 %v3449
  %4517 = vmatpush.bf16.msra.mxu0 %v3441
  %4518 = vmatpush.bf16.msra.mxu0 %v3433
  %4519 = vmatmul.bf16.gmra.mxu0 %v1041
  %v4520 = vpop.f32.mrf.mxu0
  %v4521 = vadd.f32 %v4508, %v4520
  %v4522 = vpop.f32.mrf.mxu0
  %4523 = vdwg.mxu0
  %4524 = vmatpush.bf16.msra.mxu0 %v3553
  %4525 = vmatpush.bf16.msra.mxu0 %v3545
  %4526 = vmatpush.bf16.msra.mxu0 %v3537
  %4527 = vmatpush.bf16.msra.mxu0 %v3529
  %4528 = vmatpush.bf16.msra.mxu0 %v3521
  %4529 = vmatpush.bf16.msra.mxu0 %v3513
  %4530 = vmatpush.bf16.msra.mxu0 %v3505
  %4531 = vmatpush.bf16.msra.mxu0 %v3497
  %4532 = vmatmul.bf16.gmra.mxu0 %v1042
  %v4533 = vpop.f32.mrf.mxu0
  %v4534 = vadd.f32 %v4521, %v4533
  %v4535 = vpop.f32.mrf.mxu0
  %4536 = vdwg.mxu0
  %4537 = vmatpush.bf16.msra.mxu0 %v3617
  %4538 = vmatpush.bf16.msra.mxu0 %v3609
  %4539 = vmatpush.bf16.msra.mxu0 %v3601
  %4540 = vmatpush.bf16.msra.mxu0 %v3593
  %4541 = vmatpush.bf16.msra.mxu0 %v3585
  %4542 = vmatpush.bf16.msra.mxu0 %v3577
  %4543 = vmatpush.bf16.msra.mxu0 %v3569
  %4544 = vmatpush.bf16.msra.mxu0 %v3561
  %4545 = vmatmul.bf16.gmra.mxu0 %v1043
  %v4546 = vpop.f32.mrf.mxu0
  %v4547 = vadd.f32 %v4534, %v4546
  %v4548 = vpop.f32.mrf.mxu0
  %4549 = vdwg.mxu0
  %4550 = vmatpush.bf16.msra.mxu0 %v3170
  %4551 = vmatpush.bf16.msra.mxu0 %v3162
  %4552 = vmatpush.bf16.msra.mxu0 %v3154
  %4553 = vmatpush.bf16.msra.mxu0 %v3146
  %4554 = vmatpush.bf16.msra.mxu0 %v3138
  %4555 = vmatpush.bf16.msra.mxu0 %v3130
  %4556 = vmatpush.bf16.msra.mxu0 %v3122
  %4557 = vmatpush.bf16.msra.mxu0 %v3114
  %4558 = vmatmul.bf16.gmra.mxu0 %v1036
  %v4559 = vpop.f32.mrf.mxu0
  %v4560 = vadd.f32 %v1562, %v4559
  %v4561 = vpop.f32.mrf.mxu0
  %4562 = vdwg.mxu0
  %4563 = vmatpush.bf16.msra.mxu0 %v3234
  %4564 = vmatpush.bf16.msra.mxu0 %v3226
  %4565 = vmatpush.bf16.msra.mxu0 %v3218
  %4566 = vmatpush.bf16.msra.mxu0 %v3210
  %4567 = vmatpush.bf16.msra.mxu0 %v3202
  %4568 = vmatpush.bf16.msra.mxu0 %v3194
  %4569 = vmatpush.bf16.msra.mxu0 %v3186
  %4570 = vmatpush.bf16.msra.mxu0 %v3178
  %4571 = vmatmul.bf16.gmra.mxu0 %v1037
  %v4572 = vpop.f32.mrf.mxu0
  %v4573 = vadd.f32 %v4560, %v4572
  %v4574 = vpop.f32.mrf.mxu0
  %4575 = vdwg.mxu0
  %4576 = vmatpush.bf16.msra.mxu0 %v3298
  %4577 = vmatpush.bf16.msra.mxu0 %v3290
  %4578 = vmatpush.bf16.msra.mxu0 %v3282
  %4579 = vmatpush.bf16.msra.mxu0 %v3274
  %4580 = vmatpush.bf16.msra.mxu0 %v3266
  %4581 = vmatpush.bf16.msra.mxu0 %v3258
  %4582 = vmatpush.bf16.msra.mxu0 %v3250
  %4583 = vmatpush.bf16.msra.mxu0 %v3242
  %4584 = vmatmul.bf16.gmra.mxu0 %v1038
  %v4585 = vpop.f32.mrf.mxu0
  %v4586 = vadd.f32 %v4573, %v4585
  %v4587 = vpop.f32.mrf.mxu0
  %4588 = vdwg.mxu0
  %4589 = vmatpush.bf16.msra.mxu0 %v3362
  %4590 = vmatpush.bf16.msra.mxu0 %v3354
  %4591 = vmatpush.bf16.msra.mxu0 %v3346
  %4592 = vmatpush.bf16.msra.mxu0 %v3338
  %4593 = vmatpush.bf16.msra.mxu0 %v3330
  %4594 = vmatpush.bf16.msra.mxu0 %v3322
  %4595 = vmatpush.bf16.msra.mxu0 %v3314
  %4596 = vmatpush.bf16.msra.mxu0 %v3306
  %4597 = vmatmul.bf16.gmra.mxu0 %v1039
  %v4598 = vpop.f32.mrf.mxu0
  %v4599 = vadd.f32 %v4586, %v4598
  %v4600 = vpop.f32.mrf.mxu0
  %4601 = vdwg.mxu0
  %4602 = vmatpush.bf16.msra.mxu0 %v3426
  %4603 = vmatpush.bf16.msra.mxu0 %v3418
  %4604 = vmatpush.bf16.msra.mxu0 %v3410
  %4605 = vmatpush.bf16.msra.mxu0 %v3402
  %4606 = vmatpush.bf16.msra.mxu0 %v3394
  %4607 = vmatpush.bf16.msra.mxu0 %v3386
  %4608 = vmatpush.bf16.msra.mxu0 %v3378
  %4609 = vmatpush.bf16.msra.mxu0 %v3370
  %4610 = vmatmul.bf16.gmra.mxu0 %v1040
  %v4611 = vpop.f32.mrf.mxu0
  %v4612 = vadd.f32 %v4599, %v4611
  %v4613 = vpop.f32.mrf.mxu0
  %4614 = vdwg.mxu0
  %4615 = vmatpush.bf16.msra.mxu0 %v3490
  %4616 = vmatpush.bf16.msra.mxu0 %v3482
  %4617 = vmatpush.bf16.msra.mxu0 %v3474
  %4618 = vmatpush.bf16.msra.mxu0 %v3466
  %4619 = vmatpush.bf16.msra.mxu0 %v3458
  %4620 = vmatpush.bf16.msra.mxu0 %v3450
  %4621 = vmatpush.bf16.msra.mxu0 %v3442
  %4622 = vmatpush.bf16.msra.mxu0 %v3434
  %4623 = vmatmul.bf16.gmra.mxu0 %v1041
  %v4624 = vpop.f32.mrf.mxu0
  %v4625 = vadd.f32 %v4612, %v4624
  %v4626 = vpop.f32.mrf.mxu0
  %4627 = vdwg.mxu0
  %4628 = vmatpush.bf16.msra.mxu0 %v3554
  %4629 = vmatpush.bf16.msra.mxu0 %v3546
  %4630 = vmatpush.bf16.msra.mxu0 %v3538
  %4631 = vmatpush.bf16.msra.mxu0 %v3530
  %4632 = vmatpush.bf16.msra.mxu0 %v3522
  %4633 = vmatpush.bf16.msra.mxu0 %v3514
  %4634 = vmatpush.bf16.msra.mxu0 %v3506
  %4635 = vmatpush.bf16.msra.mxu0 %v3498
  %4636 = vmatmul.bf16.gmra.mxu0 %v1042
  %v4637 = vpop.f32.mrf.mxu0
  %v4638 = vadd.f32 %v4625, %v4637
  %v4639 = vpop.f32.mrf.mxu0
  %4640 = vdwg.mxu0
  %4641 = vmatpush.bf16.msra.mxu0 %v3618
  %4642 = vmatpush.bf16.msra.mxu0 %v3610
  %4643 = vmatpush.bf16.msra.mxu0 %v3602
  %4644 = vmatpush.bf16.msra.mxu0 %v3594
  %4645 = vmatpush.bf16.msra.mxu0 %v3586
  %4646 = vmatpush.bf16.msra.mxu0 %v3578
  %4647 = vmatpush.bf16.msra.mxu0 %v3570
  %4648 = vmatpush.bf16.msra.mxu0 %v3562
  %4649 = vmatmul.bf16.gmra.mxu0 %v1043
  %v4650 = vpop.f32.mrf.mxu0
  %v4651 = vadd.f32 %v4638, %v4650
  %v4652 = vpop.f32.mrf.mxu0
  %4653 = vdwg.mxu0
  %4654 = vmatpush.bf16.msra.mxu0 %v3171
  %4655 = vmatpush.bf16.msra.mxu0 %v3163
  %4656 = vmatpush.bf16.msra.mxu0 %v3155
  %4657 = vmatpush.bf16.msra.mxu0 %v3147
  %4658 = vmatpush.bf16.msra.mxu0 %v3139
  %4659 = vmatpush.bf16.msra.mxu0 %v3131
  %4660 = vmatpush.bf16.msra.mxu0 %v3123
  %4661 = vmatpush.bf16.msra.mxu0 %v3115
  %4662 = vmatmul.bf16.gmra.mxu0 %v1036
  %v4663 = vpop.f32.mrf.mxu0
  %v4664 = vadd.f32 %v1563, %v4663
  %v4665 = vpop.f32.mrf.mxu0
  %4666 = vdwg.mxu0
  %4667 = vmatpush.bf16.msra.mxu0 %v3235
  %4668 = vmatpush.bf16.msra.mxu0 %v3227
  %4669 = vmatpush.bf16.msra.mxu0 %v3219
  %4670 = vmatpush.bf16.msra.mxu0 %v3211
  %4671 = vmatpush.bf16.msra.mxu0 %v3203
  %4672 = vmatpush.bf16.msra.mxu0 %v3195
  %4673 = vmatpush.bf16.msra.mxu0 %v3187
  %4674 = vmatpush.bf16.msra.mxu0 %v3179
  %4675 = vmatmul.bf16.gmra.mxu0 %v1037
  %v4676 = vpop.f32.mrf.mxu0
  %v4677 = vadd.f32 %v4664, %v4676
  %v4678 = vpop.f32.mrf.mxu0
  %4679 = vdwg.mxu0
  %4680 = vmatpush.bf16.msra.mxu0 %v3299
  %4681 = vmatpush.bf16.msra.mxu0 %v3291
  %4682 = vmatpush.bf16.msra.mxu0 %v3283
  %4683 = vmatpush.bf16.msra.mxu0 %v3275
  %4684 = vmatpush.bf16.msra.mxu0 %v3267
  %4685 = vmatpush.bf16.msra.mxu0 %v3259
  %4686 = vmatpush.bf16.msra.mxu0 %v3251
  %4687 = vmatpush.bf16.msra.mxu0 %v3243
  %4688 = vmatmul.bf16.gmra.mxu0 %v1038
  %v4689 = vpop.f32.mrf.mxu0
  %v4690 = vadd.f32 %v4677, %v4689
  %v4691 = vpop.f32.mrf.mxu0
  %4692 = vdwg.mxu0
  %4693 = vmatpush.bf16.msra.mxu0 %v3363
  %4694 = vmatpush.bf16.msra.mxu0 %v3355
  %4695 = vmatpush.bf16.msra.mxu0 %v3347
  %4696 = vmatpush.bf16.msra.mxu0 %v3339
  %4697 = vmatpush.bf16.msra.mxu0 %v3331
  %4698 = vmatpush.bf16.msra.mxu0 %v3323
  %4699 = vmatpush.bf16.msra.mxu0 %v3315
  %4700 = vmatpush.bf16.msra.mxu0 %v3307
  %4701 = vmatmul.bf16.gmra.mxu0 %v1039
  %v4702 = vpop.f32.mrf.mxu0
  %v4703 = vadd.f32 %v4690, %v4702
  %v4704 = vpop.f32.mrf.mxu0
  %4705 = vdwg.mxu0
  %4706 = vmatpush.bf16.msra.mxu0 %v3427
  %4707 = vmatpush.bf16.msra.mxu0 %v3419
  %4708 = vmatpush.bf16.msra.mxu0 %v3411
  %4709 = vmatpush.bf16.msra.mxu0 %v3403
  %4710 = vmatpush.bf16.msra.mxu0 %v3395
  %4711 = vmatpush.bf16.msra.mxu0 %v3387
  %4712 = vmatpush.bf16.msra.mxu0 %v3379
  %4713 = vmatpush.bf16.msra.mxu0 %v3371
  %4714 = vmatmul.bf16.gmra.mxu0 %v1040
  %v4715 = vpop.f32.mrf.mxu0
  %v4716 = vadd.f32 %v4703, %v4715
  %v4717 = vpop.f32.mrf.mxu0
  %4718 = vdwg.mxu0
  %4719 = vmatpush.bf16.msra.mxu0 %v3491
  %4720 = vmatpush.bf16.msra.mxu0 %v3483
  %4721 = vmatpush.bf16.msra.mxu0 %v3475
  %4722 = vmatpush.bf16.msra.mxu0 %v3467
  %4723 = vmatpush.bf16.msra.mxu0 %v3459
  %4724 = vmatpush.bf16.msra.mxu0 %v3451
  %4725 = vmatpush.bf16.msra.mxu0 %v3443
  %4726 = vmatpush.bf16.msra.mxu0 %v3435
  %4727 = vmatmul.bf16.gmra.mxu0 %v1041
  %v4728 = vpop.f32.mrf.mxu0
  %v4729 = vadd.f32 %v4716, %v4728
  %v4730 = vpop.f32.mrf.mxu0
  %4731 = vdwg.mxu0
  %4732 = vmatpush.bf16.msra.mxu0 %v3555
  %4733 = vmatpush.bf16.msra.mxu0 %v3547
  %4734 = vmatpush.bf16.msra.mxu0 %v3539
  %4735 = vmatpush.bf16.msra.mxu0 %v3531
  %4736 = vmatpush.bf16.msra.mxu0 %v3523
  %4737 = vmatpush.bf16.msra.mxu0 %v3515
  %4738 = vmatpush.bf16.msra.mxu0 %v3507
  %4739 = vmatpush.bf16.msra.mxu0 %v3499
  %4740 = vmatmul.bf16.gmra.mxu0 %v1042
  %v4741 = vpop.f32.mrf.mxu0
  %v4742 = vadd.f32 %v4729, %v4741
  %v4743 = vpop.f32.mrf.mxu0
  %4744 = vdwg.mxu0
  %4745 = vmatpush.bf16.msra.mxu0 %v3619
  %4746 = vmatpush.bf16.msra.mxu0 %v3611
  %4747 = vmatpush.bf16.msra.mxu0 %v3603
  %4748 = vmatpush.bf16.msra.mxu0 %v3595
  %4749 = vmatpush.bf16.msra.mxu0 %v3587
  %4750 = vmatpush.bf16.msra.mxu0 %v3579
  %4751 = vmatpush.bf16.msra.mxu0 %v3571
  %4752 = vmatpush.bf16.msra.mxu0 %v3563
  %4753 = vmatmul.bf16.gmra.mxu0 %v1043
  %v4754 = vpop.f32.mrf.mxu0
  %v4755 = vadd.f32 %v4742, %v4754
  %v4756 = vpop.f32.mrf.mxu0
  %4757 = vdwg.mxu0
  %4758 = vmatpush.bf16.msra.mxu0 %v3172
  %4759 = vmatpush.bf16.msra.mxu0 %v3164
  %4760 = vmatpush.bf16.msra.mxu0 %v3156
  %4761 = vmatpush.bf16.msra.mxu0 %v3148
  %4762 = vmatpush.bf16.msra.mxu0 %v3140
  %4763 = vmatpush.bf16.msra.mxu0 %v3132
  %4764 = vmatpush.bf16.msra.mxu0 %v3124
  %4765 = vmatpush.bf16.msra.mxu0 %v3116
  %4766 = vmatmul.bf16.gmra.mxu0 %v1036
  %v4767 = vpop.f32.mrf.mxu0
  %v4768 = vadd.f32 %v1564, %v4767
  %v4769 = vpop.f32.mrf.mxu0
  %4770 = vdwg.mxu0
  %4771 = vmatpush.bf16.msra.mxu0 %v3236
  %4772 = vmatpush.bf16.msra.mxu0 %v3228
  %4773 = vmatpush.bf16.msra.mxu0 %v3220
  %4774 = vmatpush.bf16.msra.mxu0 %v3212
  %4775 = vmatpush.bf16.msra.mxu0 %v3204
  %4776 = vmatpush.bf16.msra.mxu0 %v3196
  %4777 = vmatpush.bf16.msra.mxu0 %v3188
  %4778 = vmatpush.bf16.msra.mxu0 %v3180
  %4779 = vmatmul.bf16.gmra.mxu0 %v1037
  %v4780 = vpop.f32.mrf.mxu0
  %v4781 = vadd.f32 %v4768, %v4780
  %v4782 = vpop.f32.mrf.mxu0
  %4783 = vdwg.mxu0
  %4784 = vmatpush.bf16.msra.mxu0 %v3300
  %4785 = vmatpush.bf16.msra.mxu0 %v3292
  %4786 = vmatpush.bf16.msra.mxu0 %v3284
  %4787 = vmatpush.bf16.msra.mxu0 %v3276
  %4788 = vmatpush.bf16.msra.mxu0 %v3268
  %4789 = vmatpush.bf16.msra.mxu0 %v3260
  %4790 = vmatpush.bf16.msra.mxu0 %v3252
  %4791 = vmatpush.bf16.msra.mxu0 %v3244
  %4792 = vmatmul.bf16.gmra.mxu0 %v1038
  %v4793 = vpop.f32.mrf.mxu0
  %v4794 = vadd.f32 %v4781, %v4793
  %v4795 = vpop.f32.mrf.mxu0
  %4796 = vdwg.mxu0
  %4797 = vmatpush.bf16.msra.mxu0 %v3364
  %4798 = vmatpush.bf16.msra.mxu0 %v3356
  %4799 = vmatpush.bf16.msra.mxu0 %v3348
  %4800 = vmatpush.bf16.msra.mxu0 %v3340
  %4801 = vmatpush.bf16.msra.mxu0 %v3332
  %4802 = vmatpush.bf16.msra.mxu0 %v3324
  %4803 = vmatpush.bf16.msra.mxu0 %v3316
  %4804 = vmatpush.bf16.msra.mxu0 %v3308
  %4805 = vmatmul.bf16.gmra.mxu0 %v1039
  %v4806 = vpop.f32.mrf.mxu0
  %v4807 = vadd.f32 %v4794, %v4806
  %v4808 = vpop.f32.mrf.mxu0
  %4809 = vdwg.mxu0
  %4810 = vmatpush.bf16.msra.mxu0 %v3428
  %4811 = vmatpush.bf16.msra.mxu0 %v3420
  %4812 = vmatpush.bf16.msra.mxu0 %v3412
  %4813 = vmatpush.bf16.msra.mxu0 %v3404
  %4814 = vmatpush.bf16.msra.mxu0 %v3396
  %4815 = vmatpush.bf16.msra.mxu0 %v3388
  %4816 = vmatpush.bf16.msra.mxu0 %v3380
  %4817 = vmatpush.bf16.msra.mxu0 %v3372
  %4818 = vmatmul.bf16.gmra.mxu0 %v1040
  %v4819 = vpop.f32.mrf.mxu0
  %v4820 = vadd.f32 %v4807, %v4819
  %v4821 = vpop.f32.mrf.mxu0
  %4822 = vdwg.mxu0
  %4823 = vmatpush.bf16.msra.mxu0 %v3492
  %4824 = vmatpush.bf16.msra.mxu0 %v3484
  %4825 = vmatpush.bf16.msra.mxu0 %v3476
  %4826 = vmatpush.bf16.msra.mxu0 %v3468
  %4827 = vmatpush.bf16.msra.mxu0 %v3460
  %4828 = vmatpush.bf16.msra.mxu0 %v3452
  %4829 = vmatpush.bf16.msra.mxu0 %v3444
  %4830 = vmatpush.bf16.msra.mxu0 %v3436
  %4831 = vmatmul.bf16.gmra.mxu0 %v1041
  %v4832 = vpop.f32.mrf.mxu0
  %v4833 = vadd.f32 %v4820, %v4832
  %v4834 = vpop.f32.mrf.mxu0
  %4835 = vdwg.mxu0
  %4836 = vmatpush.bf16.msra.mxu0 %v3556
  %4837 = vmatpush.bf16.msra.mxu0 %v3548
  %4838 = vmatpush.bf16.msra.mxu0 %v3540
  %4839 = vmatpush.bf16.msra.mxu0 %v3532
  %4840 = vmatpush.bf16.msra.mxu0 %v3524
  %4841 = vmatpush.bf16.msra.mxu0 %v3516
  %4842 = vmatpush.bf16.msra.mxu0 %v3508
  %4843 = vmatpush.bf16.msra.mxu0 %v3500
  %4844 = vmatmul.bf16.gmra.mxu0 %v1042
  %v4845 = vpop.f32.mrf.mxu0
  %v4846 = vadd.f32 %v4833, %v4845
  %v4847 = vpop.f32.mrf.mxu0
  %4848 = vdwg.mxu0
  %4849 = vmatpush.bf16.msra.mxu0 %v3620
  %4850 = vmatpush.bf16.msra.mxu0 %v3612
  %4851 = vmatpush.bf16.msra.mxu0 %v3604
  %4852 = vmatpush.bf16.msra.mxu0 %v3596
  %4853 = vmatpush.bf16.msra.mxu0 %v3588
  %4854 = vmatpush.bf16.msra.mxu0 %v3580
  %4855 = vmatpush.bf16.msra.mxu0 %v3572
  %4856 = vmatpush.bf16.msra.mxu0 %v3564
  %4857 = vmatmul.bf16.gmra.mxu0 %v1043
  %v4858 = vpop.f32.mrf.mxu0
  %v4859 = vadd.f32 %v4846, %v4858
  %v4860 = vpop.f32.mrf.mxu0
  %4861 = vdwg.mxu0
  %4862 = vmatpush.bf16.msra.mxu0 %v3173
  %4863 = vmatpush.bf16.msra.mxu0 %v3165
  %4864 = vmatpush.bf16.msra.mxu0 %v3157
  %4865 = vmatpush.bf16.msra.mxu0 %v3149
  %4866 = vmatpush.bf16.msra.mxu0 %v3141
  %4867 = vmatpush.bf16.msra.mxu0 %v3133
  %4868 = vmatpush.bf16.msra.mxu0 %v3125
  %4869 = vmatpush.bf16.msra.mxu0 %v3117
  %4870 = vmatmul.bf16.gmra.mxu0 %v1036
  %v4871 = vpop.f32.mrf.mxu0
  %v4872 = vadd.f32 %v1565, %v4871
  %v4873 = vpop.f32.mrf.mxu0
  %4874 = vdwg.mxu0
  %4875 = vmatpush.bf16.msra.mxu0 %v3237
  %4876 = vmatpush.bf16.msra.mxu0 %v3229
  %4877 = vmatpush.bf16.msra.mxu0 %v3221
  %4878 = vmatpush.bf16.msra.mxu0 %v3213
  %4879 = vmatpush.bf16.msra.mxu0 %v3205
  %4880 = vmatpush.bf16.msra.mxu0 %v3197
  %4881 = vmatpush.bf16.msra.mxu0 %v3189
  %4882 = vmatpush.bf16.msra.mxu0 %v3181
  %4883 = vmatmul.bf16.gmra.mxu0 %v1037
  %v4884 = vpop.f32.mrf.mxu0
  %v4885 = vadd.f32 %v4872, %v4884
  %v4886 = vpop.f32.mrf.mxu0
  %4887 = vdwg.mxu0
  %4888 = vmatpush.bf16.msra.mxu0 %v3301
  %4889 = vmatpush.bf16.msra.mxu0 %v3293
  %4890 = vmatpush.bf16.msra.mxu0 %v3285
  %4891 = vmatpush.bf16.msra.mxu0 %v3277
  %4892 = vmatpush.bf16.msra.mxu0 %v3269
  %4893 = vmatpush.bf16.msra.mxu0 %v3261
  %4894 = vmatpush.bf16.msra.mxu0 %v3253
  %4895 = vmatpush.bf16.msra.mxu0 %v3245
  %4896 = vmatmul.bf16.gmra.mxu0 %v1038
  %v4897 = vpop.f32.mrf.mxu0
  %v4898 = vadd.f32 %v4885, %v4897
  %v4899 = vpop.f32.mrf.mxu0
  %4900 = vdwg.mxu0
  %4901 = vmatpush.bf16.msra.mxu0 %v3365
  %4902 = vmatpush.bf16.msra.mxu0 %v3357
  %4903 = vmatpush.bf16.msra.mxu0 %v3349
  %4904 = vmatpush.bf16.msra.mxu0 %v3341
  %4905 = vmatpush.bf16.msra.mxu0 %v3333
  %4906 = vmatpush.bf16.msra.mxu0 %v3325
  %4907 = vmatpush.bf16.msra.mxu0 %v3317
  %4908 = vmatpush.bf16.msra.mxu0 %v3309
  %4909 = vmatmul.bf16.gmra.mxu0 %v1039
  %v4910 = vpop.f32.mrf.mxu0
  %v4911 = vadd.f32 %v4898, %v4910
  %v4912 = vpop.f32.mrf.mxu0
  %4913 = vdwg.mxu0
  %4914 = vmatpush.bf16.msra.mxu0 %v3429
  %4915 = vmatpush.bf16.msra.mxu0 %v3421
  %4916 = vmatpush.bf16.msra.mxu0 %v3413
  %4917 = vmatpush.bf16.msra.mxu0 %v3405
  %4918 = vmatpush.bf16.msra.mxu0 %v3397
  %4919 = vmatpush.bf16.msra.mxu0 %v3389
  %4920 = vmatpush.bf16.msra.mxu0 %v3381
  %4921 = vmatpush.bf16.msra.mxu0 %v3373
  %4922 = vmatmul.bf16.gmra.mxu0 %v1040
  %v4923 = vpop.f32.mrf.mxu0
  %v4924 = vadd.f32 %v4911, %v4923
  %v4925 = vpop.f32.mrf.mxu0
  %4926 = vdwg.mxu0
  %4927 = vmatpush.bf16.msra.mxu0 %v3493
  %4928 = vmatpush.bf16.msra.mxu0 %v3485
  %4929 = vmatpush.bf16.msra.mxu0 %v3477
  %4930 = vmatpush.bf16.msra.mxu0 %v3469
  %4931 = vmatpush.bf16.msra.mxu0 %v3461
  %4932 = vmatpush.bf16.msra.mxu0 %v3453
  %4933 = vmatpush.bf16.msra.mxu0 %v3445
  %4934 = vmatpush.bf16.msra.mxu0 %v3437
  %4935 = vmatmul.bf16.gmra.mxu0 %v1041
  %v4936 = vpop.f32.mrf.mxu0
  %v4937 = vadd.f32 %v4924, %v4936
  %v4938 = vpop.f32.mrf.mxu0
  %4939 = vdwg.mxu0
  %4940 = vmatpush.bf16.msra.mxu0 %v3557
  %4941 = vmatpush.bf16.msra.mxu0 %v3549
  %4942 = vmatpush.bf16.msra.mxu0 %v3541
  %4943 = vmatpush.bf16.msra.mxu0 %v3533
  %4944 = vmatpush.bf16.msra.mxu0 %v3525
  %4945 = vmatpush.bf16.msra.mxu0 %v3517
  %4946 = vmatpush.bf16.msra.mxu0 %v3509
  %4947 = vmatpush.bf16.msra.mxu0 %v3501
  %4948 = vmatmul.bf16.gmra.mxu0 %v1042
  %v4949 = vpop.f32.mrf.mxu0
  %v4950 = vadd.f32 %v4937, %v4949
  %v4951 = vpop.f32.mrf.mxu0
  %4952 = vdwg.mxu0
  %4953 = vmatpush.bf16.msra.mxu0 %v3621
  %4954 = vmatpush.bf16.msra.mxu0 %v3613
  %4955 = vmatpush.bf16.msra.mxu0 %v3605
  %4956 = vmatpush.bf16.msra.mxu0 %v3597
  %4957 = vmatpush.bf16.msra.mxu0 %v3589
  %4958 = vmatpush.bf16.msra.mxu0 %v3581
  %4959 = vmatpush.bf16.msra.mxu0 %v3573
  %4960 = vmatpush.bf16.msra.mxu0 %v3565
  %4961 = vmatmul.bf16.gmra.mxu0 %v1043
  %v4962 = vpop.f32.mrf.mxu0
  %v4963 = vadd.f32 %v4950, %v4962
  %v4964 = vpop.f32.mrf.mxu0
  %4965 = vdwg.mxu0
  %v4966 = vmax.f32 %v4235, 0.0
  %v4967 = vmax.f32 %v4339, 0.0
  %v4968 = vmax.f32 %v4443, 0.0
  %v4969 = vmax.f32 %v4547, 0.0
  %v4970 = vmax.f32 %v4651, 0.0
  %v4971 = vmax.f32 %v4755, 0.0
  %v4972 = vmax.f32 %v4859, 0.0
  %v4973 = vmax.f32 %v4963, 0.0
  %v4974 = vpack.c.bf16 %v4966, %v4966
  %v4975 = vpack.c.bf16 %v4967, %v4967
  %v4976 = vpack.c.bf16 %v4968, %v4968
  %v4977 = vpack.c.bf16 %v4969, %v4969
  %v4978 = vpack.c.bf16 %v4970, %v4970
  %v4979 = vpack.c.bf16 %v4971, %v4971
  %v4980 = vpack.c.bf16 %v4972, %v4972
  %v4981 = vpack.c.bf16 %v4973, %v4973
  %v4982 = vld [vmem:[%s5] sm:$0xf]
  %v4983 = vld [vmem:[%s5 + $0x4] sm:$0xf]
  %v4984 = vld [vmem:[%s5 + $0x8] sm:$0xf]
  %v4985 = vld [vmem:[%s5 + $0xc] sm:$0xf]
  %v4986 = vld [vmem:[%s5 + $0x10] sm:$0xf]
  %v4987 = vld [vmem:[%s5 + $0x14] sm:$0xf]
  %v4988 = vld [vmem:[%s5 + $0x18] sm:$0xf]
  %v4989 = vld [vmem:[%s5 + $0x1c] sm:$0xf]
  %v4990 = vld [vmem:[%s5 + $0x20] sm:$0xf]
  %v4991 = vld [vmem:[%s5 + $0x24] sm:$0xf]
  %v4992 = vld [vmem:[%s5 + $0x28] sm:$0xf]
  %v4993 = vld [vmem:[%s5 + $0x2c] sm:$0xf]
  %v4994 = vld [vmem:[%s5 + $0x30] sm:$0xf]
  %v4995 = vld [vmem:[%s5 + $0x34] sm:$0xf]
  %v4996 = vld [vmem:[%s5 + $0x38] sm:$0xf]
  %v4997 = vld [vmem:[%s5 + $0x3c] sm:$0xf]
  %v4998 = vld [vmem:[%s5 + $0x40] sm:$0xf]
  %v4999 = vld [vmem:[%s5 + $0x44] sm:$0xf]
  %v5000 = vld [vmem:[%s5 + $0x48] sm:$0xf]
  %v5001 = vld [vmem:[%s5 + $0x4c] sm:$0xf]
  %v5002 = vld [vmem:[%s5 + $0x50] sm:$0xf]
  %v5003 = vld [vmem:[%s5 + $0x54] sm:$0xf]
  %v5004 = vld [vmem:[%s5 + $0x58] sm:$0xf]
  %v5005 = vld [vmem:[%s5 + $0x5c] sm:$0xf]
  %v5006 = vld [vmem:[%s5 + $0x60] sm:$0xf]
  %v5007 = vld [vmem:[%s5 + $0x64] sm:$0xf]
  %v5008 = vld [vmem:[%s5 + $0x68] sm:$0xf]
  %v5009 = vld [vmem:[%s5 + $0x6c] sm:$0xf]
  %v5010 = vld [vmem:[%s5 + $0x70] sm:$0xf]
  %v5011 = vld [vmem:[%s5 + $0x74] sm:$0xf]
  %v5012 = vld [vmem:[%s5 + $0x78] sm:$0xf]
  %v5013 = vld [vmem:[%s5 + $0x7c] sm:$0xf]
  %v5014 = vld [vmem:[%s5 + $0x80] sm:$0xf]
  %v5015 = vld [vmem:[%s5 + $0x84] sm:$0xf]
  %v5016 = vld [vmem:[%s5 + $0x88] sm:$0xf]
  %v5017 = vld [vmem:[%s5 + $0x8c] sm:$0xf]
  %v5018 = vld [vmem:[%s5 + $0x90] sm:$0xf]
  %v5019 = vld [vmem:[%s5 + $0x94] sm:$0xf]
  %v5020 = vld [vmem:[%s5 + $0x98] sm:$0xf]
  %v5021 = vld [vmem:[%s5 + $0x9c] sm:$0xf]
  %v5022 = vld [vmem:[%s5 + $0xa0] sm:$0xf]
  %v5023 = vld [vmem:[%s5 + $0xa4] sm:$0xf]
  %v5024 = vld [vmem:[%s5 + $0xa8] sm:$0xf]
  %v5025 = vld [vmem:[%s5 + $0xac] sm:$0xf]
  %v5026 = vld [vmem:[%s5 + $0xb0] sm:$0xf]
  %v5027 = vld [vmem:[%s5 + $0xb4] sm:$0xf]
  %v5028 = vld [vmem:[%s5 + $0xb8] sm:$0xf]
  %v5029 = vld [vmem:[%s5 + $0xbc] sm:$0xf]
  %v5030 = vld [vmem:[%s5 + $0xc0] sm:$0xf]
  %v5031 = vld [vmem:[%s5 + $0xc4] sm:$0xf]
  %v5032 = vld [vmem:[%s5 + $0xc8] sm:$0xf]
  %v5033 = vld [vmem:[%s5 + $0xcc] sm:$0xf]
  %v5034 = vld [vmem:[%s5 + $0xd0] sm:$0xf]
  %v5035 = vld [vmem:[%s5 + $0xd4] sm:$0xf]
  %v5036 = vld [vmem:[%s5 + $0xd8] sm:$0xf]
  %v5037 = vld [vmem:[%s5 + $0xdc] sm:$0xf]
  %v5038 = vld [vmem:[%s5 + $0xe0] sm:$0xf]
  %v5039 = vld [vmem:[%s5 + $0xe4] sm:$0xf]
  %v5040 = vld [vmem:[%s5 + $0xe8] sm:$0xf]
  %v5041 = vld [vmem:[%s5 + $0xec] sm:$0xf]
  %v5042 = vld [vmem:[%s5 + $0xf0] sm:$0xf]
  %v5043 = vld [vmem:[%s5 + $0xf4] sm:$0xf]
  %v5044 = vld [vmem:[%s5 + $0xf8] sm:$0xf]
  %v5045 = vld [vmem:[%s5 + $0xfc] sm:$0xf]
  %v5046 = vld [vmem:[%s5 + $0x100] sm:$0xf]
  %v5047 = vld [vmem:[%s5 + $0x104] sm:$0xf]
  %v5048 = vld [vmem:[%s5 + $0x108] sm:$0xf]
  %v5049 = vld [vmem:[%s5 + $0x10c] sm:$0xf]
  %v5050 = vld [vmem:[%s5 + $0x110] sm:$0xf]
  %v5051 = vld [vmem:[%s5 + $0x114] sm:$0xf]
  %v5052 = vld [vmem:[%s5 + $0x118] sm:$0xf]
  %v5053 = vld [vmem:[%s5 + $0x11c] sm:$0xf]
  %v5054 = vld [vmem:[%s5 + $0x120] sm:$0xf]
  %v5055 = vld [vmem:[%s5 + $0x124] sm:$0xf]
  %v5056 = vld [vmem:[%s5 + $0x128] sm:$0xf]
  %v5057 = vld [vmem:[%s5 + $0x12c] sm:$0xf]
  %v5058 = vld [vmem:[%s5 + $0x130] sm:$0xf]
  %v5059 = vld [vmem:[%s5 + $0x134] sm:$0xf]
  %v5060 = vld [vmem:[%s5 + $0x138] sm:$0xf]
  %v5061 = vld [vmem:[%s5 + $0x13c] sm:$0xf]
  %v5062 = vld [vmem:[%s5 + $0x140] sm:$0xf]
  %v5063 = vld [vmem:[%s5 + $0x144] sm:$0xf]
  %v5064 = vld [vmem:[%s5 + $0x148] sm:$0xf]
  %v5065 = vld [vmem:[%s5 + $0x14c] sm:$0xf]
  %v5066 = vld [vmem:[%s5 + $0x150] sm:$0xf]
  %v5067 = vld [vmem:[%s5 + $0x154] sm:$0xf]
  %v5068 = vld [vmem:[%s5 + $0x158] sm:$0xf]
  %v5069 = vld [vmem:[%s5 + $0x15c] sm:$0xf]
  %v5070 = vld [vmem:[%s5 + $0x160] sm:$0xf]
  %v5071 = vld [vmem:[%s5 + $0x164] sm:$0xf]
  %v5072 = vld [vmem:[%s5 + $0x168] sm:$0xf]
  %v5073 = vld [vmem:[%s5 + $0x16c] sm:$0xf]
  %v5074 = vld [vmem:[%s5 + $0x170] sm:$0xf]
  %v5075 = vld [vmem:[%s5 + $0x174] sm:$0xf]
  %v5076 = vld [vmem:[%s5 + $0x178] sm:$0xf]
  %v5077 = vld [vmem:[%s5 + $0x17c] sm:$0xf]
  %v5078 = vld [vmem:[%s5 + $0x180] sm:$0xf]
  %v5079 = vld [vmem:[%s5 + $0x184] sm:$0xf]
  %v5080 = vld [vmem:[%s5 + $0x188] sm:$0xf]
  %v5081 = vld [vmem:[%s5 + $0x18c] sm:$0xf]
  %v5082 = vld [vmem:[%s5 + $0x190] sm:$0xf]
  %v5083 = vld [vmem:[%s5 + $0x194] sm:$0xf]
  %v5084 = vld [vmem:[%s5 + $0x198] sm:$0xf]
  %v5085 = vld [vmem:[%s5 + $0x19c] sm:$0xf]
  %v5086 = vld [vmem:[%s5 + $0x1a0] sm:$0xf]
  %v5087 = vld [vmem:[%s5 + $0x1a4] sm:$0xf]
  %v5088 = vld [vmem:[%s5 + $0x1a8] sm:$0xf]
  %v5089 = vld [vmem:[%s5 + $0x1ac] sm:$0xf]
  %v5090 = vld [vmem:[%s5 + $0x1b0] sm:$0xf]
  %v5091 = vld [vmem:[%s5 + $0x1b4] sm:$0xf]
  %v5092 = vld [vmem:[%s5 + $0x1b8] sm:$0xf]
  %v5093 = vld [vmem:[%s5 + $0x1bc] sm:$0xf]
  %v5094 = vld [vmem:[%s5 + $0x1c0] sm:$0xf]
  %v5095 = vld [vmem:[%s5 + $0x1c4] sm:$0xf]
  %v5096 = vld [vmem:[%s5 + $0x1c8] sm:$0xf]
  %v5097 = vld [vmem:[%s5 + $0x1cc] sm:$0xf]
  %v5098 = vld [vmem:[%s5 + $0x1d0] sm:$0xf]
  %v5099 = vld [vmem:[%s5 + $0x1d4] sm:$0xf]
  %v5100 = vld [vmem:[%s5 + $0x1d8] sm:$0xf]
  %v5101 = vld [vmem:[%s5 + $0x1dc] sm:$0xf]
  %v5102 = vld [vmem:[%s5 + $0x1e0] sm:$0xf]
  %v5103 = vld [vmem:[%s5 + $0x1e4] sm:$0xf]
  %v5104 = vld [vmem:[%s5 + $0x1e8] sm:$0xf]
  %v5105 = vld [vmem:[%s5 + $0x1ec] sm:$0xf]
  %v5106 = vld [vmem:[%s5 + $0x1f0] sm:$0xf]
  %v5107 = vld [vmem:[%s5 + $0x1f4] sm:$0xf]
  %v5108 = vld [vmem:[%s5 + $0x1f8] sm:$0xf]
  %v5109 = vld [vmem:[%s5 + $0x1fc] sm:$0xf]
  %v5110 = vld [vmem:[%s6] sm:$0x1]
  %v5112 = vperm.slane %v5110, 0
  %v5242 = vunpack.c.l.b16 %v4982
  %v5243 = vunpack.c.l.b16 %v4983
  %v5244 = vunpack.c.l.b16 %v4984
  %v5245 = vunpack.c.l.b16 %v4985
  %v5246 = vunpack.c.l.b16 %v4986
  %v5247 = vunpack.c.l.b16 %v4987
  %v5248 = vunpack.c.l.b16 %v4988
  %v5249 = vunpack.c.l.b16 %v4989
  %v5250 = vunpack.c.l.b16 %v4990
  %v5251 = vunpack.c.l.b16 %v4991
  %v5252 = vunpack.c.l.b16 %v4992
  %v5253 = vunpack.c.l.b16 %v4993
  %v5254 = vunpack.c.l.b16 %v4994
  %v5255 = vunpack.c.l.b16 %v4995
  %v5256 = vunpack.c.l.b16 %v4996
  %v5257 = vunpack.c.l.b16 %v4997
  %v5258 = vunpack.c.l.b16 %v4998
  %v5259 = vunpack.c.l.b16 %v4999
  %v5260 = vunpack.c.l.b16 %v5000
  %v5261 = vunpack.c.l.b16 %v5001
  %v5262 = vunpack.c.l.b16 %v5002
  %v5263 = vunpack.c.l.b16 %v5003
  %v5264 = vunpack.c.l.b16 %v5004
  %v5265 = vunpack.c.l.b16 %v5005
  %v5266 = vunpack.c.l.b16 %v5006
  %v5267 = vunpack.c.l.b16 %v5007
  %v5268 = vunpack.c.l.b16 %v5008
  %v5269 = vunpack.c.l.b16 %v5009
  %v5270 = vunpack.c.l.b16 %v5010
  %v5271 = vunpack.c.l.b16 %v5011
  %v5272 = vunpack.c.l.b16 %v5012
  %v5273 = vunpack.c.l.b16 %v5013
  %v5274 = vunpack.c.l.b16 %v5014
  %v5275 = vunpack.c.l.b16 %v5015
  %v5276 = vunpack.c.l.b16 %v5016
  %v5277 = vunpack.c.l.b16 %v5017
  %v5278 = vunpack.c.l.b16 %v5018
  %v5279 = vunpack.c.l.b16 %v5019
  %v5280 = vunpack.c.l.b16 %v5020
  %v5281 = vunpack.c.l.b16 %v5021
  %v5282 = vunpack.c.l.b16 %v5022
  %v5283 = vunpack.c.l.b16 %v5023
  %v5284 = vunpack.c.l.b16 %v5024
  %v5285 = vunpack.c.l.b16 %v5025
  %v5286 = vunpack.c.l.b16 %v5026
  %v5287 = vunpack.c.l.b16 %v5027
  %v5288 = vunpack.c.l.b16 %v5028
  %v5289 = vunpack.c.l.b16 %v5029
  %v5290 = vunpack.c.l.b16 %v5030
  %v5291 = vunpack.c.l.b16 %v5031
  %v5292 = vunpack.c.l.b16 %v5032
  %v5293 = vunpack.c.l.b16 %v5033
  %v5294 = vunpack.c.l.b16 %v5034
  %v5295 = vunpack.c.l.b16 %v5035
  %v5296 = vunpack.c.l.b16 %v5036
  %v5297 = vunpack.c.l.b16 %v5037
  %v5298 = vunpack.c.l.b16 %v5038
  %v5299 = vunpack.c.l.b16 %v5039
  %v5300 = vunpack.c.l.b16 %v5040
  %v5301 = vunpack.c.l.b16 %v5041
  %v5302 = vunpack.c.l.b16 %v5042
  %v5303 = vunpack.c.l.b16 %v5043
  %v5304 = vunpack.c.l.b16 %v5044
  %v5305 = vunpack.c.l.b16 %v5045
  %v5306 = vunpack.c.l.b16 %v5046
  %v5307 = vunpack.c.l.b16 %v5047
  %v5308 = vunpack.c.l.b16 %v5048
  %v5309 = vunpack.c.l.b16 %v5049
  %v5310 = vunpack.c.l.b16 %v5050
  %v5311 = vunpack.c.l.b16 %v5051
  %v5312 = vunpack.c.l.b16 %v5052
  %v5313 = vunpack.c.l.b16 %v5053
  %v5314 = vunpack.c.l.b16 %v5054
  %v5315 = vunpack.c.l.b16 %v5055
  %v5316 = vunpack.c.l.b16 %v5056
  %v5317 = vunpack.c.l.b16 %v5057
  %v5318 = vunpack.c.l.b16 %v5058
  %v5319 = vunpack.c.l.b16 %v5059
  %v5320 = vunpack.c.l.b16 %v5060
  %v5321 = vunpack.c.l.b16 %v5061
  %v5322 = vunpack.c.l.b16 %v5062
  %v5323 = vunpack.c.l.b16 %v5063
  %v5324 = vunpack.c.l.b16 %v5064
  %v5325 = vunpack.c.l.b16 %v5065
  %v5326 = vunpack.c.l.b16 %v5066
  %v5327 = vunpack.c.l.b16 %v5067
  %v5328 = vunpack.c.l.b16 %v5068
  %v5329 = vunpack.c.l.b16 %v5069
  %v5330 = vunpack.c.l.b16 %v5070
  %v5331 = vunpack.c.l.b16 %v5071
  %v5332 = vunpack.c.l.b16 %v5072
  %v5333 = vunpack.c.l.b16 %v5073
  %v5334 = vunpack.c.l.b16 %v5074
  %v5335 = vunpack.c.l.b16 %v5075
  %v5336 = vunpack.c.l.b16 %v5076
  %v5337 = vunpack.c.l.b16 %v5077
  %v5338 = vunpack.c.l.b16 %v5078
  %v5339 = vunpack.c.l.b16 %v5079
  %v5340 = vunpack.c.l.b16 %v5080
  %v5341 = vunpack.c.l.b16 %v5081
  %v5342 = vunpack.c.l.b16 %v5082
  %v5343 = vunpack.c.l.b16 %v5083
  %v5344 = vunpack.c.l.b16 %v5084
  %v5345 = vunpack.c.l.b16 %v5085
  %v5346 = vunpack.c.l.b16 %v5086
  %v5347 = vunpack.c.l.b16 %v5087
  %v5348 = vunpack.c.l.b16 %v5088
  %v5349 = vunpack.c.l.b16 %v5089
  %v5350 = vunpack.c.l.b16 %v5090
  %v5351 = vunpack.c.l.b16 %v5091
  %v5352 = vunpack.c.l.b16 %v5092
  %v5353 = vunpack.c.l.b16 %v5093
  %v5354 = vunpack.c.l.b16 %v5094
  %v5355 = vunpack.c.l.b16 %v5095
  %v5356 = vunpack.c.l.b16 %v5096
  %v5357 = vunpack.c.l.b16 %v5097
  %v5358 = vunpack.c.l.b16 %v5098
  %v5359 = vunpack.c.l.b16 %v5099
  %v5360 = vunpack.c.l.b16 %v5100
  %v5361 = vunpack.c.l.b16 %v5101
  %v5362 = vunpack.c.l.b16 %v5102
  %v5363 = vunpack.c.l.b16 %v5103
  %v5364 = vunpack.c.l.b16 %v5104
  %v5365 = vunpack.c.l.b16 %v5105
  %v5366 = vunpack.c.l.b16 %v5106
  %v5367 = vunpack.c.l.b16 %v5107
  %v5368 = vunpack.c.l.b16 %v5108
  %v5369 = vunpack.c.l.b16 %v5109
  %v5370 = vpack.c.b16 %v5243, %v5242
  %v5371 = vpack.c.b16 %v5245, %v5244
  %v5372 = vpack.c.b16 %v5247, %v5246
  %v5373 = vpack.c.b16 %v5249, %v5248
  %v5374 = vpack.c.b16 %v5251, %v5250
  %v5375 = vpack.c.b16 %v5253, %v5252
  %v5376 = vpack.c.b16 %v5255, %v5254
  %v5377 = vpack.c.b16 %v5257, %v5256
  %v5378 = vpack.c.b16 %v5259, %v5258
  %v5379 = vpack.c.b16 %v5261, %v5260
  %v5380 = vpack.c.b16 %v5263, %v5262
  %v5381 = vpack.c.b16 %v5265, %v5264
  %v5382 = vpack.c.b16 %v5267, %v5266
  %v5383 = vpack.c.b16 %v5269, %v5268
  %v5384 = vpack.c.b16 %v5271, %v5270
  %v5385 = vpack.c.b16 %v5273, %v5272
  %v5386 = vpack.c.b16 %v5275, %v5274
  %v5387 = vpack.c.b16 %v5277, %v5276
  %v5388 = vpack.c.b16 %v5279, %v5278
  %v5389 = vpack.c.b16 %v5281, %v5280
  %v5390 = vpack.c.b16 %v5283, %v5282
  %v5391 = vpack.c.b16 %v5285, %v5284
  %v5392 = vpack.c.b16 %v5287, %v5286
  %v5393 = vpack.c.b16 %v5289, %v5288
  %v5394 = vpack.c.b16 %v5291, %v5290
  %v5395 = vpack.c.b16 %v5293, %v5292
  %v5396 = vpack.c.b16 %v5295, %v5294
  %v5397 = vpack.c.b16 %v5297, %v5296
  %v5398 = vpack.c.b16 %v5299, %v5298
  %v5399 = vpack.c.b16 %v5301, %v5300
  %v5400 = vpack.c.b16 %v5303, %v5302
  %v5401 = vpack.c.b16 %v5305, %v5304
  %v5402 = vpack.c.b16 %v5307, %v5306
  %v5403 = vpack.c.b16 %v5309, %v5308
  %v5404 = vpack.c.b16 %v5311, %v5310
  %v5405 = vpack.c.b16 %v5313, %v5312
  %v5406 = vpack.c.b16 %v5315, %v5314
  %v5407 = vpack.c.b16 %v5317, %v5316
  %v5408 = vpack.c.b16 %v5319, %v5318
  %v5409 = vpack.c.b16 %v5321, %v5320
  %v5410 = vpack.c.b16 %v5323, %v5322
  %v5411 = vpack.c.b16 %v5325, %v5324
  %v5412 = vpack.c.b16 %v5327, %v5326
  %v5413 = vpack.c.b16 %v5329, %v5328
  %v5414 = vpack.c.b16 %v5331, %v5330
  %v5415 = vpack.c.b16 %v5333, %v5332
  %v5416 = vpack.c.b16 %v5335, %v5334
  %v5417 = vpack.c.b16 %v5337, %v5336
  %v5418 = vpack.c.b16 %v5339, %v5338
  %v5419 = vpack.c.b16 %v5341, %v5340
  %v5420 = vpack.c.b16 %v5343, %v5342
  %v5421 = vpack.c.b16 %v5345, %v5344
  %v5422 = vpack.c.b16 %v5347, %v5346
  %v5423 = vpack.c.b16 %v5349, %v5348
  %v5424 = vpack.c.b16 %v5351, %v5350
  %v5425 = vpack.c.b16 %v5353, %v5352
  %v5426 = vpack.c.b16 %v5355, %v5354
  %v5427 = vpack.c.b16 %v5357, %v5356
  %v5428 = vpack.c.b16 %v5359, %v5358
  %v5429 = vpack.c.b16 %v5361, %v5360
  %v5430 = vpack.c.b16 %v5363, %v5362
  %v5431 = vpack.c.b16 %v5365, %v5364
  %v5432 = vpack.c.b16 %v5367, %v5366
  %v5433 = vpack.c.b16 %v5369, %v5368
  %5498 = vmatpush.bf16.msra.mxu0 %v5377
  %5499 = vmatpush.bf16.msra.mxu0 %v5376
  %5500 = vmatpush.bf16.msra.mxu0 %v5375
  %5501 = vmatpush.bf16.msra.mxu0 %v5374
  %5502 = vmatpush.bf16.msra.mxu0 %v5373
  %5503 = vmatpush.bf16.msra.mxu0 %v5372
  %5504 = vmatpush.bf16.msra.mxu0 %v5371
  %5505 = vmatpush.bf16.msra.mxu0 %v5370
  %5506 = vmatmul.bf16.gmra.mxu0 %v4974
  %v5507 = vpop.f32.mrf.mxu0
  %v5508 = vadd.f32 %v5112, %v5507
  %v5509 = vpop.f32.mrf.mxu0
  %5510 = vdwg.mxu0
  %5511 = vmatpush.bf16.msra.mxu0 %v5385
  %5512 = vmatpush.bf16.msra.mxu0 %v5384
  %5513 = vmatpush.bf16.msra.mxu0 %v5383
  %5514 = vmatpush.bf16.msra.mxu0 %v5382
  %5515 = vmatpush.bf16.msra.mxu0 %v5381
  %5516 = vmatpush.bf16.msra.mxu0 %v5380
  %5517 = vmatpush.bf16.msra.mxu0 %v5379
  %5518 = vmatpush.bf16.msra.mxu0 %v5378
  %5519 = vmatmul.bf16.gmra.mxu0 %v4975
  %v5520 = vpop.f32.mrf.mxu0
  %v5521 = vadd.f32 %v5508, %v5520
  %v5522 = vpop.f32.mrf.mxu0
  %5523 = vdwg.mxu0
  %5524 = vmatpush.bf16.msra.mxu0 %v5393
  %5525 = vmatpush.bf16.msra.mxu0 %v5392
  %5526 = vmatpush.bf16.msra.mxu0 %v5391
  %5527 = vmatpush.bf16.msra.mxu0 %v5390
  %5528 = vmatpush.bf16.msra.mxu0 %v5389
  %5529 = vmatpush.bf16.msra.mxu0 %v5388
  %5530 = vmatpush.bf16.msra.mxu0 %v5387
  %5531 = vmatpush.bf16.msra.mxu0 %v5386
  %5532 = vmatmul.bf16.gmra.mxu0 %v4976
  %v5533 = vpop.f32.mrf.mxu0
  %v5534 = vadd.f32 %v5521, %v5533
  %v5535 = vpop.f32.mrf.mxu0
  %5536 = vdwg.mxu0
  %5537 = vmatpush.bf16.msra.mxu0 %v5401
  %5538 = vmatpush.bf16.msra.mxu0 %v5400
  %5539 = vmatpush.bf16.msra.mxu0 %v5399
  %5540 = vmatpush.bf16.msra.mxu0 %v5398
  %5541 = vmatpush.bf16.msra.mxu0 %v5397
  %5542 = vmatpush.bf16.msra.mxu0 %v5396
  %5543 = vmatpush.bf16.msra.mxu0 %v5395
  %5544 = vmatpush.bf16.msra.mxu0 %v5394
  %5545 = vmatmul.bf16.gmra.mxu0 %v4977
  %v5546 = vpop.f32.mrf.mxu0
  %v5547 = vadd.f32 %v5534, %v5546
  %v5548 = vpop.f32.mrf.mxu0
  %5549 = vdwg.mxu0
  %5550 = vmatpush.bf16.msra.mxu0 %v5409
  %5551 = vmatpush.bf16.msra.mxu0 %v5408
  %5552 = vmatpush.bf16.msra.mxu0 %v5407
  %5553 = vmatpush.bf16.msra.mxu0 %v5406
  %5554 = vmatpush.bf16.msra.mxu0 %v5405
  %5555 = vmatpush.bf16.msra.mxu0 %v5404
  %5556 = vmatpush.bf16.msra.mxu0 %v5403
  %5557 = vmatpush.bf16.msra.mxu0 %v5402
  %5558 = vmatmul.bf16.gmra.mxu0 %v4978
  %v5559 = vpop.f32.mrf.mxu0
  %v5560 = vadd.f32 %v5547, %v5559
  %v5561 = vpop.f32.mrf.mxu0
  %5562 = vdwg.mxu0
  %5563 = vmatpush.bf16.msra.mxu0 %v5417
  %5564 = vmatpush.bf16.msra.mxu0 %v5416
  %5565 = vmatpush.bf16.msra.mxu0 %v5415
  %5566 = vmatpush.bf16.msra.mxu0 %v5414
  %5567 = vmatpush.bf16.msra.mxu0 %v5413
  %5568 = vmatpush.bf16.msra.mxu0 %v5412
  %5569 = vmatpush.bf16.msra.mxu0 %v5411
  %5570 = vmatpush.bf16.msra.mxu0 %v5410
  %5571 = vmatmul.bf16.gmra.mxu0 %v4979
  %v5572 = vpop.f32.mrf.mxu0
  %v5573 = vadd.f32 %v5560, %v5572
  %v5574 = vpop.f32.mrf.mxu0
  %5575 = vdwg.mxu0
  %5576 = vmatpush.bf16.msra.mxu0 %v5425
  %5577 = vmatpush.bf16.msra.mxu0 %v5424
  %5578 = vmatpush.bf16.msra.mxu0 %v5423
  %5579 = vmatpush.bf16.msra.mxu0 %v5422
  %5580 = vmatpush.bf16.msra.mxu0 %v5421
  %5581 = vmatpush.bf16.msra.mxu0 %v5420
  %5582 = vmatpush.bf16.msra.mxu0 %v5419
  %5583 = vmatpush.bf16.msra.mxu0 %v5418
  %5584 = vmatmul.bf16.gmra.mxu0 %v4980
  %v5585 = vpop.f32.mrf.mxu0
  %v5586 = vadd.f32 %v5573, %v5585
  %v5587 = vpop.f32.mrf.mxu0
  %5588 = vdwg.mxu0
  %5589 = vmatpush.bf16.msra.mxu0 %v5433
  %5590 = vmatpush.bf16.msra.mxu0 %v5432
  %5591 = vmatpush.bf16.msra.mxu0 %v5431
  %5592 = vmatpush.bf16.msra.mxu0 %v5430
  %5593 = vmatpush.bf16.msra.mxu0 %v5429
  %5594 = vmatpush.bf16.msra.mxu0 %v5428
  %5595 = vmatpush.bf16.msra.mxu0 %v5427
  %5596 = vmatpush.bf16.msra.mxu0 %v5426
  %5597 = vmatmul.bf16.gmra.mxu0 %v4981
  %v5598 = vpop.f32.mrf.mxu0
  %v5599 = vadd.f32 %v5586, %v5598
  %v5600 = vpop.f32.mrf.mxu0
  %5601 = vdwg.mxu0
  %v5602 = vxor.u32 %v5599, 2147483648
  %v5603 = vmul.f32 %v5602, 1.442695
  %v5604 = vpow.pop %v5603
  %v5605 = vadd.f32 %v5604, 1.0
  %v5606 = vrcp.pop %v5605
  %v5607 = vmul.f32 %v5605, %v5606
  %v5608 = vsub.f32 1.0, %v5607
  %v5609 = vmul.f32 %v5606, %v5608
  %v5610 = vadd.f32 %v5606, %v5609
  %vm5611 = vweird.f32 %v5605
  %vm5612 = vweird.f32 %v5606
  %vm5613 = vmor %vm5611, %vm5612
  %v5614 = vsel %vm5613, %v5606, %v5610
  %v5615 = vand.u32 2147483647, %v5605
  %vm5616 = vcmp.eq.f32.partialorder %v5615, 8.507059e+37
  %v5617 = vand.u32 %v5605, 2147483648
  %v5618 = vor.u32 1.1754944e-38, %v5617
  %v5619 = vsel %vm5616, %v5618, %v5614
  %v5620 = vmul.f32 1.0, %v5619
  %5621 = vst [vmem:[%s7] sm:$0xff] %v5620
  // Predicated region
  $region30: #{d_net_gauss_forward.1} parent=0 // pred_check
    _
  $region31: #{d_net_gauss_forward.1} parent=0 // pred_check_branch
    %5623 = sbr.rel (0) target = $region33
  $region32: #{d_net_gauss_forward.1} parent=0 // pred_region
    _
  $region33: #{d_net_gauss_forward.1} parent=0 // pred_fallthru
    _
  // Predicated region
  $region34: #{d_net_gauss_forward.1} parent=0 // pred_check
    _
  $region35: #{d_net_gauss_forward.1} parent=0 // pred_check_branch
    %5625 = sbr.rel (0) target = $region37
  $region36: #{d_net_gauss_forward.1} parent=0 // pred_region
    _
  $region37: #{d_net_gauss_forward.1} parent=0 // pred_fallthru
    _

</llo_original>
